<compile_context>
chip_gen: v7x
topology: tpu7x:2x2x1
jax: 0.10.0
libtpu: 0.0.40
codegen_flags: <defaults>
</compile_context>

<pallas_src>
import math

import jax
import jax.numpy as jnp
from jax import lax
from jax.experimental import pallas as pl
from jax.experimental.pallas import tpu as pltpu

HEADS = 3
HEAD_DIM = 32                     # "32" in RFBMultiHeadAttn_V2(in_dim, 32, heads)
HD = HEADS * HEAD_DIM             # 96 features per branch
FC1_OUT = 16                      # nn.Linear(32*heads*2, 16)
MAX_TB = 128                      # batch rows per grid step (VMEM-safe on v7x)


# ----------------------------- Pallas kernel -------------------------------

def _branch(x, w_qkv, b_qkv):
    """x: (TB, L, C); w_qkv: (3, C, 96); b_qkv: (3, 1, 96) -> (TB, 96)."""
    tb, L, C = x.shape
    x2d = x.reshape(tb * L, C)
    scale = 1.0 / math.sqrt(HEAD_DIM)

    def proj(i):
        y = jnp.dot(x2d, w_qkv[i], preferred_element_type=jnp.float32) + b_qkv[i]
        return y.reshape(tb, L, HD)

    q, k, v = proj(0), proj(1), proj(2)        # each (TB, L, 96), all heads fused

    feats = []
    for h in range(HEADS):                      # static unroll, heads == 3
        sl = slice(h * HEAD_DIM, (h + 1) * HEAD_DIM)
        qh, kh, vh = q[:, :, sl], k[:, :, sl], v[:, :, sl]
        # batched q @ k^T without an explicit transpose (contract last dims)
        s = lax.dot_general(qh, kh, (((2,), (2,)), ((0,), (0,))),
                            preferred_element_type=jnp.float32) * scale   # (TB, L, L)
        s = s - jnp.max(s, axis=-1, keepdims=True)
        p = jnp.exp(s)
        p = p * pl.reciprocal(jnp.sum(p, axis=-1, keepdims=True), approx=True)
        # mean pooling over the query axis folded into the P @ V matmul
        p_mean = jnp.mean(p, axis=1, keepdims=True)                        # (TB, 1, L)
        o = lax.dot_general(p_mean, vh, (((2,), (1,)), ((0,), (0,))),
                            preferred_element_type=jnp.float32)            # (TB, 1, D)
        feats.append(o[:, 0, :])                                           # (TB, D)
    return jnp.concatenate(feats, axis=-1)                                 # (TB, 96)


def fused_kernel(x1_ref, w1_ref, b1_ref, x2_ref, w2_ref, b2_ref,
                 wfc_ref, bfc_ref, o_ref):
    f1 = _branch(x1_ref[...], w1_ref[...], b1_ref[...])
    f2 = _branch(x2_ref[...], w2_ref[...], b2_ref[...])
    f = jnp.concatenate([f1, f2], axis=-1)                                 # (TB, 192)
    logits = jnp.dot(f, wfc_ref[...],
                     preferred_element_type=jnp.float32) + bfc_ref[...]    # (TB, 16)
    o_ref[...] = jax.nn.sigmoid(logits)


# ------------------------------- wrapper ------------------------------------

def _fuse_branch_params(wq, wk, wv, bq, bk, bv):
    """Pack per-head weights (H,C,D)/(H,D) into (3,C,H*D)/(3,1,H*D)."""
    C = wq.shape[1]

    def fw(w):                                   # (H, C, D) -> (C, H*D), head-major
        return jnp.transpose(w, (1, 0, 2)).reshape(C, HD)

    def fb(b):                                   # (H, D) -> (1, H*D), head-major
        return b.reshape(1, HD)

    w_qkv = jnp.stack([fw(wq), fw(wk), fw(wv)], axis=0).astype(jnp.float32)
    b_qkv = jnp.stack([fb(bq), fb(bk), fb(bv)], axis=0).astype(jnp.float32)
    return w_qkv, b_qkv


def rfb_multih_attn_v3(x1_ncl, x2_ncl, params):
    B, C1, L1 = x1_ncl.shape
    B2, C2, L2 = x2_ncl.shape
    assert B == B2

    # NCL -> NLC for matmul-friendly layout.
    x1 = jnp.transpose(x1_ncl, (0, 2, 1)).astype(jnp.float32)
    x2 = jnp.transpose(x2_ncl, (0, 2, 1)).astype(jnp.float32)

    w1, b1 = _fuse_branch_params(params["wq1"], params["wk1"], params["wv1"],
                                 params["bq1"], params["bk1"], params["bv1"])
    w2, b2 = _fuse_branch_params(params["wq2"], params["wk2"], params["wv2"],
                                 params["bq2"], params["bk2"], params["bv2"])
    wfc = params["w_fc1"].astype(jnp.float32)
    bfc = params["b_fc1"].astype(jnp.float32)

    # Batch blocking: TB samples per grid step; pad B to a TB multiple if needed.
    if B <= MAX_TB:
        TB, b_pad = B, B
    else:
        TB = MAX_TB
        b_pad = ((B + TB - 1) // TB) * TB
    if b_pad != B:
        x1 = jnp.pad(x1, ((0, b_pad - B), (0, 0), (0, 0)))
        x2 = jnp.pad(x2, ((0, b_pad - B), (0, 0), (0, 0)))

    grid = (b_pad // TB,)
    const3 = lambda b: (0, 0, 0)
    const2 = lambda b: (0, 0)

    out = pl.pallas_call(
        fused_kernel,
        out_shape=jax.ShapeDtypeStruct((b_pad, FC1_OUT), jnp.float32),
        grid_spec=pltpu.PrefetchScalarGridSpec(
            num_scalar_prefetch=0,
            grid=grid,
            in_specs=[
                pl.BlockSpec((TB, L1, C1), lambda b: (b, 0, 0)),
                pl.BlockSpec((3, C1, HD), const3),
                pl.BlockSpec((3, 1, HD), const3),
                pl.BlockSpec((TB, L2, C2), lambda b: (b, 0, 0)),
                pl.BlockSpec((3, C2, HD), const3),
                pl.BlockSpec((3, 1, HD), const3),
                pl.BlockSpec((2 * HD, FC1_OUT), const2),
                pl.BlockSpec((1, FC1_OUT), const2),
            ],
            out_specs=pl.BlockSpec((TB, FC1_OUT), lambda b: (b, 0)),
        ),
        compiler_params=pltpu.CompilerParams(
            dimension_semantics=("parallel",)),
    )(x1, w1, b1, x2, w2, b2, wfc, bfc)

    return out[:B]


# --------------------------- pure-JAX reference ------------------------------

def reference(x1_ncl, x2_ncl, p):
    def branch(x_ncl, wq, wk, wv, bq, bk, bv):
        x = jnp.transpose(x_ncl, (0, 2, 1)).astype(jnp.float32)   # (B, L, C)
        outs = []
        for h in range(HEADS):
            q = x @ wq[h] + bq[h]
            k = x @ wk[h] + bk[h]
            v = x @ wv[h] + bv[h]
            s = jnp.einsum("bld,bmd->blm", q, k) / math.sqrt(HEAD_DIM)
            a = jax.nn.softmax(s, axis=-1)
            o = jnp.einsum("blm,bmd->bld", a, v)
            outs.append(jnp.mean(o, axis=1))
        return jnp.concatenate(outs, axis=1)

    f1 = branch(x1_ncl, p["wq1"], p["wk1"], p["wv1"], p["bq1"], p["bk1"], p["bv1"])
    f2 = branch(x2_ncl, p["wq2"], p["wk2"], p["wv2"], p["bq2"], p["bk2"], p["bv2"])
    f = jnp.concatenate([f1, f2], axis=1)
    return jax.nn.sigmoid(f @ p["w_fc1"] + p["b_fc1"])


# ------------------------------ param init ----------------------------------

def init_params(key, in_dim1, in_dim2):
    ks = jax.random.split(key, 16)
    D = HEAD_DIM

    def w(k, shape, fan_in):
        return jax.random.normal(k, shape, jnp.float32) / math.sqrt(fan_in)

    return {
        "wq1": w(ks[0], (HEADS, in_dim1, D), in_dim1),
        "wk1": w(ks[1], (HEADS, in_dim1, D), in_dim1),
        "wv1": w(ks[2], (HEADS, in_dim1, D), in_dim1),
        "bq1": w(ks[3], (HEADS, D), D) * 0.1,
        "bk1": w(ks[4], (HEADS, D), D) * 0.1,
        "bv1": w(ks[5], (HEADS, D), D) * 0.1,
        "wq2": w(ks[6], (HEADS, in_dim2, D), in_dim2),
        "wk2": w(ks[7], (HEADS, in_dim2, D), in_dim2),
        "wv2": w(ks[8], (HEADS, in_dim2, D), in_dim2),
        "bq2": w(ks[9], (HEADS, D), D) * 0.1,
        "bk2": w(ks[10], (HEADS, D), D) * 0.1,
        "bv2": w(ks[11], (HEADS, D), D) * 0.1,
        "w_fc1": w(ks[12], (2 * HEADS * D, FC1_OUT), 2 * HEADS * D),
        "b_fc1": w(ks[13], (1, FC1_OUT), FC1_OUT) * 0.1,
    }


# --------------------------------- main --------------------------------------

if __name__ == "__main__":
    in_dim1, in_dim2, L = 4, 6, 16
    key = jax.random.PRNGKey(0)
    k1, k2, kp = jax.random.split(key, 3)
    params = init_params(kp, in_dim1, in_dim2)

    # Small case: whole batch in one grid step.
    B = 2
    x1 = jax.random.normal(k1, (B, in_dim1, L), jnp.float32)   # NCL, like Conv1d input
    x2 = jax.random.normal(k2, (B, in_dim2, L), jnp.float32)
    out = jax.block_until_ready(rfb_multih_attn_v3(x1, x2, params))
    ref = jax.block_until_ready(reference(x1, x2, params))
    assert out.shape == (B, FC1_OUT), out.shape
    assert bool(jnp.all(jnp.isfinite(out)))
    assert bool(jnp.allclose(out, ref, atol=2e-2, rtol=2e-2)), (
        "mismatch vs reference (small): max abs diff "
        f"{float(jnp.max(jnp.abs(out - ref)))}")

    # Larger case: exercises the batch-blocked (grid > 1, padded) path.
    B2 = 130
    x1b = jax.random.normal(jax.random.PRNGKey(1), (B2, in_dim1, L), jnp.float32)
    x2b = jax.random.normal(jax.random.PRNGKey(2), (B2, in_dim2, L), jnp.float32)
    out_b = jax.block_until_ready(rfb_multih_attn_v3(x1b, x2b, params))
    ref_b = jax.block_until_ready(reference(x1b, x2b, params))
    assert out_b.shape == (B2, FC1_OUT), out_b.shape
    assert bool(jnp.all(jnp.isfinite(out_b)))
    assert bool(jnp.allclose(out_b, ref_b, atol=2e-2, rtol=2e-2)), (
        "mismatch vs reference (blocked): max abs diff "
        f"{float(jnp.max(jnp.abs(out_b - ref_b)))}")

    print("KERNEL_OK")
</pallas_src>

<mosaic_0001>
module attributes {stable_mosaic.version = 11 : i64} {
  func.func @fused_kernel(%arg0: i32, %arg1: memref<2x16x4xf32, #tpu.memory_space<vmem>>, %arg2: memref<3x4x96xf32, #tpu.memory_space<vmem>>, %arg3: memref<3x1x96xf32, #tpu.memory_space<vmem>>, %arg4: memref<2x16x6xf32, #tpu.memory_space<vmem>>, %arg5: memref<3x6x96xf32, #tpu.memory_space<vmem>>, %arg6: memref<3x1x96xf32, #tpu.memory_space<vmem>>, %arg7: memref<192x16xf32, #tpu.memory_space<vmem>>, %arg8: memref<1x16xf32, #tpu.memory_space<vmem>>, %arg9: memref<2x16xf32, #tpu.memory_space<vmem>>) attributes {dimension_semantics = [#tpu.dimension_semantics<parallel>], iteration_bounds = array<i64: 1>, scalar_prefetch = 0 : i64, scratch_operands = 0 : i64, tpu.core_type = #tpu.core_type<tc>, window_params = [{transform_indices = @transform_0, window_bounds = array<i64: 2, 16, 4>}, {pipeline_mode = #tpu.pipeline_mode<synchronous>, transform_indices = @transform_1, window_bounds = array<i64: 3, 4, 96>}, {pipeline_mode = #tpu.pipeline_mode<synchronous>, transform_indices = @transform_2, window_bounds = array<i64: 3, 1, 96>}, {transform_indices = @transform_3, window_bounds = array<i64: 2, 16, 6>}, {pipeline_mode = #tpu.pipeline_mode<synchronous>, transform_indices = @transform_4, window_bounds = array<i64: 3, 6, 96>}, {pipeline_mode = #tpu.pipeline_mode<synchronous>, transform_indices = @transform_5, window_bounds = array<i64: 3, 1, 96>}, {pipeline_mode = #tpu.pipeline_mode<synchronous>, transform_indices = @transform_6, window_bounds = array<i64: 192, 16>}, {pipeline_mode = #tpu.pipeline_mode<synchronous>, transform_indices = @transform_7, window_bounds = array<i64: 1, 16>}, {transform_indices = @transform_8, window_bounds = array<i64: 2, 16>}]} {
    %c0 = arith.constant 0 : index
    %c0_0 = arith.constant 0 : index
    %c0_1 = arith.constant 0 : index
    %0 = vector.load %arg1[%c0, %c0_0, %c0_1] : memref<2x16x4xf32, #tpu.memory_space<vmem>>, vector<2x16x4xf32>
    %c0_2 = arith.constant 0 : index
    %c0_3 = arith.constant 0 : index
    %c0_4 = arith.constant 0 : index
    %1 = vector.load %arg2[%c0_2, %c0_3, %c0_4] : memref<3x4x96xf32, #tpu.memory_space<vmem>>, vector<3x4x96xf32>
    %c0_5 = arith.constant 0 : index
    %c0_6 = arith.constant 0 : index
    %c0_7 = arith.constant 0 : index
    %2 = vector.load %arg3[%c0_5, %c0_6, %c0_7] : memref<3x1x96xf32, #tpu.memory_space<vmem>>, vector<3x1x96xf32>
    %3 = vector.shape_cast %0 : vector<2x16x4xf32> to vector<32x4xf32>
    %4 = vector.extract_strided_slice %1 {offsets = [0, 0, 0], sizes = [1, 4, 96], strides = [1, 1, 1]} : vector<3x4x96xf32> to vector<1x4x96xf32>
    %5 = vector.shape_cast %4 : vector<1x4x96xf32> to vector<4x96xf32>
    %cst = arith.constant dense<0.000000e+00> : vector<32x96xf32>
    %6 = tpu.matmul %3, %5, %cst {dimension_numbers = #tpu.dot_dimension_numbers<[1], [0], [0], [1], [0, 0, 1, 1], [], []>} : vector<32x4xf32>, vector<4x96xf32>, vector<32x96xf32> -> vector<32x96xf32>
    %7 = vector.extract_strided_slice %2 {offsets = [0, 0, 0], sizes = [1, 1, 96], strides = [1, 1, 1]} : vector<3x1x96xf32> to vector<1x1x96xf32>
    %8 = vector.shape_cast %7 : vector<1x1x96xf32> to vector<1x96xf32>
    %9 = vector.broadcast %8 : vector<1x96xf32> to vector<32x96xf32>
    %10 = arith.addf %6, %9 : vector<32x96xf32>
    %11 = vector.shape_cast %10 : vector<32x96xf32> to vector<2x16x96xf32>
    %12 = vector.extract_strided_slice %1 {offsets = [1, 0, 0], sizes = [1, 4, 96], strides = [1, 1, 1]} : vector<3x4x96xf32> to vector<1x4x96xf32>
    %13 = vector.shape_cast %12 : vector<1x4x96xf32> to vector<4x96xf32>
    %cst_8 = arith.constant dense<0.000000e+00> : vector<32x96xf32>
    %14 = tpu.matmul %3, %13, %cst_8 {dimension_numbers = #tpu.dot_dimension_numbers<[1], [0], [0], [1], [0, 0, 1, 1], [], []>} : vector<32x4xf32>, vector<4x96xf32>, vector<32x96xf32> -> vector<32x96xf32>
    %15 = vector.extract_strided_slice %2 {offsets = [1, 0, 0], sizes = [1, 1, 96], strides = [1, 1, 1]} : vector<3x1x96xf32> to vector<1x1x96xf32>
    %16 = vector.shape_cast %15 : vector<1x1x96xf32> to vector<1x96xf32>
    %17 = vector.broadcast %16 : vector<1x96xf32> to vector<32x96xf32>
    %18 = arith.addf %14, %17 : vector<32x96xf32>
    %19 = vector.shape_cast %18 : vector<32x96xf32> to vector<2x16x96xf32>
    %20 = vector.extract_strided_slice %1 {offsets = [2, 0, 0], sizes = [1, 4, 96], strides = [1, 1, 1]} : vector<3x4x96xf32> to vector<1x4x96xf32>
    %21 = vector.shape_cast %20 : vector<1x4x96xf32> to vector<4x96xf32>
    %cst_9 = arith.constant dense<0.000000e+00> : vector<32x96xf32>
    %22 = tpu.matmul %3, %21, %cst_9 {dimension_numbers = #tpu.dot_dimension_numbers<[1], [0], [0], [1], [0, 0, 1, 1], [], []>} : vector<32x4xf32>, vector<4x96xf32>, vector<32x96xf32> -> vector<32x96xf32>
    %23 = vector.extract_strided_slice %2 {offsets = [2, 0, 0], sizes = [1, 1, 96], strides = [1, 1, 1]} : vector<3x1x96xf32> to vector<1x1x96xf32>
    %24 = vector.shape_cast %23 : vector<1x1x96xf32> to vector<1x96xf32>
    %25 = vector.broadcast %24 : vector<1x96xf32> to vector<32x96xf32>
    %26 = arith.addf %22, %25 : vector<32x96xf32>
    %27 = vector.shape_cast %26 : vector<32x96xf32> to vector<2x16x96xf32>
    %28 = vector.extract_strided_slice %11 {offsets = [0, 0, 0], sizes = [2, 16, 32], strides = [1, 1, 1]} : vector<2x16x96xf32> to vector<2x16x32xf32>
    %29 = vector.extract_strided_slice %19 {offsets = [0, 0, 0], sizes = [2, 16, 32], strides = [1, 1, 1]} : vector<2x16x96xf32> to vector<2x16x32xf32>
    %30 = vector.extract_strided_slice %27 {offsets = [0, 0, 0], sizes = [2, 16, 32], strides = [1, 1, 1]} : vector<2x16x96xf32> to vector<2x16x32xf32>
    %cst_10 = arith.constant dense<0.000000e+00> : vector<2x16x16xf32>
    %31 = tpu.matmul %28, %29, %cst_10 {dimension_numbers = #tpu.dot_dimension_numbers<[2], [2], [1], [1], [0, 0, 0, 1, 1, 1], [0], [0]>} : vector<2x16x32xf32>, vector<2x16x32xf32>, vector<2x16x16xf32> -> vector<2x16x16xf32>
    %cst_11 = arith.constant 0.176776692 : f32
    %32 = vector.broadcast %cst_11 : f32 to vector<2x16x16xf32>
    %33 = arith.mulf %31, %32 : vector<2x16x16xf32>
    %cst_12 = arith.constant dense<0xFF800000> : vector<2x16xf32>
    %34 = vector.multi_reduction <maximumf>, %33, %cst_12 [2] : vector<2x16x16xf32> to vector<2x16xf32>
    %35 = vector.shape_cast %34 : vector<2x16xf32> to vector<2x16x1xf32>
    %36 = vector.broadcast %35 : vector<2x16x1xf32> to vector<2x16x16xf32>
    %37 = arith.subf %33, %36 : vector<2x16x16xf32>
    %38 = math.exp %37 : vector<2x16x16xf32>
    %cst_13 = arith.constant dense<0.000000e+00> : vector<2x16xf32>
    %39 = vector.multi_reduction <add>, %38, %cst_13 [2] : vector<2x16x16xf32> to vector<2x16xf32>
    %40 = vector.shape_cast %39 : vector<2x16xf32> to vector<2x16x1xf32>
    %41 = tpu.reciprocal %40 {approx = true} : vector<2x16x1xf32> -> vector<2x16x1xf32>
    %42 = vector.broadcast %41 : vector<2x16x1xf32> to vector<2x16x16xf32>
    %43 = arith.mulf %38, %42 : vector<2x16x16xf32>
    %cst_14 = arith.constant dense<0.000000e+00> : vector<2x16xf32>
    %44 = vector.multi_reduction <add>, %43, %cst_14 [1] : vector<2x16x16xf32> to vector<2x16xf32>
    %45 = vector.shape_cast %44 : vector<2x16xf32> to vector<2x1x16xf32>
    %cst_15 = arith.constant 1.600000e+01 : f32
    %46 = vector.broadcast %cst_15 : f32 to vector<2x1x16xf32>
    %47 = arith.divf %45, %46 : vector<2x1x16xf32>
    %cst_16 = arith.constant dense<0.000000e+00> : vector<2x1x32xf32>
    %48 = tpu.matmul %47, %30, %cst_16 {dimension_numbers = #tpu.dot_dimension_numbers<[2], [1], [1], [2], [0, 0, 0, 1, 1, 2], [0], [0]>} : vector<2x1x16xf32>, vector<2x16x32xf32>, vector<2x1x32xf32> -> vector<2x1x32xf32>
    %49 = vector.shape_cast %48 : vector<2x1x32xf32> to vector<2x32xf32>
    %50 = vector.extract_strided_slice %11 {offsets = [0, 0, 32], sizes = [2, 16, 32], strides = [1, 1, 1]} : vector<2x16x96xf32> to vector<2x16x32xf32>
    %51 = vector.extract_strided_slice %19 {offsets = [0, 0, 32], sizes = [2, 16, 32], strides = [1, 1, 1]} : vector<2x16x96xf32> to vector<2x16x32xf32>
    %52 = vector.extract_strided_slice %27 {offsets = [0, 0, 32], sizes = [2, 16, 32], strides = [1, 1, 1]} : vector<2x16x96xf32> to vector<2x16x32xf32>
    %cst_17 = arith.constant dense<0.000000e+00> : vector<2x16x16xf32>
    %53 = tpu.matmul %50, %51, %cst_17 {dimension_numbers = #tpu.dot_dimension_numbers<[2], [2], [1], [1], [0, 0, 0, 1, 1, 1], [0], [0]>} : vector<2x16x32xf32>, vector<2x16x32xf32>, vector<2x16x16xf32> -> vector<2x16x16xf32>
    %cst_18 = arith.constant 0.176776692 : f32
    %54 = vector.broadcast %cst_18 : f32 to vector<2x16x16xf32>
    %55 = arith.mulf %53, %54 : vector<2x16x16xf32>
    %cst_19 = arith.constant dense<0xFF800000> : vector<2x16xf32>
    %56 = vector.multi_reduction <maximumf>, %55, %cst_19 [2] : vector<2x16x16xf32> to vector<2x16xf32>
    %57 = vector.shape_cast %56 : vector<2x16xf32> to vector<2x16x1xf32>
    %58 = vector.broadcast %57 : vector<2x16x1xf32> to vector<2x16x16xf32>
    %59 = arith.subf %55, %58 : vector<2x16x16xf32>
    %60 = math.exp %59 : vector<2x16x16xf32>
    %cst_20 = arith.constant dense<0.000000e+00> : vector<2x16xf32>
    %61 = vector.multi_reduction <add>, %60, %cst_20 [2] : vector<2x16x16xf32> to vector<2x16xf32>
    %62 = vector.shape_cast %61 : vector<2x16xf32> to vector<2x16x1xf32>
    %63 = tpu.reciprocal %62 {approx = true} : vector<2x16x1xf32> -> vector<2x16x1xf32>
    %64 = vector.broadcast %63 : vector<2x16x1xf32> to vector<2x16x16xf32>
    %65 = arith.mulf %60, %64 : vector<2x16x16xf32>
    %cst_21 = arith.constant dense<0.000000e+00> : vector<2x16xf32>
    %66 = vector.multi_reduction <add>, %65, %cst_21 [1] : vector<2x16x16xf32> to vector<2x16xf32>
    %67 = vector.shape_cast %66 : vector<2x16xf32> to vector<2x1x16xf32>
    %cst_22 = arith.constant 1.600000e+01 : f32
    %68 = vector.broadcast %cst_22 : f32 to vector<2x1x16xf32>
    %69 = arith.divf %67, %68 : vector<2x1x16xf32>
    %cst_23 = arith.constant dense<0.000000e+00> : vector<2x1x32xf32>
    %70 = tpu.matmul %69, %52, %cst_23 {dimension_numbers = #tpu.dot_dimension_numbers<[2], [1], [1], [2], [0, 0, 0, 1, 1, 2], [0], [0]>} : vector<2x1x16xf32>, vector<2x16x32xf32>, vector<2x1x32xf32> -> vector<2x1x32xf32>
    %71 = vector.shape_cast %70 : vector<2x1x32xf32> to vector<2x32xf32>
    %72 = vector.extract_strided_slice %11 {offsets = [0, 0, 64], sizes = [2, 16, 32], strides = [1, 1, 1]} : vector<2x16x96xf32> to vector<2x16x32xf32>
    %73 = vector.extract_strided_slice %19 {offsets = [0, 0, 64], sizes = [2, 16, 32], strides = [1, 1, 1]} : vector<2x16x96xf32> to vector<2x16x32xf32>
    %74 = vector.extract_strided_slice %27 {offsets = [0, 0, 64], sizes = [2, 16, 32], strides = [1, 1, 1]} : vector<2x16x96xf32> to vector<2x16x32xf32>
    %cst_24 = arith.constant dense<0.000000e+00> : vector<2x16x16xf32>
    %75 = tpu.matmul %72, %73, %cst_24 {dimension_numbers = #tpu.dot_dimension_numbers<[2], [2], [1], [1], [0, 0, 0, 1, 1, 1], [0], [0]>} : vector<2x16x32xf32>, vector<2x16x32xf32>, vector<2x16x16xf32> -> vector<2x16x16xf32>
    %cst_25 = arith.constant 0.176776692 : f32
    %76 = vector.broadcast %cst_25 : f32 to vector<2x16x16xf32>
    %77 = arith.mulf %75, %76 : vector<2x16x16xf32>
    %cst_26 = arith.constant dense<0xFF800000> : vector<2x16xf32>
    %78 = vector.multi_reduction <maximumf>, %77, %cst_26 [2] : vector<2x16x16xf32> to vector<2x16xf32>
    %79 = vector.shape_cast %78 : vector<2x16xf32> to vector<2x16x1xf32>
    %80 = vector.broadcast %79 : vector<2x16x1xf32> to vector<2x16x16xf32>
    %81 = arith.subf %77, %80 : vector<2x16x16xf32>
    %82 = math.exp %81 : vector<2x16x16xf32>
    %cst_27 = arith.constant dense<0.000000e+00> : vector<2x16xf32>
    %83 = vector.multi_reduction <add>, %82, %cst_27 [2] : vector<2x16x16xf32> to vector<2x16xf32>
    %84 = vector.shape_cast %83 : vector<2x16xf32> to vector<2x16x1xf32>
    %85 = tpu.reciprocal %84 {approx = true} : vector<2x16x1xf32> -> vector<2x16x1xf32>
    %86 = vector.broadcast %85 : vector<2x16x1xf32> to vector<2x16x16xf32>
    %87 = arith.mulf %82, %86 : vector<2x16x16xf32>
    %cst_28 = arith.constant dense<0.000000e+00> : vector<2x16xf32>
    %88 = vector.multi_reduction <add>, %87, %cst_28 [1] : vector<2x16x16xf32> to vector<2x16xf32>
    %89 = vector.shape_cast %88 : vector<2x16xf32> to vector<2x1x16xf32>
    %cst_29 = arith.constant 1.600000e+01 : f32
    %90 = vector.broadcast %cst_29 : f32 to vector<2x1x16xf32>
    %91 = arith.divf %89, %90 : vector<2x1x16xf32>
    %cst_30 = arith.constant dense<0.000000e+00> : vector<2x1x32xf32>
    %92 = tpu.matmul %91, %74, %cst_30 {dimension_numbers = #tpu.dot_dimension_numbers<[2], [1], [1], [2], [0, 0, 0, 1, 1, 2], [0], [0]>} : vector<2x1x16xf32>, vector<2x16x32xf32>, vector<2x1x32xf32> -> vector<2x1x32xf32>
    %93 = vector.shape_cast %92 : vector<2x1x32xf32> to vector<2x32xf32>
    %94 = tpu.concatenate %49, %71, %93 in 1 : vector<2x32xf32>, vector<2x32xf32>, vector<2x32xf32> -> vector<2x96xf32>
    %c0_31 = arith.constant 0 : index
    %c0_32 = arith.constant 0 : index
    %c0_33 = arith.constant 0 : index
    %95 = vector.load %arg4[%c0_31, %c0_32, %c0_33] : memref<2x16x6xf32, #tpu.memory_space<vmem>>, vector<2x16x6xf32>
    %c0_34 = arith.constant 0 : index
    %c0_35 = arith.constant 0 : index
    %c0_36 = arith.constant 0 : index
    %96 = vector.load %arg5[%c0_34, %c0_35, %c0_36] : memref<3x6x96xf32, #tpu.memory_space<vmem>>, vector<3x6x96xf32>
    %c0_37 = arith.constant 0 : index
    %c0_38 = arith.constant 0 : index
    %c0_39 = arith.constant 0 : index
    %97 = vector.load %arg6[%c0_37, %c0_38, %c0_39] : memref<3x1x96xf32, #tpu.memory_space<vmem>>, vector<3x1x96xf32>
    %98 = vector.shape_cast %95 : vector<2x16x6xf32> to vector<32x6xf32>
    %99 = vector.extract_strided_slice %96 {offsets = [0, 0, 0], sizes = [1, 6, 96], strides = [1, 1, 1]} : vector<3x6x96xf32> to vector<1x6x96xf32>
    %100 = vector.shape_cast %99 : vector<1x6x96xf32> to vector<6x96xf32>
    %cst_40 = arith.constant dense<0.000000e+00> : vector<32x96xf32>
    %101 = tpu.matmul %98, %100, %cst_40 {dimension_numbers = #tpu.dot_dimension_numbers<[1], [0], [0], [1], [0, 0, 1, 1], [], []>} : vector<32x6xf32>, vector<6x96xf32>, vector<32x96xf32> -> vector<32x96xf32>
    %102 = vector.extract_strided_slice %97 {offsets = [0, 0, 0], sizes = [1, 1, 96], strides = [1, 1, 1]} : vector<3x1x96xf32> to vector<1x1x96xf32>
    %103 = vector.shape_cast %102 : vector<1x1x96xf32> to vector<1x96xf32>
    %104 = vector.broadcast %103 : vector<1x96xf32> to vector<32x96xf32>
    %105 = arith.addf %101, %104 : vector<32x96xf32>
    %106 = vector.shape_cast %105 : vector<32x96xf32> to vector<2x16x96xf32>
    %107 = vector.extract_strided_slice %96 {offsets = [1, 0, 0], sizes = [1, 6, 96], strides = [1, 1, 1]} : vector<3x6x96xf32> to vector<1x6x96xf32>
    %108 = vector.shape_cast %107 : vector<1x6x96xf32> to vector<6x96xf32>
    %cst_41 = arith.constant dense<0.000000e+00> : vector<32x96xf32>
    %109 = tpu.matmul %98, %108, %cst_41 {dimension_numbers = #tpu.dot_dimension_numbers<[1], [0], [0], [1], [0, 0, 1, 1], [], []>} : vector<32x6xf32>, vector<6x96xf32>, vector<32x96xf32> -> vector<32x96xf32>
    %110 = vector.extract_strided_slice %97 {offsets = [1, 0, 0], sizes = [1, 1, 96], strides = [1, 1, 1]} : vector<3x1x96xf32> to vector<1x1x96xf32>
    %111 = vector.shape_cast %110 : vector<1x1x96xf32> to vector<1x96xf32>
    %112 = vector.broadcast %111 : vector<1x96xf32> to vector<32x96xf32>
    %113 = arith.addf %109, %112 : vector<32x96xf32>
    %114 = vector.shape_cast %113 : vector<32x96xf32> to vector<2x16x96xf32>
    %115 = vector.extract_strided_slice %96 {offsets = [2, 0, 0], sizes = [1, 6, 96], strides = [1, 1, 1]} : vector<3x6x96xf32> to vector<1x6x96xf32>
    %116 = vector.shape_cast %115 : vector<1x6x96xf32> to vector<6x96xf32>
    %cst_42 = arith.constant dense<0.000000e+00> : vector<32x96xf32>
    %117 = tpu.matmul %98, %116, %cst_42 {dimension_numbers = #tpu.dot_dimension_numbers<[1], [0], [0], [1], [0, 0, 1, 1], [], []>} : vector<32x6xf32>, vector<6x96xf32>, vector<32x96xf32> -> vector<32x96xf32>
    %118 = vector.extract_strided_slice %97 {offsets = [2, 0, 0], sizes = [1, 1, 96], strides = [1, 1, 1]} : vector<3x1x96xf32> to vector<1x1x96xf32>
    %119 = vector.shape_cast %118 : vector<1x1x96xf32> to vector<1x96xf32>
    %120 = vector.broadcast %119 : vector<1x96xf32> to vector<32x96xf32>
    %121 = arith.addf %117, %120 : vector<32x96xf32>
    %122 = vector.shape_cast %121 : vector<32x96xf32> to vector<2x16x96xf32>
    %123 = vector.extract_strided_slice %106 {offsets = [0, 0, 0], sizes = [2, 16, 32], strides = [1, 1, 1]} : vector<2x16x96xf32> to vector<2x16x32xf32>
    %124 = vector.extract_strided_slice %114 {offsets = [0, 0, 0], sizes = [2, 16, 32], strides = [1, 1, 1]} : vector<2x16x96xf32> to vector<2x16x32xf32>
    %125 = vector.extract_strided_slice %122 {offsets = [0, 0, 0], sizes = [2, 16, 32], strides = [1, 1, 1]} : vector<2x16x96xf32> to vector<2x16x32xf32>
    %cst_43 = arith.constant dense<0.000000e+00> : vector<2x16x16xf32>
    %126 = tpu.matmul %123, %124, %cst_43 {dimension_numbers = #tpu.dot_dimension_numbers<[2], [2], [1], [1], [0, 0, 0, 1, 1, 1], [0], [0]>} : vector<2x16x32xf32>, vector<2x16x32xf32>, vector<2x16x16xf32> -> vector<2x16x16xf32>
    %cst_44 = arith.constant 0.176776692 : f32
    %127 = vector.broadcast %cst_44 : f32 to vector<2x16x16xf32>
    %128 = arith.mulf %126, %127 : vector<2x16x16xf32>
    %cst_45 = arith.constant dense<0xFF800000> : vector<2x16xf32>
    %129 = vector.multi_reduction <maximumf>, %128, %cst_45 [2] : vector<2x16x16xf32> to vector<2x16xf32>
    %130 = vector.shape_cast %129 : vector<2x16xf32> to vector<2x16x1xf32>
    %131 = vector.broadcast %130 : vector<2x16x1xf32> to vector<2x16x16xf32>
    %132 = arith.subf %128, %131 : vector<2x16x16xf32>
    %133 = math.exp %132 : vector<2x16x16xf32>
    %cst_46 = arith.constant dense<0.000000e+00> : vector<2x16xf32>
    %134 = vector.multi_reduction <add>, %133, %cst_46 [2] : vector<2x16x16xf32> to vector<2x16xf32>
    %135 = vector.shape_cast %134 : vector<2x16xf32> to vector<2x16x1xf32>
    %136 = tpu.reciprocal %135 {approx = true} : vector<2x16x1xf32> -> vector<2x16x1xf32>
    %137 = vector.broadcast %136 : vector<2x16x1xf32> to vector<2x16x16xf32>
    %138 = arith.mulf %133, %137 : vector<2x16x16xf32>
    %cst_47 = arith.constant dense<0.000000e+00> : vector<2x16xf32>
    %139 = vector.multi_reduction <add>, %138, %cst_47 [1] : vector<2x16x16xf32> to vector<2x16xf32>
    %140 = vector.shape_cast %139 : vector<2x16xf32> to vector<2x1x16xf32>
    %cst_48 = arith.constant 1.600000e+01 : f32
    %141 = vector.broadcast %cst_48 : f32 to vector<2x1x16xf32>
    %142 = arith.divf %140, %141 : vector<2x1x16xf32>
    %cst_49 = arith.constant dense<0.000000e+00> : vector<2x1x32xf32>
    %143 = tpu.matmul %142, %125, %cst_49 {dimension_numbers = #tpu.dot_dimension_numbers<[2], [1], [1], [2], [0, 0, 0, 1, 1, 2], [0], [0]>} : vector<2x1x16xf32>, vector<2x16x32xf32>, vector<2x1x32xf32> -> vector<2x1x32xf32>
    %144 = vector.shape_cast %143 : vector<2x1x32xf32> to vector<2x32xf32>
    %145 = vector.extract_strided_slice %106 {offsets = [0, 0, 32], sizes = [2, 16, 32], strides = [1, 1, 1]} : vector<2x16x96xf32> to vector<2x16x32xf32>
    %146 = vector.extract_strided_slice %114 {offsets = [0, 0, 32], sizes = [2, 16, 32], strides = [1, 1, 1]} : vector<2x16x96xf32> to vector<2x16x32xf32>
    %147 = vector.extract_strided_slice %122 {offsets = [0, 0, 32], sizes = [2, 16, 32], strides = [1, 1, 1]} : vector<2x16x96xf32> to vector<2x16x32xf32>
    %cst_50 = arith.constant dense<0.000000e+00> : vector<2x16x16xf32>
    %148 = tpu.matmul %145, %146, %cst_50 {dimension_numbers = #tpu.dot_dimension_numbers<[2], [2], [1], [1], [0, 0, 0, 1, 1, 1], [0], [0]>} : vector<2x16x32xf32>, vector<2x16x32xf32>, vector<2x16x16xf32> -> vector<2x16x16xf32>
    %cst_51 = arith.constant 0.176776692 : f32
    %149 = vector.broadcast %cst_51 : f32 to vector<2x16x16xf32>
    %150 = arith.mulf %148, %149 : vector<2x16x16xf32>
    %cst_52 = arith.constant dense<0xFF800000> : vector<2x16xf32>
    %151 = vector.multi_reduction <maximumf>, %150, %cst_52 [2] : vector<2x16x16xf32> to vector<2x16xf32>
    %152 = vector.shape_cast %151 : vector<2x16xf32> to vector<2x16x1xf32>
    %153 = vector.broadcast %152 : vector<2x16x1xf32> to vector<2x16x16xf32>
    %154 = arith.subf %150, %153 : vector<2x16x16xf32>
    %155 = math.exp %154 : vector<2x16x16xf32>
    %cst_53 = arith.constant dense<0.000000e+00> : vector<2x16xf32>
    %156 = vector.multi_reduction <add>, %155, %cst_53 [2] : vector<2x16x16xf32> to vector<2x16xf32>
    %157 = vector.shape_cast %156 : vector<2x16xf32> to vector<2x16x1xf32>
    %158 = tpu.reciprocal %157 {approx = true} : vector<2x16x1xf32> -> vector<2x16x1xf32>
    %159 = vector.broadcast %158 : vector<2x16x1xf32> to vector<2x16x16xf32>
    %160 = arith.mulf %155, %159 : vector<2x16x16xf32>
    %cst_54 = arith.constant dense<0.000000e+00> : vector<2x16xf32>
    %161 = vector.multi_reduction <add>, %160, %cst_54 [1] : vector<2x16x16xf32> to vector<2x16xf32>
    %162 = vector.shape_cast %161 : vector<2x16xf32> to vector<2x1x16xf32>
    %cst_55 = arith.constant 1.600000e+01 : f32
    %163 = vector.broadcast %cst_55 : f32 to vector<2x1x16xf32>
    %164 = arith.divf %162, %163 : vector<2x1x16xf32>
    %cst_56 = arith.constant dense<0.000000e+00> : vector<2x1x32xf32>
    %165 = tpu.matmul %164, %147, %cst_56 {dimension_numbers = #tpu.dot_dimension_numbers<[2], [1], [1], [2], [0, 0, 0, 1, 1, 2], [0], [0]>} : vector<2x1x16xf32>, vector<2x16x32xf32>, vector<2x1x32xf32> -> vector<2x1x32xf32>
    %166 = vector.shape_cast %165 : vector<2x1x32xf32> to vector<2x32xf32>
    %167 = vector.extract_strided_slice %106 {offsets = [0, 0, 64], sizes = [2, 16, 32], strides = [1, 1, 1]} : vector<2x16x96xf32> to vector<2x16x32xf32>
    %168 = vector.extract_strided_slice %114 {offsets = [0, 0, 64], sizes = [2, 16, 32], strides = [1, 1, 1]} : vector<2x16x96xf32> to vector<2x16x32xf32>
    %169 = vector.extract_strided_slice %122 {offsets = [0, 0, 64], sizes = [2, 16, 32], strides = [1, 1, 1]} : vector<2x16x96xf32> to vector<2x16x32xf32>
    %cst_57 = arith.constant dense<0.000000e+00> : vector<2x16x16xf32>
    %170 = tpu.matmul %167, %168, %cst_57 {dimension_numbers = #tpu.dot_dimension_numbers<[2], [2], [1], [1], [0, 0, 0, 1, 1, 1], [0], [0]>} : vector<2x16x32xf32>, vector<2x16x32xf32>, vector<2x16x16xf32> -> vector<2x16x16xf32>
    %cst_58 = arith.constant 0.176776692 : f32
    %171 = vector.broadcast %cst_58 : f32 to vector<2x16x16xf32>
    %172 = arith.mulf %170, %171 : vector<2x16x16xf32>
    %cst_59 = arith.constant dense<0xFF800000> : vector<2x16xf32>
    %173 = vector.multi_reduction <maximumf>, %172, %cst_59 [2] : vector<2x16x16xf32> to vector<2x16xf32>
    %174 = vector.shape_cast %173 : vector<2x16xf32> to vector<2x16x1xf32>
    %175 = vector.broadcast %174 : vector<2x16x1xf32> to vector<2x16x16xf32>
    %176 = arith.subf %172, %175 : vector<2x16x16xf32>
    %177 = math.exp %176 : vector<2x16x16xf32>
    %cst_60 = arith.constant dense<0.000000e+00> : vector<2x16xf32>
    %178 = vector.multi_reduction <add>, %177, %cst_60 [2] : vector<2x16x16xf32> to vector<2x16xf32>
    %179 = vector.shape_cast %178 : vector<2x16xf32> to vector<2x16x1xf32>
    %180 = tpu.reciprocal %179 {approx = true} : vector<2x16x1xf32> -> vector<2x16x1xf32>
    %181 = vector.broadcast %180 : vector<2x16x1xf32> to vector<2x16x16xf32>
    %182 = arith.mulf %177, %181 : vector<2x16x16xf32>
    %cst_61 = arith.constant dense<0.000000e+00> : vector<2x16xf32>
    %183 = vector.multi_reduction <add>, %182, %cst_61 [1] : vector<2x16x16xf32> to vector<2x16xf32>
    %184 = vector.shape_cast %183 : vector<2x16xf32> to vector<2x1x16xf32>
    %cst_62 = arith.constant 1.600000e+01 : f32
    %185 = vector.broadcast %cst_62 : f32 to vector<2x1x16xf32>
    %186 = arith.divf %184, %185 : vector<2x1x16xf32>
    %cst_63 = arith.constant dense<0.000000e+00> : vector<2x1x32xf32>
    %187 = tpu.matmul %186, %169, %cst_63 {dimension_numbers = #tpu.dot_dimension_numbers<[2], [1], [1], [2], [0, 0, 0, 1, 1, 2], [0], [0]>} : vector<2x1x16xf32>, vector<2x16x32xf32>, vector<2x1x32xf32> -> vector<2x1x32xf32>
    %188 = vector.shape_cast %187 : vector<2x1x32xf32> to vector<2x32xf32>
    %189 = tpu.concatenate %144, %166, %188 in 1 : vector<2x32xf32>, vector<2x32xf32>, vector<2x32xf32> -> vector<2x96xf32>
    %190 = tpu.concatenate %94, %189 in 1 : vector<2x96xf32>, vector<2x96xf32> -> vector<2x192xf32>
    %c0_64 = arith.constant 0 : index
    %c0_65 = arith.constant 0 : index
    %191 = vector.load %arg7[%c0_64, %c0_65] : memref<192x16xf32, #tpu.memory_space<vmem>>, vector<192x16xf32>
    %cst_66 = arith.constant dense<0.000000e+00> : vector<2x16xf32>
    %192 = tpu.matmul %190, %191, %cst_66 {dimension_numbers = #tpu.dot_dimension_numbers<[1], [0], [0], [1], [0, 0, 1, 1], [], []>} : vector<2x192xf32>, vector<192x16xf32>, vector<2x16xf32> -> vector<2x16xf32>
    %c0_67 = arith.constant 0 : index
    %c0_68 = arith.constant 0 : index
    %193 = vector.load %arg8[%c0_67, %c0_68] : memref<1x16xf32, #tpu.memory_space<vmem>>, vector<1x16xf32>
    %194 = vector.broadcast %193 : vector<1x16xf32> to vector<2x16xf32>
    %195 = arith.addf %192, %194 : vector<2x16xf32>
    %196 = arith.negf %195 : vector<2x16xf32>
    %197 = math.exp %196 : vector<2x16xf32>
    %cst_69 = arith.constant 1.000000e+00 : f32
    %198 = vector.broadcast %cst_69 : f32 to vector<2x16xf32>
    %199 = arith.addf %198, %197 : vector<2x16xf32>
    %200 = arith.divf %198, %199 : vector<2x16xf32>
    %c0_70 = arith.constant 0 : index
    %c0_71 = arith.constant 0 : index
    %201 = vector.load %arg9[%c0_70, %c0_71] : memref<2x16xf32, #tpu.memory_space<vmem>>, vector<2x16xf32>
    tpu.vector_store %arg9[%c0_70, %c0_71], %200 {strides = array<i32>} : memref<2x16xf32, #tpu.memory_space<vmem>>, vector<2x16xf32>,
    return
  }
  func.func @transform_0(%arg0: i32) -> (i32, i32, i32) {
    %c0_i32 = arith.constant 0 : i32
    %c0_i32_0 = arith.constant 0 : i32
    %c0_i32_1 = arith.constant 0 : i32
    return %arg0, %c0_i32, %c0_i32_0 : i32, i32, i32
  }
  func.func @transform_1(%arg0: i32) -> (i32, i32, i32) {
    %c0_i32 = arith.constant 0 : i32
    %c0_i32_0 = arith.constant 0 : i32
    %c0_i32_1 = arith.constant 0 : i32
    %c0_i32_2 = arith.constant 0 : i32
    return %c0_i32, %c0_i32_0, %c0_i32_1 : i32, i32, i32
  }
  func.func @transform_2(%arg0: i32) -> (i32, i32, i32) {
    %c0_i32 = arith.constant 0 : i32
    %c0_i32_0 = arith.constant 0 : i32
    %c0_i32_1 = arith.constant 0 : i32
    %c0_i32_2 = arith.constant 0 : i32
    return %c0_i32, %c0_i32_0, %c0_i32_1 : i32, i32, i32
  }
  func.func @transform_3(%arg0: i32) -> (i32, i32, i32) {
    %c0_i32 = arith.constant 0 : i32
    %c0_i32_0 = arith.constant 0 : i32
    %c0_i32_1 = arith.constant 0 : i32
    return %arg0, %c0_i32, %c0_i32_0 : i32, i32, i32
  }
  func.func @transform_4(%arg0: i32) -> (i32, i32, i32) {
    %c0_i32 = arith.constant 0 : i32
    %c0_i32_0 = arith.constant 0 : i32
    %c0_i32_1 = arith.constant 0 : i32
    %c0_i32_2 = arith.constant 0 : i32
    return %c0_i32, %c0_i32_0, %c0_i32_1 : i32, i32, i32
  }
  func.func @transform_5(%arg0: i32) -> (i32, i32, i32) {
    %c0_i32 = arith.constant 0 : i32
    %c0_i32_0 = arith.constant 0 : i32
    %c0_i32_1 = arith.constant 0 : i32
    %c0_i32_2 = arith.constant 0 : i32
    return %c0_i32, %c0_i32_0, %c0_i32_1 : i32, i32, i32
  }
  func.func @transform_6(%arg0: i32) -> (i32, i32) {
    %c0_i32 = arith.constant 0 : i32
    %c0_i32_0 = arith.constant 0 : i32
    %c0_i32_1 = arith.constant 0 : i32
    return %c0_i32, %c0_i32_0 : i32, i32
  }
  func.func @transform_7(%arg0: i32) -> (i32, i32) {
    %c0_i32 = arith.constant 0 : i32
    %c0_i32_0 = arith.constant 0 : i32
    %c0_i32_1 = arith.constant 0 : i32
    return %c0_i32, %c0_i32_0 : i32, i32
  }
  func.func @transform_8(%arg0: i32) -> (i32, i32) {
    %c0_i32 = arith.constant 0 : i32
    %c0_i32_0 = arith.constant 0 : i32
    return %arg0, %c0_i32 : i32, i32
  }
}

</mosaic_0001>

<llo_original>
// kernel: tpu_custom_call.1
$region0: #{tpu_custom_call.1}
  #allocation0 [shape = 'u32[]', space=smem, size = 0x4, offset = 0x4, fixed_abs, tag = 'smem constant byte address 0x4 - core index']
  #allocation1 [shape = 'u32[144,128]{1,0:T(1,128)}', space=vmem, size = 0x12000, scoped, tag = 'internal scratch']
  %s0 = inlined_call_operand.vmem [shape: f32[2,16,4], index: 0, kind: input, shape index: {}]
  %s1 = inlined_call_operand.vmem [shape: f32[3,4,96], index: 1, kind: input, shape index: {}]
  %s2 = inlined_call_operand.vmem [shape: f32[3,1,96], index: 2, kind: input, shape index: {}]
  %s3 = inlined_call_operand.vmem [shape: f32[2,16,6], index: 3, kind: input, shape index: {}]
  %s4 = inlined_call_operand.vmem [shape: f32[3,6,96], index: 4, kind: input, shape index: {}]
  %s5 = inlined_call_operand.vmem [shape: f32[3,1,96], index: 5, kind: input, shape index: {}]
  %s6 = inlined_call_operand.vmem [shape: f32[192,16], index: 6, kind: input, shape index: {}]
  %s7 = inlined_call_operand.vmem [shape: f32[1,16], index: 7, kind: input, shape index: {}]
  %s8 = inlined_call_operand.hbm [shape: f32[2,16], index: 8, kind: output, shape index: {}]
  %s9 = sld [smem:[#allocation0]]
  $region42: #{tpu_custom_call.1} parent=0
    _
  %s11 = ssub.s32 1, %s9
  %s12 = scalar_select 0, %s11, %s9
  $region1: #{tpu_custom_call.1} parent=0
    #allocation2 [shape = 'u8[1024]{0}', space=vmem, size = 0x400, scoped, tag = 'output window, operand 0, single buffered']
    #allocation3 [shape = 's32[1]{0}', space=sflag, size = 0x4, scoped, tag = 'scoped memory for tpu_custom_call.1']
    %13 = vsyncpa [#allocation3], 0
    // Predicated region
    $region2: #{tpu_custom_call.1} parent=1 // pred_check
      _
    $region3: #{tpu_custom_call.1} parent=1 // pred_check_branch
      %15 = sbr.rel (0) target = $region5
    $region4: #{tpu_custom_call.1} parent=1 // pred_region
      _
    $region5: #{tpu_custom_call.1} parent=1 // pred_fallthru
      _
    // Predicated region
    $region6: #{tpu_custom_call.1} parent=1 // pred_check
      _
    $region7: #{tpu_custom_call.1} parent=1 // pred_check_branch
      %17 = sbr.rel (0) target = $region9
    $region8: #{tpu_custom_call.1} parent=1 // pred_region
      _
    $region9: #{tpu_custom_call.1} parent=1 // pred_fallthru
      _
    // Predicated region
    $region10: #{tpu_custom_call.1} parent=1 // pred_check
      _
    $region11: #{tpu_custom_call.1} parent=1 // pred_check_branch
      %19 = sbr.rel (0) target = $region13
    $region12: #{tpu_custom_call.1} parent=1 // pred_region
      _
    $region13: #{tpu_custom_call.1} parent=1 // pred_fallthru
      _
    // Predicated region
    $region14: #{tpu_custom_call.1} parent=1 // pred_check
      _
    $region15: #{tpu_custom_call.1} parent=1 // pred_check_branch
      %21 = sbr.rel (0) target = $region17
    $region16: #{tpu_custom_call.1} parent=1 // pred_region
      _
    $region17: #{tpu_custom_call.1} parent=1 // pred_fallthru
      _
    // Predicated region
    $region18: #{tpu_custom_call.1} parent=1 // pred_check
      _
    $region19: #{tpu_custom_call.1} parent=1 // pred_check_branch
      %23 = sbr.rel (0) target = $region21
    $region20: #{tpu_custom_call.1} parent=1 // pred_region
      _
    $region21: #{tpu_custom_call.1} parent=1 // pred_fallthru
      _
    // Predicated region
    $region22: #{tpu_custom_call.1} parent=1 // pred_check
      _
    $region23: #{tpu_custom_call.1} parent=1 // pred_check_branch
      %25 = sbr.rel (0) target = $region25
    $region24: #{tpu_custom_call.1} parent=1 // pred_region
      _
    $region25: #{tpu_custom_call.1} parent=1 // pred_fallthru
      _
    // Predicated region
    $region26: #{tpu_custom_call.1} parent=1 // pred_check
      _
    $region27: #{tpu_custom_call.1} parent=1 // pred_check_branch
      %27 = sbr.rel (0) target = $region29
    $region28: #{tpu_custom_call.1} parent=1 // pred_region
      _
    $region29: #{tpu_custom_call.1} parent=1 // pred_fallthru
      _
    // Predicated region
    $region30: #{tpu_custom_call.1} parent=1 // pred_check
      _
    $region31: #{tpu_custom_call.1} parent=1 // pred_check_branch
      %29 = sbr.rel (0) target = $region33
    $region32: #{tpu_custom_call.1} parent=1 // pred_region
      _
    $region33: #{tpu_custom_call.1} parent=1 // pred_fallthru
      _
    %v30 = vld [vmem:[%s0] sm:$0xff]
    %v31 = vld [vmem:[%s0 + $0x8] sm:$0xff]
    %v32 = vld [vmem:[%s0 + $0x10] sm:$0xff]
    %v33 = vld [vmem:[%s0 + $0x18] sm:$0xff]
    %v34 = vld [vmem:[%s1] sm:$0xf]
    %v35 = vld [vmem:[%s1 + $0x4] sm:$0xf]
    %v36 = vld [vmem:[%s1 + $0x8] sm:$0xf]
    %v37 = vld [vmem:[%s2] sm:$0x1]
    %v38 = vld [vmem:[%s2 + $0x1] sm:$0x1]
    %v39 = vld [vmem:[%s2 + $0x2] sm:$0x1]
    %v41 = vlaneseq
    %v42 = vshrl.u32 %v41, 7
    %v43 = vsub.s32 0, %v42
    %v44 = vrot.slane %v37, %v43
    %vm46 = vcmask 31744
    %v48 = vsel %vm46, %v30, 0
    %v51 = vsel %vm46, %v31, 0
    %v54 = vsel %vm46, %v32, 0
    %v57 = vsel %vm46, %v33, 0
    %vm59 = vcmask 1043456
    %v61 = vsel %vm59, %v34, 0
    %63 = vmatprep.subr.mxu0 0.0
    %64 = vmatpush1.msra.mxu0 %v61
    %65 = vmatprep.subr.mxu0 0.0
    %66 = vmatpush1.msra.mxu0 0.0
    %67 = vmatprep.subr.mxu0 0.0
    %68 = vmatpush1.msra.mxu0 0.0
    %69 = vmatprep.subr.mxu0 0.0
    %70 = vmatpush1.msra.mxu0 0.0
    %71 = vmatprep.subr.mxu0 0.0
    %72 = vmatpush1.msra.mxu0 0.0
    %73 = vmatprep.subr.mxu0 0.0
    %74 = vmatpush1.msra.mxu0 0.0
    %75 = vmatprep.subr.mxu0 0.0
    %76 = vmatpush1.msra.mxu0 0.0
    %77 = vmatprep.subr.mxu0 0.0
    %78 = vmatpush1.msra.mxu0 0.0
    %79 = vmatprep.subr.mxu0 0.0
    %80 = vmatpush1.msra.mxu0 0.0
    %81 = vmatprep.subr.mxu0 0.0
    %82 = vmatpush1.msra.mxu0 0.0
    %83 = vmatprep.subr.mxu0 0.0
    %84 = vmatpush1.msra.mxu0 0.0
    %85 = vmatprep.subr.mxu0 0.0
    %86 = vmatpush1.msra.mxu0 0.0
    %87 = vmatprep.subr.mxu0 0.0
    %88 = vmatpush1.msra.mxu0 0.0
    %89 = vmatprep.subr.mxu0 0.0
    %90 = vmatpush1.msra.mxu0 0.0
    %91 = vmatprep.subr.mxu0 0.0
    %92 = vmatpush1.msra.mxu0 0.0
    %93 = vmatprep.subr.mxu0 0.0
    %94 = vmatpush1.msra.mxu0 0.0
    %95 = vmatprep.subr.mxu0 0.0
    %96 = vmatpush1.msra.mxu0 0.0
    %97 = vmatprep.subr.mxu0 0.0
    %98 = vmatpush1.msra.mxu0 0.0
    %99 = vmatprep.subr.mxu0 0.0
    %100 = vmatpush1.msra.mxu0 0.0
    %101 = vmatprep.subr.mxu0 0.0
    %102 = vmatpush1.msra.mxu0 0.0
    %103 = vmatprep.subr.mxu0 0.0
    %104 = vmatpush1.msra.mxu0 0.0
    %105 = vmatprep.subr.mxu0 0.0
    %106 = vmatpush1.msra.mxu0 0.0
    %107 = vmatprep.subr.mxu0 0.0
    %108 = vmatpush1.msra.mxu0 0.0
    %109 = vmatprep.subr.mxu0 0.0
    %110 = vmatpush1.msra.mxu0 0.0
    %111 = vmatprep.subr.mxu0 0.0
    %112 = vmatpush1.msra.mxu0 0.0
    %113 = vmatprep.subr.mxu0 0.0
    %114 = vmatpush1.msra.mxu0 0.0
    %115 = vmatprep.subr.mxu0 0.0
    %116 = vmatpush1.msra.mxu0 0.0
    %117 = vmatprep.subr.mxu0 0.0
    %118 = vmatpush1.msra.mxu0 0.0
    %119 = vmatprep.subr.mxu0 0.0
    %120 = vmatpush1.msra.mxu0 0.0
    %121 = vmatprep.subr.mxu0 0.0
    %122 = vmatpush1.msra.mxu0 0.0
    %123 = vmatprep.subr.mxu0 0.0
    %124 = vmatpush1.msra.mxu0 0.0
    %125 = vmatprep.subr.mxu0 0.0
    %126 = vmatpush1.msra.mxu0 0.0
    %127 = vmatprep.mubr.f32.mxu0 0.0
    %128 = vmatmul.mubr.f32.gmra.mrb[0].mxu0 %v48
    %v129 = vpop.f32.mrb[0].mxu0
    %v130 = vadd.f32 %v44, %v129
    %v131 = vpop.f32.mrb[0].mxu0
    %132 = vmatprep.mubr.f32.mxu0 0.0
    %133 = vmatmul.mubr.f32.gmra.mrb[0].mxu0 %v51
    %v134 = vpop.f32.mrb[0].mxu0
    %v135 = vadd.f32 %v44, %v134
    %v136 = vpop.f32.mrb[0].mxu0
    %137 = vmatprep.mubr.f32.mxu0 0.0
    %138 = vmatmul.mubr.f32.gmra.mrb[0].mxu0 %v54
    %v139 = vpop.f32.mrb[0].mxu0
    %v140 = vadd.f32 %v44, %v139
    %v141 = vpop.f32.mrb[0].mxu0
    %142 = vmatprep.mubr.f32.mxu0 0.0
    %143 = vmatmul.mubr.f32.gmra.mrb[0].mxu0 %v57
    %v144 = vpop.f32.mrb[0].mxu0
    %v145 = vadd.f32 %v44, %v144
    %v146 = vpop.f32.mrb[0].mxu0
    %147 = vdwg.mxu0
    %v149 = vlaneseq
    %v150 = vshrl.u32 %v149, 7
    %v151 = vsub.s32 0, %v150
    %v152 = vrot.slane %v38, %v151
    %v155 = vsel %vm59, %v35, 0
    %157 = vmatprep.subr.mxu0 0.0
    %158 = vmatpush1.msra.mxu0 %v155
    %159 = vmatprep.subr.mxu0 0.0
    %160 = vmatpush1.msra.mxu0 0.0
    %161 = vmatprep.subr.mxu0 0.0
    %162 = vmatpush1.msra.mxu0 0.0
    %163 = vmatprep.subr.mxu0 0.0
    %164 = vmatpush1.msra.mxu0 0.0
    %165 = vmatprep.subr.mxu0 0.0
    %166 = vmatpush1.msra.mxu0 0.0
    %167 = vmatprep.subr.mxu0 0.0
    %168 = vmatpush1.msra.mxu0 0.0
    %169 = vmatprep.subr.mxu0 0.0
    %170 = vmatpush1.msra.mxu0 0.0
    %171 = vmatprep.subr.mxu0 0.0
    %172 = vmatpush1.msra.mxu0 0.0
    %173 = vmatprep.subr.mxu0 0.0
    %174 = vmatpush1.msra.mxu0 0.0
    %175 = vmatprep.subr.mxu0 0.0
    %176 = vmatpush1.msra.mxu0 0.0
    %177 = vmatprep.subr.mxu0 0.0
    %178 = vmatpush1.msra.mxu0 0.0
    %179 = vmatprep.subr.mxu0 0.0
    %180 = vmatpush1.msra.mxu0 0.0
    %181 = vmatprep.subr.mxu0 0.0
    %182 = vmatpush1.msra.mxu0 0.0
    %183 = vmatprep.subr.mxu0 0.0
    %184 = vmatpush1.msra.mxu0 0.0
    %185 = vmatprep.subr.mxu0 0.0
    %186 = vmatpush1.msra.mxu0 0.0
    %187 = vmatprep.subr.mxu0 0.0
    %188 = vmatpush1.msra.mxu0 0.0
    %189 = vmatprep.subr.mxu0 0.0
    %190 = vmatpush1.msra.mxu0 0.0
    %191 = vmatprep.subr.mxu0 0.0
    %192 = vmatpush1.msra.mxu0 0.0
    %193 = vmatprep.subr.mxu0 0.0
    %194 = vmatpush1.msra.mxu0 0.0
    %195 = vmatprep.subr.mxu0 0.0
    %196 = vmatpush1.msra.mxu0 0.0
    %197 = vmatprep.subr.mxu0 0.0
    %198 = vmatpush1.msra.mxu0 0.0
    %199 = vmatprep.subr.mxu0 0.0
    %200 = vmatpush1.msra.mxu0 0.0
    %201 = vmatprep.subr.mxu0 0.0
    %202 = vmatpush1.msra.mxu0 0.0
    %203 = vmatprep.subr.mxu0 0.0
    %204 = vmatpush1.msra.mxu0 0.0
    %205 = vmatprep.subr.mxu0 0.0
    %206 = vmatpush1.msra.mxu0 0.0
    %207 = vmatprep.subr.mxu0 0.0
    %208 = vmatpush1.msra.mxu0 0.0
    %209 = vmatprep.subr.mxu0 0.0
    %210 = vmatpush1.msra.mxu0 0.0
    %211 = vmatprep.subr.mxu0 0.0
    %212 = vmatpush1.msra.mxu0 0.0
    %213 = vmatprep.subr.mxu0 0.0
    %214 = vmatpush1.msra.mxu0 0.0
    %215 = vmatprep.subr.mxu0 0.0
    %216 = vmatpush1.msra.mxu0 0.0
    %217 = vmatprep.subr.mxu0 0.0
    %218 = vmatpush1.msra.mxu0 0.0
    %219 = vmatprep.subr.mxu0 0.0
    %220 = vmatpush1.msra.mxu0 0.0
    %221 = vmatprep.mubr.f32.mxu0 0.0
    %222 = vmatmul.mubr.f32.gmra.mrb[0].mxu0 %v48
    %v223 = vpop.f32.mrb[0].mxu0
    %v224 = vadd.f32 %v152, %v223
    %v225 = vpop.f32.mrb[0].mxu0
    %226 = vmatprep.mubr.f32.mxu0 0.0
    %227 = vmatmul.mubr.f32.gmra.mrb[0].mxu0 %v51
    %v228 = vpop.f32.mrb[0].mxu0
    %v229 = vadd.f32 %v152, %v228
    %v230 = vpop.f32.mrb[0].mxu0
    %231 = vmatprep.mubr.f32.mxu0 0.0
    %232 = vmatmul.mubr.f32.gmra.mrb[0].mxu0 %v54
    %v233 = vpop.f32.mrb[0].mxu0
    %v234 = vadd.f32 %v152, %v233
    %v235 = vpop.f32.mrb[0].mxu0
    %236 = vmatprep.mubr.f32.mxu0 0.0
    %237 = vmatmul.mubr.f32.gmra.mrb[0].mxu0 %v57
    %v238 = vpop.f32.mrb[0].mxu0
    %v239 = vadd.f32 %v152, %v238
    %v240 = vpop.f32.mrb[0].mxu0
    %241 = vdwg.mxu0
    %v243 = vlaneseq
    %v244 = vshrl.u32 %v243, 7
    %v245 = vsub.s32 0, %v244
    %v246 = vrot.slane %v39, %v245
    %v249 = vsel %vm59, %v36, 0
    %251 = vmatprep.subr.mxu0 0.0
    %252 = vmatpush1.msra.mxu0 %v249
    %253 = vmatprep.subr.mxu0 0.0
    %254 = vmatpush1.msra.mxu0 0.0
    %255 = vmatprep.subr.mxu0 0.0
    %256 = vmatpush1.msra.mxu0 0.0
    %257 = vmatprep.subr.mxu0 0.0
    %258 = vmatpush1.msra.mxu0 0.0
    %259 = vmatprep.subr.mxu0 0.0
    %260 = vmatpush1.msra.mxu0 0.0
    %261 = vmatprep.subr.mxu0 0.0
    %262 = vmatpush1.msra.mxu0 0.0
    %263 = vmatprep.subr.mxu0 0.0
    %264 = vmatpush1.msra.mxu0 0.0
    %265 = vmatprep.subr.mxu0 0.0
    %266 = vmatpush1.msra.mxu0 0.0
    %267 = vmatprep.subr.mxu0 0.0
    %268 = vmatpush1.msra.mxu0 0.0
    %269 = vmatprep.subr.mxu0 0.0
    %270 = vmatpush1.msra.mxu0 0.0
    %271 = vmatprep.subr.mxu0 0.0
    %272 = vmatpush1.msra.mxu0 0.0
    %273 = vmatprep.subr.mxu0 0.0
    %274 = vmatpush1.msra.mxu0 0.0
    %275 = vmatprep.subr.mxu0 0.0
    %276 = vmatpush1.msra.mxu0 0.0
    %277 = vmatprep.subr.mxu0 0.0
    %278 = vmatpush1.msra.mxu0 0.0
    %279 = vmatprep.subr.mxu0 0.0
    %280 = vmatpush1.msra.mxu0 0.0
    %281 = vmatprep.subr.mxu0 0.0
    %282 = vmatpush1.msra.mxu0 0.0
    %283 = vmatprep.subr.mxu0 0.0
    %284 = vmatpush1.msra.mxu0 0.0
    %285 = vmatprep.subr.mxu0 0.0
    %286 = vmatpush1.msra.mxu0 0.0
    %287 = vmatprep.subr.mxu0 0.0
    %288 = vmatpush1.msra.mxu0 0.0
    %289 = vmatprep.subr.mxu0 0.0
    %290 = vmatpush1.msra.mxu0 0.0
    %291 = vmatprep.subr.mxu0 0.0
    %292 = vmatpush1.msra.mxu0 0.0
    %293 = vmatprep.subr.mxu0 0.0
    %294 = vmatpush1.msra.mxu0 0.0
    %295 = vmatprep.subr.mxu0 0.0
    %296 = vmatpush1.msra.mxu0 0.0
    %297 = vmatprep.subr.mxu0 0.0
    %298 = vmatpush1.msra.mxu0 0.0
    %299 = vmatprep.subr.mxu0 0.0
    %300 = vmatpush1.msra.mxu0 0.0
    %301 = vmatprep.subr.mxu0 0.0
    %302 = vmatpush1.msra.mxu0 0.0
    %303 = vmatprep.subr.mxu0 0.0
    %304 = vmatpush1.msra.mxu0 0.0
    %305 = vmatprep.subr.mxu0 0.0
    %306 = vmatpush1.msra.mxu0 0.0
    %307 = vmatprep.subr.mxu0 0.0
    %308 = vmatpush1.msra.mxu0 0.0
    %309 = vmatprep.subr.mxu0 0.0
    %310 = vmatpush1.msra.mxu0 0.0
    %311 = vmatprep.subr.mxu0 0.0
    %312 = vmatpush1.msra.mxu0 0.0
    %313 = vmatprep.subr.mxu0 0.0
    %314 = vmatpush1.msra.mxu0 0.0
    %315 = vmatprep.mubr.f32.mxu0 0.0
    %316 = vmatmul.mubr.f32.gmra.mrb[0].mxu0 %v48
    %v317 = vpop.f32.mrb[0].mxu0
    %v318 = vadd.f32 %v246, %v317
    %v319 = vpop.f32.mrb[0].mxu0
    %320 = vmatprep.mubr.f32.mxu0 0.0
    %321 = vmatmul.mubr.f32.gmra.mrb[0].mxu0 %v51
    %v322 = vpop.f32.mrb[0].mxu0
    %v323 = vadd.f32 %v246, %v322
    %v324 = vpop.f32.mrb[0].mxu0
    %325 = vmatprep.mubr.f32.mxu0 0.0
    %326 = vmatmul.mubr.f32.gmra.mrb[0].mxu0 %v54
    %v327 = vpop.f32.mrb[0].mxu0
    %v328 = vadd.f32 %v246, %v327
    %v329 = vpop.f32.mrb[0].mxu0
    %330 = vmatprep.mubr.f32.mxu0 0.0
    %331 = vmatmul.mubr.f32.gmra.mrb[0].mxu0 %v57
    %v332 = vpop.f32.mrb[0].mxu0
    %v333 = vadd.f32 %v246, %v332
    %v334 = vpop.f32.mrb[0].mxu0
    %335 = vdwg.mxu0
    %vm336 = vcmask 261120
    %v338 = vsel %vm336, %v130, 0
    %v341 = vsel %vm336, %v135, 0
    %v344 = vsel %vm336, %v224, 0
    %v347 = vsel %vm336, %v229, 0
    %349 = vmatprep.subr.mxu0 0.0
    %350 = vmatpush1.xpose.msra.mxu0 %v344
    %351 = vmatprep.subr.mxu0 0.0
    %352 = vmatpush1.xpose.msra.mxu0 %v347
    %353 = vmatprep.subr.mxu0 0.0
    %354 = vmatpush1.xpose.msra.mxu0 0.0
    %355 = vmatprep.subr.mxu0 0.0
    %356 = vmatpush1.xpose.msra.mxu0 0.0
    %357 = vmatprep.subr.mxu0 0.0
    %358 = vmatpush1.xpose.msra.mxu0 0.0
    %359 = vmatprep.subr.mxu0 0.0
    %360 = vmatpush1.xpose.msra.mxu0 0.0
    %361 = vmatprep.subr.mxu0 0.0
    %362 = vmatpush1.xpose.msra.mxu0 0.0
    %363 = vmatprep.subr.mxu0 0.0
    %364 = vmatpush1.xpose.msra.mxu0 0.0
    %365 = vmatprep.subr.mxu0 0.0
    %366 = vmatpush1.xpose.msra.mxu0 0.0
    %367 = vmatprep.subr.mxu0 0.0
    %368 = vmatpush1.xpose.msra.mxu0 0.0
    %369 = vmatprep.subr.mxu0 0.0
    %370 = vmatpush1.xpose.msra.mxu0 0.0
    %371 = vmatprep.subr.mxu0 0.0
    %372 = vmatpush1.xpose.msra.mxu0 0.0
    %373 = vmatprep.subr.mxu0 0.0
    %374 = vmatpush1.xpose.msra.mxu0 0.0
    %375 = vmatprep.subr.mxu0 0.0
    %376 = vmatpush1.xpose.msra.mxu0 0.0
    %377 = vmatprep.subr.mxu0 0.0
    %378 = vmatpush1.xpose.msra.mxu0 0.0
    %379 = vmatprep.subr.mxu0 0.0
    %380 = vmatpush1.xpose.msra.mxu0 0.0
    %381 = vmatprep.subr.mxu0 0.0
    %382 = vmatpush1.xpose.msra.mxu0 0.0
    %383 = vmatprep.subr.mxu0 0.0
    %384 = vmatpush1.xpose.msra.mxu0 0.0
    %385 = vmatprep.subr.mxu0 0.0
    %386 = vmatpush1.xpose.msra.mxu0 0.0
    %387 = vmatprep.subr.mxu0 0.0
    %388 = vmatpush1.xpose.msra.mxu0 0.0
    %389 = vmatprep.subr.mxu0 0.0
    %390 = vmatpush1.xpose.msra.mxu0 0.0
    %391 = vmatprep.subr.mxu0 0.0
    %392 = vmatpush1.xpose.msra.mxu0 0.0
    %393 = vmatprep.subr.mxu0 0.0
    %394 = vmatpush1.xpose.msra.mxu0 0.0
    %395 = vmatprep.subr.mxu0 0.0
    %396 = vmatpush1.xpose.msra.mxu0 0.0
    %397 = vmatprep.subr.mxu0 0.0
    %398 = vmatpush1.xpose.msra.mxu0 0.0
    %399 = vmatprep.subr.mxu0 0.0
    %400 = vmatpush1.xpose.msra.mxu0 0.0
    %401 = vmatprep.subr.mxu0 0.0
    %402 = vmatpush1.xpose.msra.mxu0 0.0
    %403 = vmatprep.subr.mxu0 0.0
    %404 = vmatpush1.xpose.msra.mxu0 0.0
    %405 = vmatprep.subr.mxu0 0.0
    %406 = vmatpush1.xpose.msra.mxu0 0.0
    %407 = vmatprep.subr.mxu0 0.0
    %408 = vmatpush1.xpose.msra.mxu0 0.0
    %409 = vmatprep.subr.mxu0 0.0
    %410 = vmatpush1.xpose.msra.mxu0 0.0
    %411 = vmatprep.subr.mxu0 0.0
    %412 = vmatpush1.xpose.msra.mxu0 0.0
    %413 = vmatprep.mubr.f32.mxu0 0.0
    %414 = vmatmul.mubr.f32.gmra.mrb[0].mxu0 %v338
    %v415 = vpop.f32.mrb[0].mxu0
    %v416 = vadd.f32 0.0, %v415
    %v417 = vpop.f32.mrb[0].mxu0
    %418 = vmatprep.mubr.f32.mxu0 0.0
    %419 = vmatmul.mubr.f32.gmra.mrb[0].mxu0 %v341
    %v420 = vpop.f32.mrb[0].mxu0
    %v421 = vadd.f32 0.0, %v420
    %v422 = vpop.f32.mrb[0].mxu0
    %423 = vdwg.mxu0
    %v425 = vsel %vm336, %v140, 0
    %v428 = vsel %vm336, %v145, 0
    %v431 = vsel %vm336, %v234, 0
    %v434 = vsel %vm336, %v239, 0
    %436 = vmatprep.subr.mxu0 0.0
    %437 = vmatpush1.xpose.msra.mxu0 %v431
    %438 = vmatprep.subr.mxu0 0.0
    %439 = vmatpush1.xpose.msra.mxu0 %v434
    %440 = vmatprep.subr.mxu0 0.0
    %441 = vmatpush1.xpose.msra.mxu0 0.0
    %442 = vmatprep.subr.mxu0 0.0
    %443 = vmatpush1.xpose.msra.mxu0 0.0
    %444 = vmatprep.subr.mxu0 0.0
    %445 = vmatpush1.xpose.msra.mxu0 0.0
    %446 = vmatprep.subr.mxu0 0.0
    %447 = vmatpush1.xpose.msra.mxu0 0.0
    %448 = vmatprep.subr.mxu0 0.0
    %449 = vmatpush1.xpose.msra.mxu0 0.0
    %450 = vmatprep.subr.mxu0 0.0
    %451 = vmatpush1.xpose.msra.mxu0 0.0
    %452 = vmatprep.subr.mxu0 0.0
    %453 = vmatpush1.xpose.msra.mxu0 0.0
    %454 = vmatprep.subr.mxu0 0.0
    %455 = vmatpush1.xpose.msra.mxu0 0.0
    %456 = vmatprep.subr.mxu0 0.0
    %457 = vmatpush1.xpose.msra.mxu0 0.0
    %458 = vmatprep.subr.mxu0 0.0
    %459 = vmatpush1.xpose.msra.mxu0 0.0
    %460 = vmatprep.subr.mxu0 0.0
    %461 = vmatpush1.xpose.msra.mxu0 0.0
    %462 = vmatprep.subr.mxu0 0.0
    %463 = vmatpush1.xpose.msra.mxu0 0.0
    %464 = vmatprep.subr.mxu0 0.0
    %465 = vmatpush1.xpose.msra.mxu0 0.0
    %466 = vmatprep.subr.mxu0 0.0
    %467 = vmatpush1.xpose.msra.mxu0 0.0
    %468 = vmatprep.subr.mxu0 0.0
    %469 = vmatpush1.xpose.msra.mxu0 0.0
    %470 = vmatprep.subr.mxu0 0.0
    %471 = vmatpush1.xpose.msra.mxu0 0.0
    %472 = vmatprep.subr.mxu0 0.0
    %473 = vmatpush1.xpose.msra.mxu0 0.0
    %474 = vmatprep.subr.mxu0 0.0
    %475 = vmatpush1.xpose.msra.mxu0 0.0
    %476 = vmatprep.subr.mxu0 0.0
    %477 = vmatpush1.xpose.msra.mxu0 0.0
    %478 = vmatprep.subr.mxu0 0.0
    %479 = vmatpush1.xpose.msra.mxu0 0.0
    %480 = vmatprep.subr.mxu0 0.0
    %481 = vmatpush1.xpose.msra.mxu0 0.0
    %482 = vmatprep.subr.mxu0 0.0
    %483 = vmatpush1.xpose.msra.mxu0 0.0
    %484 = vmatprep.subr.mxu0 0.0
    %485 = vmatpush1.xpose.msra.mxu0 0.0
    %486 = vmatprep.subr.mxu0 0.0
    %487 = vmatpush1.xpose.msra.mxu0 0.0
    %488 = vmatprep.subr.mxu0 0.0
    %489 = vmatpush1.xpose.msra.mxu0 0.0
    %490 = vmatprep.subr.mxu0 0.0
    %491 = vmatpush1.xpose.msra.mxu0 0.0
    %492 = vmatprep.subr.mxu0 0.0
    %493 = vmatpush1.xpose.msra.mxu0 0.0
    %494 = vmatprep.subr.mxu0 0.0
    %495 = vmatpush1.xpose.msra.mxu0 0.0
    %496 = vmatprep.subr.mxu0 0.0
    %497 = vmatpush1.xpose.msra.mxu0 0.0
    %498 = vmatprep.subr.mxu0 0.0
    %499 = vmatpush1.xpose.msra.mxu0 0.0
    %500 = vmatprep.mubr.f32.mxu0 0.0
    %501 = vmatmul.mubr.f32.gmra.mrb[0].mxu0 %v425
    %v502 = vpop.f32.mrb[0].mxu0
    %v503 = vadd.f32 0.0, %v502
    %v504 = vpop.f32.mrb[0].mxu0
    %505 = vmatprep.mubr.f32.mxu0 0.0
    %506 = vmatmul.mubr.f32.gmra.mrb[0].mxu0 %v428
    %v507 = vpop.f32.mrb[0].mxu0
    %v508 = vadd.f32 0.0, %v507
    %v509 = vpop.f32.mrb[0].mxu0
    %510 = vdwg.mxu0
    %v511 = vmul.f32 %v416, 0.17677669
    %v512 = vmul.f32 %v421, 0.17677669
    %v513 = vmul.f32 %v503, 0.17677669
    %v514 = vmul.f32 %v508, 0.17677669
    %vm515 = vcmask 130048
    %v516 = vsel %vm515, %v511, -inf
    %517 = vmax.xlane.f32.xlu0 %v516
    %v518 = vpop.xlane.xlu0 %517
    %v519 = vsel %vm515, %v512, -inf
    %520 = vmax.xlane.f32.xlu0 %v519
    %v521 = vpop.xlane.xlu0 %520
    %v522 = vsel %vm515, %v513, -inf
    %523 = vmax.xlane.f32.xlu0 %v522
    %v524 = vpop.xlane.xlu0 %523
    %v525 = vsel %vm515, %v514, -inf
    %526 = vmax.xlane.f32.xlu0 %v525
    %v527 = vpop.xlane.xlu0 %526
    %v528 = vsub.f32 %v511, %v518
    %v529 = vsub.f32 %v512, %v521
    %v530 = vsub.f32 %v513, %v524
    %v531 = vsub.f32 %v514, %v527
    %v532 = vmul.f32 %v528, 1.442695
    %v533 = vpow.pop %v532
    %v534 = vmul.f32 %v529, 1.442695
    %v535 = vpow.pop %v534
    %v536 = vmul.f32 %v530, 1.442695
    %v537 = vpow.pop %v536
    %v538 = vmul.f32 %v531, 1.442695
    %v539 = vpow.pop %v538
    %v540 = vsel %vm515, %v533, 0.0
    %541 = vadd.xlane.f32.xlu0 %v540
    %v542 = vpop.xlane.xlu0 %541
    %v543 = vsel %vm515, %v535, 0.0
    %544 = vadd.xlane.f32.xlu0 %v543
    %v545 = vpop.xlane.xlu0 %544
    %v546 = vsel %vm515, %v537, 0.0
    %547 = vadd.xlane.f32.xlu0 %v546
    %v548 = vpop.xlane.xlu0 %547
    %v549 = vsel %vm515, %v539, 0.0
    %550 = vadd.xlane.f32.xlu0 %v549
    %v551 = vpop.xlane.xlu0 %550
    %v552 = vrcp.pop %v542
    %v553 = vrcp.pop %v545
    %v554 = vrcp.pop %v548
    %v555 = vrcp.pop %v551
    %v556 = vmul.f32 %v533, %v552
    %v557 = vmul.f32 %v535, %v553
    %v558 = vmul.f32 %v537, %v554
    %v559 = vmul.f32 %v539, %v555
    %v560 = vsel %vm515, %v556, 0.0
    %v561 = vsel %vm515, %v557, 0.0
    %v562 = vadd.f32 %v560, %v561
    %v563 = vrot.slane %v562, 4
    %v564 = vadd.f32 %v562, %v563
    %v565 = vrot.slane %v564, 2
    %v566 = vadd.f32 %v564, %v565
    %v567 = vrot.slane %v566, 1
    %v568 = vadd.f32 %v566, %v567
    %v569 = vsel %vm515, %v558, 0.0
    %v570 = vsel %vm515, %v559, 0.0
    %v571 = vadd.f32 %v569, %v570
    %v572 = vrot.slane %v571, 4
    %v573 = vadd.f32 %v571, %v572
    %v574 = vrot.slane %v573, 2
    %v575 = vadd.f32 %v573, %v574
    %v576 = vrot.slane %v575, 1
    %v577 = vadd.f32 %v575, %v576
    %v578 = vrcp.pop 16.0
    %v579 = vmul.f32 %v568, %v578
    %v580 = vmul.f32 %v577, %v578
    %v582 = vsel %vm515, %v579, 0
    %584 = vmatprep.subr.mxu0 0.0
    %585 = vmatpush1.msra.mxu0 %v318
    %586 = vmatprep.subr.mxu0 0.0
    %587 = vmatpush1.msra.mxu0 %v323
    %588 = vmatprep.subr.mxu0 0.0
    %589 = vmatpush1.msra.mxu0 0.0
    %590 = vmatprep.subr.mxu0 0.0
    %591 = vmatpush1.msra.mxu0 0.0
    %592 = vmatprep.subr.mxu0 0.0
    %593 = vmatpush1.msra.mxu0 0.0
    %594 = vmatprep.subr.mxu0 0.0
    %595 = vmatpush1.msra.mxu0 0.0
    %596 = vmatprep.subr.mxu0 0.0
    %597 = vmatpush1.msra.mxu0 0.0
    %598 = vmatprep.subr.mxu0 0.0
    %599 = vmatpush1.msra.mxu0 0.0
    %600 = vmatprep.subr.mxu0 0.0
    %601 = vmatpush1.msra.mxu0 0.0
    %602 = vmatprep.subr.mxu0 0.0
    %603 = vmatpush1.msra.mxu0 0.0
    %604 = vmatprep.subr.mxu0 0.0
    %605 = vmatpush1.msra.mxu0 0.0
    %606 = vmatprep.subr.mxu0 0.0
    %607 = vmatpush1.msra.mxu0 0.0
    %608 = vmatprep.subr.mxu0 0.0
    %609 = vmatpush1.msra.mxu0 0.0
    %610 = vmatprep.subr.mxu0 0.0
    %611 = vmatpush1.msra.mxu0 0.0
    %612 = vmatprep.subr.mxu0 0.0
    %613 = vmatpush1.msra.mxu0 0.0
    %614 = vmatprep.subr.mxu0 0.0
    %615 = vmatpush1.msra.mxu0 0.0
    %616 = vmatprep.subr.mxu0 0.0
    %617 = vmatpush1.msra.mxu0 0.0
    %618 = vmatprep.subr.mxu0 0.0
    %619 = vmatpush1.msra.mxu0 0.0
    %620 = vmatprep.subr.mxu0 0.0
    %621 = vmatpush1.msra.mxu0 0.0
    %622 = vmatprep.subr.mxu0 0.0
    %623 = vmatpush1.msra.mxu0 0.0
    %624 = vmatprep.subr.mxu0 0.0
    %625 = vmatpush1.msra.mxu0 0.0
    %626 = vmatprep.subr.mxu0 0.0
    %627 = vmatpush1.msra.mxu0 0.0
    %628 = vmatprep.subr.mxu0 0.0
    %629 = vmatpush1.msra.mxu0 0.0
    %630 = vmatprep.subr.mxu0 0.0
    %631 = vmatpush1.msra.mxu0 0.0
    %632 = vmatprep.subr.mxu0 0.0
    %633 = vmatpush1.msra.mxu0 0.0
    %634 = vmatprep.subr.mxu0 0.0
    %635 = vmatpush1.msra.mxu0 0.0
    %636 = vmatprep.subr.mxu0 0.0
    %637 = vmatpush1.msra.mxu0 0.0
    %638 = vmatprep.subr.mxu0 0.0
    %639 = vmatpush1.msra.mxu0 0.0
    %640 = vmatprep.subr.mxu0 0.0
    %641 = vmatpush1.msra.mxu0 0.0
    %642 = vmatprep.subr.mxu0 0.0
    %643 = vmatpush1.msra.mxu0 0.0
    %644 = vmatprep.subr.mxu0 0.0
    %645 = vmatpush1.msra.mxu0 0.0
    %646 = vmatprep.subr.mxu0 0.0
    %647 = vmatpush1.msra.mxu0 0.0
    %648 = vmatprep.mubr.f32.mxu0 0.0
    %649 = vmatmul.mubr.f32.gmra.mrb[0].mxu0 %v582
    %v650 = vpop.f32.mrb[0].mxu0
    %v651 = vadd.f32 0.0, %v650
    %v652 = vpop.f32.mrb[0].mxu0
    %653 = vdwg.mxu0
    %v655 = vsel %vm515, %v580, 0
    %657 = vmatprep.subr.mxu0 0.0
    %658 = vmatpush1.msra.mxu0 %v328
    %659 = vmatprep.subr.mxu0 0.0
    %660 = vmatpush1.msra.mxu0 %v333
    %661 = vmatprep.subr.mxu0 0.0
    %662 = vmatpush1.msra.mxu0 0.0
    %663 = vmatprep.subr.mxu0 0.0
    %664 = vmatpush1.msra.mxu0 0.0
    %665 = vmatprep.subr.mxu0 0.0
    %666 = vmatpush1.msra.mxu0 0.0
    %667 = vmatprep.subr.mxu0 0.0
    %668 = vmatpush1.msra.mxu0 0.0
    %669 = vmatprep.subr.mxu0 0.0
    %670 = vmatpush1.msra.mxu0 0.0
    %671 = vmatprep.subr.mxu0 0.0
    %672 = vmatpush1.msra.mxu0 0.0
    %673 = vmatprep.subr.mxu0 0.0
    %674 = vmatpush1.msra.mxu0 0.0
    %675 = vmatprep.subr.mxu0 0.0
    %676 = vmatpush1.msra.mxu0 0.0
    %677 = vmatprep.subr.mxu0 0.0
    %678 = vmatpush1.msra.mxu0 0.0
    %679 = vmatprep.subr.mxu0 0.0
    %680 = vmatpush1.msra.mxu0 0.0
    %681 = vmatprep.subr.mxu0 0.0
    %682 = vmatpush1.msra.mxu0 0.0
    %683 = vmatprep.subr.mxu0 0.0
    %684 = vmatpush1.msra.mxu0 0.0
    %685 = vmatprep.subr.mxu0 0.0
    %686 = vmatpush1.msra.mxu0 0.0
    %687 = vmatprep.subr.mxu0 0.0
    %688 = vmatpush1.msra.mxu0 0.0
    %689 = vmatprep.subr.mxu0 0.0
    %690 = vmatpush1.msra.mxu0 0.0
    %691 = vmatprep.subr.mxu0 0.0
    %692 = vmatpush1.msra.mxu0 0.0
    %693 = vmatprep.subr.mxu0 0.0
    %694 = vmatpush1.msra.mxu0 0.0
    %695 = vmatprep.subr.mxu0 0.0
    %696 = vmatpush1.msra.mxu0 0.0
    %697 = vmatprep.subr.mxu0 0.0
    %698 = vmatpush1.msra.mxu0 0.0
    %699 = vmatprep.subr.mxu0 0.0
    %700 = vmatpush1.msra.mxu0 0.0
    %701 = vmatprep.subr.mxu0 0.0
    %702 = vmatpush1.msra.mxu0 0.0
    %703 = vmatprep.subr.mxu0 0.0
    %704 = vmatpush1.msra.mxu0 0.0
    %705 = vmatprep.subr.mxu0 0.0
    %706 = vmatpush1.msra.mxu0 0.0
    %707 = vmatprep.subr.mxu0 0.0
    %708 = vmatpush1.msra.mxu0 0.0
    %709 = vmatprep.subr.mxu0 0.0
    %710 = vmatpush1.msra.mxu0 0.0
    %711 = vmatprep.subr.mxu0 0.0
    %712 = vmatpush1.msra.mxu0 0.0
    %713 = vmatprep.subr.mxu0 0.0
    %714 = vmatpush1.msra.mxu0 0.0
    %715 = vmatprep.subr.mxu0 0.0
    %716 = vmatpush1.msra.mxu0 0.0
    %717 = vmatprep.subr.mxu0 0.0
    %718 = vmatpush1.msra.mxu0 0.0
    %719 = vmatprep.subr.mxu0 0.0
    %720 = vmatpush1.msra.mxu0 0.0
    %721 = vmatprep.mubr.f32.mxu0 0.0
    %722 = vmatmul.mubr.f32.gmra.mrb[0].mxu0 %v655
    %v723 = vpop.f32.mrb[0].mxu0
    %v724 = vadd.f32 0.0, %v723
    %v725 = vpop.f32.mrb[0].mxu0
    %726 = vdwg.mxu0
    %727 = vrot.lane.b32.xlu0 %v130, 96
    %v728 = vpop.permute.xlu0 %727
    %729 = vrot.lane.b32.xlu0 %v135, 96
    %v730 = vpop.permute.xlu0 %729
    %731 = vrot.lane.b32.xlu0 %v224, 96
    %v732 = vpop.permute.xlu0 %731
    %733 = vrot.lane.b32.xlu0 %v229, 96
    %v734 = vpop.permute.xlu0 %733
    %v735 = vsel %vm336, %v728, 0
    %v737 = vsel %vm336, %v730, 0
    %v739 = vsel %vm336, %v732, 0
    %v741 = vsel %vm336, %v734, 0
    %743 = vmatprep.subr.mxu0 0.0
    %744 = vmatpush1.xpose.msra.mxu0 %v739
    %745 = vmatprep.subr.mxu0 0.0
    %746 = vmatpush1.xpose.msra.mxu0 %v741
    %747 = vmatprep.subr.mxu0 0.0
    %748 = vmatpush1.xpose.msra.mxu0 0.0
    %749 = vmatprep.subr.mxu0 0.0
    %750 = vmatpush1.xpose.msra.mxu0 0.0
    %751 = vmatprep.subr.mxu0 0.0
    %752 = vmatpush1.xpose.msra.mxu0 0.0
    %753 = vmatprep.subr.mxu0 0.0
    %754 = vmatpush1.xpose.msra.mxu0 0.0
    %755 = vmatprep.subr.mxu0 0.0
    %756 = vmatpush1.xpose.msra.mxu0 0.0
    %757 = vmatprep.subr.mxu0 0.0
    %758 = vmatpush1.xpose.msra.mxu0 0.0
    %759 = vmatprep.subr.mxu0 0.0
    %760 = vmatpush1.xpose.msra.mxu0 0.0
    %761 = vmatprep.subr.mxu0 0.0
    %762 = vmatpush1.xpose.msra.mxu0 0.0
    %763 = vmatprep.subr.mxu0 0.0
    %764 = vmatpush1.xpose.msra.mxu0 0.0
    %765 = vmatprep.subr.mxu0 0.0
    %766 = vmatpush1.xpose.msra.mxu0 0.0
    %767 = vmatprep.subr.mxu0 0.0
    %768 = vmatpush1.xpose.msra.mxu0 0.0
    %769 = vmatprep.subr.mxu0 0.0
    %770 = vmatpush1.xpose.msra.mxu0 0.0
    %771 = vmatprep.subr.mxu0 0.0
    %772 = vmatpush1.xpose.msra.mxu0 0.0
    %773 = vmatprep.subr.mxu0 0.0
    %774 = vmatpush1.xpose.msra.mxu0 0.0
    %775 = vmatprep.subr.mxu0 0.0
    %776 = vmatpush1.xpose.msra.mxu0 0.0
    %777 = vmatprep.subr.mxu0 0.0
    %778 = vmatpush1.xpose.msra.mxu0 0.0
    %779 = vmatprep.subr.mxu0 0.0
    %780 = vmatpush1.xpose.msra.mxu0 0.0
    %781 = vmatprep.subr.mxu0 0.0
    %782 = vmatpush1.xpose.msra.mxu0 0.0
    %783 = vmatprep.subr.mxu0 0.0
    %784 = vmatpush1.xpose.msra.mxu0 0.0
    %785 = vmatprep.subr.mxu0 0.0
    %786 = vmatpush1.xpose.msra.mxu0 0.0
    %787 = vmatprep.subr.mxu0 0.0
    %788 = vmatpush1.xpose.msra.mxu0 0.0
    %789 = vmatprep.subr.mxu0 0.0
    %790 = vmatpush1.xpose.msra.mxu0 0.0
    %791 = vmatprep.subr.mxu0 0.0
    %792 = vmatpush1.xpose.msra.mxu0 0.0
    %793 = vmatprep.subr.mxu0 0.0
    %794 = vmatpush1.xpose.msra.mxu0 0.0
    %795 = vmatprep.subr.mxu0 0.0
    %796 = vmatpush1.xpose.msra.mxu0 0.0
    %797 = vmatprep.subr.mxu0 0.0
    %798 = vmatpush1.xpose.msra.mxu0 0.0
    %799 = vmatprep.subr.mxu0 0.0
    %800 = vmatpush1.xpose.msra.mxu0 0.0
    %801 = vmatprep.subr.mxu0 0.0
    %802 = vmatpush1.xpose.msra.mxu0 0.0
    %803 = vmatprep.subr.mxu0 0.0
    %804 = vmatpush1.xpose.msra.mxu0 0.0
    %805 = vmatprep.subr.mxu0 0.0
    %806 = vmatpush1.xpose.msra.mxu0 0.0
    %807 = vmatprep.mubr.f32.mxu0 0.0
    %808 = vmatmul.mubr.f32.gmra.mrb[0].mxu0 %v735
    %v809 = vpop.f32.mrb[0].mxu0
    %v810 = vadd.f32 0.0, %v809
    %v811 = vpop.f32.mrb[0].mxu0
    %812 = vmatprep.mubr.f32.mxu0 0.0
    %813 = vmatmul.mubr.f32.gmra.mrb[0].mxu0 %v737
    %v814 = vpop.f32.mrb[0].mxu0
    %v815 = vadd.f32 0.0, %v814
    %v816 = vpop.f32.mrb[0].mxu0
    %817 = vdwg.mxu0
    %818 = vrot.lane.b32.xlu0 %v140, 96
    %v819 = vpop.permute.xlu0 %818
    %820 = vrot.lane.b32.xlu0 %v145, 96
    %v821 = vpop.permute.xlu0 %820
    %822 = vrot.lane.b32.xlu0 %v234, 96
    %v823 = vpop.permute.xlu0 %822
    %824 = vrot.lane.b32.xlu0 %v239, 96
    %v825 = vpop.permute.xlu0 %824
    %v826 = vsel %vm336, %v819, 0
    %v828 = vsel %vm336, %v821, 0
    %v830 = vsel %vm336, %v823, 0
    %v832 = vsel %vm336, %v825, 0
    %834 = vmatprep.subr.mxu0 0.0
    %835 = vmatpush1.xpose.msra.mxu0 %v830
    %836 = vmatprep.subr.mxu0 0.0
    %837 = vmatpush1.xpose.msra.mxu0 %v832
    %838 = vmatprep.subr.mxu0 0.0
    %839 = vmatpush1.xpose.msra.mxu0 0.0
    %840 = vmatprep.subr.mxu0 0.0
    %841 = vmatpush1.xpose.msra.mxu0 0.0
    %842 = vmatprep.subr.mxu0 0.0
    %843 = vmatpush1.xpose.msra.mxu0 0.0
    %844 = vmatprep.subr.mxu0 0.0
    %845 = vmatpush1.xpose.msra.mxu0 0.0
    %846 = vmatprep.subr.mxu0 0.0
    %847 = vmatpush1.xpose.msra.mxu0 0.0
    %848 = vmatprep.subr.mxu0 0.0
    %849 = vmatpush1.xpose.msra.mxu0 0.0
    %850 = vmatprep.subr.mxu0 0.0
    %851 = vmatpush1.xpose.msra.mxu0 0.0
    %852 = vmatprep.subr.mxu0 0.0
    %853 = vmatpush1.xpose.msra.mxu0 0.0
    %854 = vmatprep.subr.mxu0 0.0
    %855 = vmatpush1.xpose.msra.mxu0 0.0
    %856 = vmatprep.subr.mxu0 0.0
    %857 = vmatpush1.xpose.msra.mxu0 0.0
    %858 = vmatprep.subr.mxu0 0.0
    %859 = vmatpush1.xpose.msra.mxu0 0.0
    %860 = vmatprep.subr.mxu0 0.0
    %861 = vmatpush1.xpose.msra.mxu0 0.0
    %862 = vmatprep.subr.mxu0 0.0
    %863 = vmatpush1.xpose.msra.mxu0 0.0
    %864 = vmatprep.subr.mxu0 0.0
    %865 = vmatpush1.xpose.msra.mxu0 0.0
    %866 = vmatprep.subr.mxu0 0.0
    %867 = vmatpush1.xpose.msra.mxu0 0.0
    %868 = vmatprep.subr.mxu0 0.0
    %869 = vmatpush1.xpose.msra.mxu0 0.0
    %870 = vmatprep.subr.mxu0 0.0
    %871 = vmatpush1.xpose.msra.mxu0 0.0
    %872 = vmatprep.subr.mxu0 0.0
    %873 = vmatpush1.xpose.msra.mxu0 0.0
    %874 = vmatprep.subr.mxu0 0.0
    %875 = vmatpush1.xpose.msra.mxu0 0.0
    %876 = vmatprep.subr.mxu0 0.0
    %877 = vmatpush1.xpose.msra.mxu0 0.0
    %878 = vmatprep.subr.mxu0 0.0
    %879 = vmatpush1.xpose.msra.mxu0 0.0
    %880 = vmatprep.subr.mxu0 0.0
    %881 = vmatpush1.xpose.msra.mxu0 0.0
    %882 = vmatprep.subr.mxu0 0.0
    %883 = vmatpush1.xpose.msra.mxu0 0.0
    %884 = vmatprep.subr.mxu0 0.0
    %885 = vmatpush1.xpose.msra.mxu0 0.0
    %886 = vmatprep.subr.mxu0 0.0
    %887 = vmatpush1.xpose.msra.mxu0 0.0
    %888 = vmatprep.subr.mxu0 0.0
    %889 = vmatpush1.xpose.msra.mxu0 0.0
    %890 = vmatprep.subr.mxu0 0.0
    %891 = vmatpush1.xpose.msra.mxu0 0.0
    %892 = vmatprep.subr.mxu0 0.0
    %893 = vmatpush1.xpose.msra.mxu0 0.0
    %894 = vmatprep.subr.mxu0 0.0
    %895 = vmatpush1.xpose.msra.mxu0 0.0
    %896 = vmatprep.subr.mxu0 0.0
    %897 = vmatpush1.xpose.msra.mxu0 0.0
    %898 = vmatprep.mubr.f32.mxu0 0.0
    %899 = vmatmul.mubr.f32.gmra.mrb[0].mxu0 %v826
    %v900 = vpop.f32.mrb[0].mxu0
    %v901 = vadd.f32 0.0, %v900
    %v902 = vpop.f32.mrb[0].mxu0
    %903 = vmatprep.mubr.f32.mxu0 0.0
    %904 = vmatmul.mubr.f32.gmra.mrb[0].mxu0 %v828
    %v905 = vpop.f32.mrb[0].mxu0
    %v906 = vadd.f32 0.0, %v905
    %v907 = vpop.f32.mrb[0].mxu0
    %908 = vdwg.mxu0
    %v909 = vmul.f32 %v810, 0.17677669
    %v910 = vmul.f32 %v815, 0.17677669
    %v911 = vmul.f32 %v901, 0.17677669
    %v912 = vmul.f32 %v906, 0.17677669
    %v913 = vsel %vm515, %v909, -inf
    %914 = vmax.xlane.f32.xlu0 %v913
    %v915 = vpop.xlane.xlu0 %914
    %v916 = vsel %vm515, %v910, -inf
    %917 = vmax.xlane.f32.xlu0 %v916
    %v918 = vpop.xlane.xlu0 %917
    %v919 = vsel %vm515, %v911, -inf
    %920 = vmax.xlane.f32.xlu0 %v919
    %v921 = vpop.xlane.xlu0 %920
    %v922 = vsel %vm515, %v912, -inf
    %923 = vmax.xlane.f32.xlu0 %v922
    %v924 = vpop.xlane.xlu0 %923
    %v925 = vsub.f32 %v909, %v915
    %v926 = vsub.f32 %v910, %v918
    %v927 = vsub.f32 %v911, %v921
    %v928 = vsub.f32 %v912, %v924
    %v929 = vmul.f32 %v925, 1.442695
    %v930 = vpow.pop %v929
    %v931 = vmul.f32 %v926, 1.442695
    %v932 = vpow.pop %v931
    %v933 = vmul.f32 %v927, 1.442695
    %v934 = vpow.pop %v933
    %v935 = vmul.f32 %v928, 1.442695
    %v936 = vpow.pop %v935
    %v937 = vsel %vm515, %v930, 0.0
    %938 = vadd.xlane.f32.xlu0 %v937
    %v939 = vpop.xlane.xlu0 %938
    %v940 = vsel %vm515, %v932, 0.0
    %941 = vadd.xlane.f32.xlu0 %v940
    %v942 = vpop.xlane.xlu0 %941
    %v943 = vsel %vm515, %v934, 0.0
    %944 = vadd.xlane.f32.xlu0 %v943
    %v945 = vpop.xlane.xlu0 %944
    %v946 = vsel %vm515, %v936, 0.0
    %947 = vadd.xlane.f32.xlu0 %v946
    %v948 = vpop.xlane.xlu0 %947
    %v949 = vrcp.pop %v939
    %v950 = vrcp.pop %v942
    %v951 = vrcp.pop %v945
    %v952 = vrcp.pop %v948
    %v953 = vmul.f32 %v930, %v949
    %v954 = vmul.f32 %v932, %v950
    %v955 = vmul.f32 %v934, %v951
    %v956 = vmul.f32 %v936, %v952
    %v957 = vsel %vm515, %v953, 0.0
    %v958 = vsel %vm515, %v954, 0.0
    %v959 = vadd.f32 %v957, %v958
    %v960 = vrot.slane %v959, 4
    %v961 = vadd.f32 %v959, %v960
    %v962 = vrot.slane %v961, 2
    %v963 = vadd.f32 %v961, %v962
    %v964 = vrot.slane %v963, 1
    %v965 = vadd.f32 %v963, %v964
    %v966 = vsel %vm515, %v955, 0.0
    %v967 = vsel %vm515, %v956, 0.0
    %v968 = vadd.f32 %v966, %v967
    %v969 = vrot.slane %v968, 4
    %v970 = vadd.f32 %v968, %v969
    %v971 = vrot.slane %v970, 2
    %v972 = vadd.f32 %v970, %v971
    %v973 = vrot.slane %v972, 1
    %v974 = vadd.f32 %v972, %v973
    %v975 = vmul.f32 %v965, %v578
    %v976 = vmul.f32 %v974, %v578
    %979 = vrot.lane.b32.xlu0 %v318, 96
    %v980 = vpop.permute.xlu0 %979
    %981 = vrot.lane.b32.xlu0 %v323, 96
    %v982 = vpop.permute.xlu0 %981
    %v986 = vsel %vm515, %v975, 0
    %988 = vmatprep.subr.mxu0 0.0
    %989 = vmatpush1.msra.mxu0 %v980
    %990 = vmatprep.subr.mxu0 0.0
    %991 = vmatpush1.msra.mxu0 %v982
    %992 = vmatprep.subr.mxu0 0.0
    %993 = vmatpush1.msra.mxu0 0.0
    %994 = vmatprep.subr.mxu0 0.0
    %995 = vmatpush1.msra.mxu0 0.0
    %996 = vmatprep.subr.mxu0 0.0
    %997 = vmatpush1.msra.mxu0 0.0
    %998 = vmatprep.subr.mxu0 0.0
    %999 = vmatpush1.msra.mxu0 0.0
    %1000 = vmatprep.subr.mxu0 0.0
    %1001 = vmatpush1.msra.mxu0 0.0
    %1002 = vmatprep.subr.mxu0 0.0
    %1003 = vmatpush1.msra.mxu0 0.0
    %1004 = vmatprep.subr.mxu0 0.0
    %1005 = vmatpush1.msra.mxu0 0.0
    %1006 = vmatprep.subr.mxu0 0.0
    %1007 = vmatpush1.msra.mxu0 0.0
    %1008 = vmatprep.subr.mxu0 0.0
    %1009 = vmatpush1.msra.mxu0 0.0
    %1010 = vmatprep.subr.mxu0 0.0
    %1011 = vmatpush1.msra.mxu0 0.0
    %1012 = vmatprep.subr.mxu0 0.0
    %1013 = vmatpush1.msra.mxu0 0.0
    %1014 = vmatprep.subr.mxu0 0.0
    %1015 = vmatpush1.msra.mxu0 0.0
    %1016 = vmatprep.subr.mxu0 0.0
    %1017 = vmatpush1.msra.mxu0 0.0
    %1018 = vmatprep.subr.mxu0 0.0
    %1019 = vmatpush1.msra.mxu0 0.0
    %1020 = vmatprep.subr.mxu0 0.0
    %1021 = vmatpush1.msra.mxu0 0.0
    %1022 = vmatprep.subr.mxu0 0.0
    %1023 = vmatpush1.msra.mxu0 0.0
    %1024 = vmatprep.subr.mxu0 0.0
    %1025 = vmatpush1.msra.mxu0 0.0
    %1026 = vmatprep.subr.mxu0 0.0
    %1027 = vmatpush1.msra.mxu0 0.0
    %1028 = vmatprep.subr.mxu0 0.0
    %1029 = vmatpush1.msra.mxu0 0.0
    %1030 = vmatprep.subr.mxu0 0.0
    %1031 = vmatpush1.msra.mxu0 0.0
    %1032 = vmatprep.subr.mxu0 0.0
    %1033 = vmatpush1.msra.mxu0 0.0
    %1034 = vmatprep.subr.mxu0 0.0
    %1035 = vmatpush1.msra.mxu0 0.0
    %1036 = vmatprep.subr.mxu0 0.0
    %1037 = vmatpush1.msra.mxu0 0.0
    %1038 = vmatprep.subr.mxu0 0.0
    %1039 = vmatpush1.msra.mxu0 0.0
    %1040 = vmatprep.subr.mxu0 0.0
    %1041 = vmatpush1.msra.mxu0 0.0
    %1042 = vmatprep.subr.mxu0 0.0
    %1043 = vmatpush1.msra.mxu0 0.0
    %1044 = vmatprep.subr.mxu0 0.0
    %1045 = vmatpush1.msra.mxu0 0.0
    %1046 = vmatprep.subr.mxu0 0.0
    %1047 = vmatpush1.msra.mxu0 0.0
    %1048 = vmatprep.subr.mxu0 0.0
    %1049 = vmatpush1.msra.mxu0 0.0
    %1050 = vmatprep.subr.mxu0 0.0
    %1051 = vmatpush1.msra.mxu0 0.0
    %1052 = vmatprep.mubr.f32.mxu0 0.0
    %1053 = vmatmul.mubr.f32.gmra.mrb[0].mxu0 %v986
    %v1054 = vpop.f32.mrb[0].mxu0
    %v1055 = vadd.f32 0.0, %v1054
    %v1056 = vpop.f32.mrb[0].mxu0
    %1057 = vdwg.mxu0
    %1060 = vrot.lane.b32.xlu0 %v328, 96
    %v1061 = vpop.permute.xlu0 %1060
    %1062 = vrot.lane.b32.xlu0 %v333, 96
    %v1063 = vpop.permute.xlu0 %1062
    %v1067 = vsel %vm515, %v976, 0
    %1069 = vmatprep.subr.mxu0 0.0
    %1070 = vmatpush1.msra.mxu0 %v1061
    %1071 = vmatprep.subr.mxu0 0.0
    %1072 = vmatpush1.msra.mxu0 %v1063
    %1073 = vmatprep.subr.mxu0 0.0
    %1074 = vmatpush1.msra.mxu0 0.0
    %1075 = vmatprep.subr.mxu0 0.0
    %1076 = vmatpush1.msra.mxu0 0.0
    %1077 = vmatprep.subr.mxu0 0.0
    %1078 = vmatpush1.msra.mxu0 0.0
    %1079 = vmatprep.subr.mxu0 0.0
    %1080 = vmatpush1.msra.mxu0 0.0
    %1081 = vmatprep.subr.mxu0 0.0
    %1082 = vmatpush1.msra.mxu0 0.0
    %1083 = vmatprep.subr.mxu0 0.0
    %1084 = vmatpush1.msra.mxu0 0.0
    %1085 = vmatprep.subr.mxu0 0.0
    %1086 = vmatpush1.msra.mxu0 0.0
    %1087 = vmatprep.subr.mxu0 0.0
    %1088 = vmatpush1.msra.mxu0 0.0
    %1089 = vmatprep.subr.mxu0 0.0
    %1090 = vmatpush1.msra.mxu0 0.0
    %1091 = vmatprep.subr.mxu0 0.0
    %1092 = vmatpush1.msra.mxu0 0.0
    %1093 = vmatprep.subr.mxu0 0.0
    %1094 = vmatpush1.msra.mxu0 0.0
    %1095 = vmatprep.subr.mxu0 0.0
    %1096 = vmatpush1.msra.mxu0 0.0
    %1097 = vmatprep.subr.mxu0 0.0
    %1098 = vmatpush1.msra.mxu0 0.0
    %1099 = vmatprep.subr.mxu0 0.0
    %1100 = vmatpush1.msra.mxu0 0.0
    %1101 = vmatprep.subr.mxu0 0.0
    %1102 = vmatpush1.msra.mxu0 0.0
    %1103 = vmatprep.subr.mxu0 0.0
    %1104 = vmatpush1.msra.mxu0 0.0
    %1105 = vmatprep.subr.mxu0 0.0
    %1106 = vmatpush1.msra.mxu0 0.0
    %1107 = vmatprep.subr.mxu0 0.0
    %1108 = vmatpush1.msra.mxu0 0.0
    %1109 = vmatprep.subr.mxu0 0.0
    %1110 = vmatpush1.msra.mxu0 0.0
    %1111 = vmatprep.subr.mxu0 0.0
    %1112 = vmatpush1.msra.mxu0 0.0
    %1113 = vmatprep.subr.mxu0 0.0
    %1114 = vmatpush1.msra.mxu0 0.0
    %1115 = vmatprep.subr.mxu0 0.0
    %1116 = vmatpush1.msra.mxu0 0.0
    %1117 = vmatprep.subr.mxu0 0.0
    %1118 = vmatpush1.msra.mxu0 0.0
    %1119 = vmatprep.subr.mxu0 0.0
    %1120 = vmatpush1.msra.mxu0 0.0
    %1121 = vmatprep.subr.mxu0 0.0
    %1122 = vmatpush1.msra.mxu0 0.0
    %1123 = vmatprep.subr.mxu0 0.0
    %1124 = vmatpush1.msra.mxu0 0.0
    %1125 = vmatprep.subr.mxu0 0.0
    %1126 = vmatpush1.msra.mxu0 0.0
    %1127 = vmatprep.subr.mxu0 0.0
    %1128 = vmatpush1.msra.mxu0 0.0
    %1129 = vmatprep.subr.mxu0 0.0
    %1130 = vmatpush1.msra.mxu0 0.0
    %1131 = vmatprep.subr.mxu0 0.0
    %1132 = vmatpush1.msra.mxu0 0.0
    %1133 = vmatprep.mubr.f32.mxu0 0.0
    %1134 = vmatmul.mubr.f32.gmra.mrb[0].mxu0 %v1067
    %v1135 = vpop.f32.mrb[0].mxu0
    %v1136 = vadd.f32 0.0, %v1135
    %v1137 = vpop.f32.mrb[0].mxu0
    %1138 = vdwg.mxu0
    %1139 = vrot.lane.b32.xlu0 %v130, 64
    %v1140 = vpop.permute.xlu0 %1139
    %1141 = vrot.lane.b32.xlu0 %v135, 64
    %v1142 = vpop.permute.xlu0 %1141
    %1143 = vrot.lane.b32.xlu0 %v224, 64
    %v1144 = vpop.permute.xlu0 %1143
    %1145 = vrot.lane.b32.xlu0 %v229, 64
    %v1146 = vpop.permute.xlu0 %1145
    %v1147 = vsel %vm336, %v1140, 0
    %v1149 = vsel %vm336, %v1142, 0
    %v1151 = vsel %vm336, %v1144, 0
    %v1153 = vsel %vm336, %v1146, 0
    %1155 = vmatprep.subr.mxu0 0.0
    %1156 = vmatpush1.xpose.msra.mxu0 %v1151
    %1157 = vmatprep.subr.mxu0 0.0
    %1158 = vmatpush1.xpose.msra.mxu0 %v1153
    %1159 = vmatprep.subr.mxu0 0.0
    %1160 = vmatpush1.xpose.msra.mxu0 0.0
    %1161 = vmatprep.subr.mxu0 0.0
    %1162 = vmatpush1.xpose.msra.mxu0 0.0
    %1163 = vmatprep.subr.mxu0 0.0
    %1164 = vmatpush1.xpose.msra.mxu0 0.0
    %1165 = vmatprep.subr.mxu0 0.0
    %1166 = vmatpush1.xpose.msra.mxu0 0.0
    %1167 = vmatprep.subr.mxu0 0.0
    %1168 = vmatpush1.xpose.msra.mxu0 0.0
    %1169 = vmatprep.subr.mxu0 0.0
    %1170 = vmatpush1.xpose.msra.mxu0 0.0
    %1171 = vmatprep.subr.mxu0 0.0
    %1172 = vmatpush1.xpose.msra.mxu0 0.0
    %1173 = vmatprep.subr.mxu0 0.0
    %1174 = vmatpush1.xpose.msra.mxu0 0.0
    %1175 = vmatprep.subr.mxu0 0.0
    %1176 = vmatpush1.xpose.msra.mxu0 0.0
    %1177 = vmatprep.subr.mxu0 0.0
    %1178 = vmatpush1.xpose.msra.mxu0 0.0
    %1179 = vmatprep.subr.mxu0 0.0
    %1180 = vmatpush1.xpose.msra.mxu0 0.0
    %1181 = vmatprep.subr.mxu0 0.0
    %1182 = vmatpush1.xpose.msra.mxu0 0.0
    %1183 = vmatprep.subr.mxu0 0.0
    %1184 = vmatpush1.xpose.msra.mxu0 0.0
    %1185 = vmatprep.subr.mxu0 0.0
    %1186 = vmatpush1.xpose.msra.mxu0 0.0
    %1187 = vmatprep.subr.mxu0 0.0
    %1188 = vmatpush1.xpose.msra.mxu0 0.0
    %1189 = vmatprep.subr.mxu0 0.0
    %1190 = vmatpush1.xpose.msra.mxu0 0.0
    %1191 = vmatprep.subr.mxu0 0.0
    %1192 = vmatpush1.xpose.msra.mxu0 0.0
    %1193 = vmatprep.subr.mxu0 0.0
    %1194 = vmatpush1.xpose.msra.mxu0 0.0
    %1195 = vmatprep.subr.mxu0 0.0
    %1196 = vmatpush1.xpose.msra.mxu0 0.0
    %1197 = vmatprep.subr.mxu0 0.0
    %1198 = vmatpush1.xpose.msra.mxu0 0.0
    %1199 = vmatprep.subr.mxu0 0.0
    %1200 = vmatpush1.xpose.msra.mxu0 0.0
    %1201 = vmatprep.subr.mxu0 0.0
    %1202 = vmatpush1.xpose.msra.mxu0 0.0
    %1203 = vmatprep.subr.mxu0 0.0
    %1204 = vmatpush1.xpose.msra.mxu0 0.0
    %1205 = vmatprep.subr.mxu0 0.0
    %1206 = vmatpush1.xpose.msra.mxu0 0.0
    %1207 = vmatprep.subr.mxu0 0.0
    %1208 = vmatpush1.xpose.msra.mxu0 0.0
    %1209 = vmatprep.subr.mxu0 0.0
    %1210 = vmatpush1.xpose.msra.mxu0 0.0
    %1211 = vmatprep.subr.mxu0 0.0
    %1212 = vmatpush1.xpose.msra.mxu0 0.0
    %1213 = vmatprep.subr.mxu0 0.0
    %1214 = vmatpush1.xpose.msra.mxu0 0.0
    %1215 = vmatprep.subr.mxu0 0.0
    %1216 = vmatpush1.xpose.msra.mxu0 0.0
    %1217 = vmatprep.subr.mxu0 0.0
    %1218 = vmatpush1.xpose.msra.mxu0 0.0
    %1219 = vmatprep.mubr.f32.mxu0 0.0
    %1220 = vmatmul.mubr.f32.gmra.mrb[0].mxu0 %v1147
    %v1221 = vpop.f32.mrb[0].mxu0
    %v1222 = vadd.f32 0.0, %v1221
    %v1223 = vpop.f32.mrb[0].mxu0
    %1224 = vmatprep.mubr.f32.mxu0 0.0
    %1225 = vmatmul.mubr.f32.gmra.mrb[0].mxu0 %v1149
    %v1226 = vpop.f32.mrb[0].mxu0
    %v1227 = vadd.f32 0.0, %v1226
    %v1228 = vpop.f32.mrb[0].mxu0
    %1229 = vdwg.mxu0
    %1230 = vrot.lane.b32.xlu0 %v140, 64
    %v1231 = vpop.permute.xlu0 %1230
    %1232 = vrot.lane.b32.xlu0 %v145, 64
    %v1233 = vpop.permute.xlu0 %1232
    %1234 = vrot.lane.b32.xlu0 %v234, 64
    %v1235 = vpop.permute.xlu0 %1234
    %1236 = vrot.lane.b32.xlu0 %v239, 64
    %v1237 = vpop.permute.xlu0 %1236
    %v1238 = vsel %vm336, %v1231, 0
    %v1240 = vsel %vm336, %v1233, 0
    %v1242 = vsel %vm336, %v1235, 0
    %v1244 = vsel %vm336, %v1237, 0
    %1246 = vmatprep.subr.mxu0 0.0
    %1247 = vmatpush1.xpose.msra.mxu0 %v1242
    %1248 = vmatprep.subr.mxu0 0.0
    %1249 = vmatpush1.xpose.msra.mxu0 %v1244
    %1250 = vmatprep.subr.mxu0 0.0
    %1251 = vmatpush1.xpose.msra.mxu0 0.0
    %1252 = vmatprep.subr.mxu0 0.0
    %1253 = vmatpush1.xpose.msra.mxu0 0.0
    %1254 = vmatprep.subr.mxu0 0.0
    %1255 = vmatpush1.xpose.msra.mxu0 0.0
    %1256 = vmatprep.subr.mxu0 0.0
    %1257 = vmatpush1.xpose.msra.mxu0 0.0
    %1258 = vmatprep.subr.mxu0 0.0
    %1259 = vmatpush1.xpose.msra.mxu0 0.0
    %1260 = vmatprep.subr.mxu0 0.0
    %1261 = vmatpush1.xpose.msra.mxu0 0.0
    %1262 = vmatprep.subr.mxu0 0.0
    %1263 = vmatpush1.xpose.msra.mxu0 0.0
    %1264 = vmatprep.subr.mxu0 0.0
    %1265 = vmatpush1.xpose.msra.mxu0 0.0
    %1266 = vmatprep.subr.mxu0 0.0
    %1267 = vmatpush1.xpose.msra.mxu0 0.0
    %1268 = vmatprep.subr.mxu0 0.0
    %1269 = vmatpush1.xpose.msra.mxu0 0.0
    %1270 = vmatprep.subr.mxu0 0.0
    %1271 = vmatpush1.xpose.msra.mxu0 0.0
    %1272 = vmatprep.subr.mxu0 0.0
    %1273 = vmatpush1.xpose.msra.mxu0 0.0
    %1274 = vmatprep.subr.mxu0 0.0
    %1275 = vmatpush1.xpose.msra.mxu0 0.0
    %1276 = vmatprep.subr.mxu0 0.0
    %1277 = vmatpush1.xpose.msra.mxu0 0.0
    %1278 = vmatprep.subr.mxu0 0.0
    %1279 = vmatpush1.xpose.msra.mxu0 0.0
    %1280 = vmatprep.subr.mxu0 0.0
    %1281 = vmatpush1.xpose.msra.mxu0 0.0
    %1282 = vmatprep.subr.mxu0 0.0
    %1283 = vmatpush1.xpose.msra.mxu0 0.0
    %1284 = vmatprep.subr.mxu0 0.0
    %1285 = vmatpush1.xpose.msra.mxu0 0.0
    %1286 = vmatprep.subr.mxu0 0.0
    %1287 = vmatpush1.xpose.msra.mxu0 0.0
    %1288 = vmatprep.subr.mxu0 0.0
    %1289 = vmatpush1.xpose.msra.mxu0 0.0
    %1290 = vmatprep.subr.mxu0 0.0
    %1291 = vmatpush1.xpose.msra.mxu0 0.0
    %1292 = vmatprep.subr.mxu0 0.0
    %1293 = vmatpush1.xpose.msra.mxu0 0.0
    %1294 = vmatprep.subr.mxu0 0.0
    %1295 = vmatpush1.xpose.msra.mxu0 0.0
    %1296 = vmatprep.subr.mxu0 0.0
    %1297 = vmatpush1.xpose.msra.mxu0 0.0
    %1298 = vmatprep.subr.mxu0 0.0
    %1299 = vmatpush1.xpose.msra.mxu0 0.0
    %1300 = vmatprep.subr.mxu0 0.0
    %1301 = vmatpush1.xpose.msra.mxu0 0.0
    %1302 = vmatprep.subr.mxu0 0.0
    %1303 = vmatpush1.xpose.msra.mxu0 0.0
    %1304 = vmatprep.subr.mxu0 0.0
    %1305 = vmatpush1.xpose.msra.mxu0 0.0
    %1306 = vmatprep.subr.mxu0 0.0
    %1307 = vmatpush1.xpose.msra.mxu0 0.0
    %1308 = vmatprep.subr.mxu0 0.0
    %1309 = vmatpush1.xpose.msra.mxu0 0.0
    %1310 = vmatprep.mubr.f32.mxu0 0.0
    %1311 = vmatmul.mubr.f32.gmra.mrb[0].mxu0 %v1238
    %v1312 = vpop.f32.mrb[0].mxu0
    %v1313 = vadd.f32 0.0, %v1312
    %v1314 = vpop.f32.mrb[0].mxu0
    %1315 = vmatprep.mubr.f32.mxu0 0.0
    %1316 = vmatmul.mubr.f32.gmra.mrb[0].mxu0 %v1240
    %v1317 = vpop.f32.mrb[0].mxu0
    %v1318 = vadd.f32 0.0, %v1317
    %v1319 = vpop.f32.mrb[0].mxu0
    %1320 = vdwg.mxu0
    %v1321 = vmul.f32 %v1222, 0.17677669
    %v1322 = vmul.f32 %v1227, 0.17677669
    %v1323 = vmul.f32 %v1313, 0.17677669
    %v1324 = vmul.f32 %v1318, 0.17677669
    %v1325 = vsel %vm515, %v1321, -inf
    %1326 = vmax.xlane.f32.xlu0 %v1325
    %v1327 = vpop.xlane.xlu0 %1326
    %v1328 = vsel %vm515, %v1322, -inf
    %1329 = vmax.xlane.f32.xlu0 %v1328
    %v1330 = vpop.xlane.xlu0 %1329
    %v1331 = vsel %vm515, %v1323, -inf
    %1332 = vmax.xlane.f32.xlu0 %v1331
    %v1333 = vpop.xlane.xlu0 %1332
    %v1334 = vsel %vm515, %v1324, -inf
    %1335 = vmax.xlane.f32.xlu0 %v1334
    %v1336 = vpop.xlane.xlu0 %1335
    %v1337 = vsub.f32 %v1321, %v1327
    %v1338 = vsub.f32 %v1322, %v1330
    %v1339 = vsub.f32 %v1323, %v1333
    %v1340 = vsub.f32 %v1324, %v1336
    %v1341 = vmul.f32 %v1337, 1.442695
    %v1342 = vpow.pop %v1341
    %v1343 = vmul.f32 %v1338, 1.442695
    %v1344 = vpow.pop %v1343
    %v1345 = vmul.f32 %v1339, 1.442695
    %v1346 = vpow.pop %v1345
    %v1347 = vmul.f32 %v1340, 1.442695
    %v1348 = vpow.pop %v1347
    %v1349 = vsel %vm515, %v1342, 0.0
    %1350 = vadd.xlane.f32.xlu0 %v1349
    %v1351 = vpop.xlane.xlu0 %1350
    %v1352 = vsel %vm515, %v1344, 0.0
    %1353 = vadd.xlane.f32.xlu0 %v1352
    %v1354 = vpop.xlane.xlu0 %1353
    %v1355 = vsel %vm515, %v1346, 0.0
    %1356 = vadd.xlane.f32.xlu0 %v1355
    %v1357 = vpop.xlane.xlu0 %1356
    %v1358 = vsel %vm515, %v1348, 0.0
    %1359 = vadd.xlane.f32.xlu0 %v1358
    %v1360 = vpop.xlane.xlu0 %1359
    %v1361 = vrcp.pop %v1351
    %v1362 = vrcp.pop %v1354
    %v1363 = vrcp.pop %v1357
    %v1364 = vrcp.pop %v1360
    %v1365 = vmul.f32 %v1342, %v1361
    %v1366 = vmul.f32 %v1344, %v1362
    %v1367 = vmul.f32 %v1346, %v1363
    %v1368 = vmul.f32 %v1348, %v1364
    %v1369 = vsel %vm515, %v1365, 0.0
    %v1370 = vsel %vm515, %v1366, 0.0
    %v1371 = vadd.f32 %v1369, %v1370
    %v1372 = vrot.slane %v1371, 4
    %v1373 = vadd.f32 %v1371, %v1372
    %v1374 = vrot.slane %v1373, 2
    %v1375 = vadd.f32 %v1373, %v1374
    %v1376 = vrot.slane %v1375, 1
    %v1377 = vadd.f32 %v1375, %v1376
    %v1378 = vsel %vm515, %v1367, 0.0
    %v1379 = vsel %vm515, %v1368, 0.0
    %v1380 = vadd.f32 %v1378, %v1379
    %v1381 = vrot.slane %v1380, 4
    %v1382 = vadd.f32 %v1380, %v1381
    %v1383 = vrot.slane %v1382, 2
    %v1384 = vadd.f32 %v1382, %v1383
    %v1385 = vrot.slane %v1384, 1
    %v1386 = vadd.f32 %v1384, %v1385
    %v1387 = vmul.f32 %v1377, %v578
    %v1388 = vmul.f32 %v1386, %v578
    %1389 = vrot.lane.b32.xlu0 %v318, 64
    %v1390 = vpop.permute.xlu0 %1389
    %1391 = vrot.lane.b32.xlu0 %v323, 64
    %v1392 = vpop.permute.xlu0 %1391
    %v1396 = vsel %vm515, %v1387, 0
    %1398 = vmatprep.subr.mxu0 0.0
    %1399 = vmatpush1.msra.mxu0 %v1390
    %1400 = vmatprep.subr.mxu0 0.0
    %1401 = vmatpush1.msra.mxu0 %v1392
    %1402 = vmatprep.subr.mxu0 0.0
    %1403 = vmatpush1.msra.mxu0 0.0
    %1404 = vmatprep.subr.mxu0 0.0
    %1405 = vmatpush1.msra.mxu0 0.0
    %1406 = vmatprep.subr.mxu0 0.0
    %1407 = vmatpush1.msra.mxu0 0.0
    %1408 = vmatprep.subr.mxu0 0.0
    %1409 = vmatpush1.msra.mxu0 0.0
    %1410 = vmatprep.subr.mxu0 0.0
    %1411 = vmatpush1.msra.mxu0 0.0
    %1412 = vmatprep.subr.mxu0 0.0
    %1413 = vmatpush1.msra.mxu0 0.0
    %1414 = vmatprep.subr.mxu0 0.0
    %1415 = vmatpush1.msra.mxu0 0.0
    %1416 = vmatprep.subr.mxu0 0.0
    %1417 = vmatpush1.msra.mxu0 0.0
    %1418 = vmatprep.subr.mxu0 0.0
    %1419 = vmatpush1.msra.mxu0 0.0
    %1420 = vmatprep.subr.mxu0 0.0
    %1421 = vmatpush1.msra.mxu0 0.0
    %1422 = vmatprep.subr.mxu0 0.0
    %1423 = vmatpush1.msra.mxu0 0.0
    %1424 = vmatprep.subr.mxu0 0.0
    %1425 = vmatpush1.msra.mxu0 0.0
    %1426 = vmatprep.subr.mxu0 0.0
    %1427 = vmatpush1.msra.mxu0 0.0
    %1428 = vmatprep.subr.mxu0 0.0
    %1429 = vmatpush1.msra.mxu0 0.0
    %1430 = vmatprep.subr.mxu0 0.0
    %1431 = vmatpush1.msra.mxu0 0.0
    %1432 = vmatprep.subr.mxu0 0.0
    %1433 = vmatpush1.msra.mxu0 0.0
    %1434 = vmatprep.subr.mxu0 0.0
    %1435 = vmatpush1.msra.mxu0 0.0
    %1436 = vmatprep.subr.mxu0 0.0
    %1437 = vmatpush1.msra.mxu0 0.0
    %1438 = vmatprep.subr.mxu0 0.0
    %1439 = vmatpush1.msra.mxu0 0.0
    %1440 = vmatprep.subr.mxu0 0.0
    %1441 = vmatpush1.msra.mxu0 0.0
    %1442 = vmatprep.subr.mxu0 0.0
    %1443 = vmatpush1.msra.mxu0 0.0
    %1444 = vmatprep.subr.mxu0 0.0
    %1445 = vmatpush1.msra.mxu0 0.0
    %1446 = vmatprep.subr.mxu0 0.0
    %1447 = vmatpush1.msra.mxu0 0.0
    %1448 = vmatprep.subr.mxu0 0.0
    %1449 = vmatpush1.msra.mxu0 0.0
    %1450 = vmatprep.subr.mxu0 0.0
    %1451 = vmatpush1.msra.mxu0 0.0
    %1452 = vmatprep.subr.mxu0 0.0
    %1453 = vmatpush1.msra.mxu0 0.0
    %1454 = vmatprep.subr.mxu0 0.0
    %1455 = vmatpush1.msra.mxu0 0.0
    %1456 = vmatprep.subr.mxu0 0.0
    %1457 = vmatpush1.msra.mxu0 0.0
    %1458 = vmatprep.subr.mxu0 0.0
    %1459 = vmatpush1.msra.mxu0 0.0
    %1460 = vmatprep.subr.mxu0 0.0
    %1461 = vmatpush1.msra.mxu0 0.0
    %1462 = vmatprep.mubr.f32.mxu0 0.0
    %1463 = vmatmul.mubr.f32.gmra.mrb[0].mxu0 %v1396
    %v1464 = vpop.f32.mrb[0].mxu0
    %v1465 = vadd.f32 0.0, %v1464
    %v1466 = vpop.f32.mrb[0].mxu0
    %1467 = vdwg.mxu0
    %1468 = vrot.lane.b32.xlu0 %v328, 64
    %v1469 = vpop.permute.xlu0 %1468
    %1470 = vrot.lane.b32.xlu0 %v333, 64
    %v1471 = vpop.permute.xlu0 %1470
    %v1475 = vsel %vm515, %v1388, 0
    %1477 = vmatprep.subr.mxu0 0.0
    %1478 = vmatpush1.msra.mxu0 %v1469
    %1479 = vmatprep.subr.mxu0 0.0
    %1480 = vmatpush1.msra.mxu0 %v1471
    %1481 = vmatprep.subr.mxu0 0.0
    %1482 = vmatpush1.msra.mxu0 0.0
    %1483 = vmatprep.subr.mxu0 0.0
    %1484 = vmatpush1.msra.mxu0 0.0
    %1485 = vmatprep.subr.mxu0 0.0
    %1486 = vmatpush1.msra.mxu0 0.0
    %1487 = vmatprep.subr.mxu0 0.0
    %1488 = vmatpush1.msra.mxu0 0.0
    %1489 = vmatprep.subr.mxu0 0.0
    %1490 = vmatpush1.msra.mxu0 0.0
    %1491 = vmatprep.subr.mxu0 0.0
    %1492 = vmatpush1.msra.mxu0 0.0
    %1493 = vmatprep.subr.mxu0 0.0
    %1494 = vmatpush1.msra.mxu0 0.0
    %1495 = vmatprep.subr.mxu0 0.0
    %1496 = vmatpush1.msra.mxu0 0.0
    %1497 = vmatprep.subr.mxu0 0.0
    %1498 = vmatpush1.msra.mxu0 0.0
    %1499 = vmatprep.subr.mxu0 0.0
    %1500 = vmatpush1.msra.mxu0 0.0
    %1501 = vmatprep.subr.mxu0 0.0
    %1502 = vmatpush1.msra.mxu0 0.0
    %1503 = vmatprep.subr.mxu0 0.0
    %1504 = vmatpush1.msra.mxu0 0.0
    %1505 = vmatprep.subr.mxu0 0.0
    %1506 = vmatpush1.msra.mxu0 0.0
    %1507 = vmatprep.subr.mxu0 0.0
    %1508 = vmatpush1.msra.mxu0 0.0
    %1509 = vmatprep.subr.mxu0 0.0
    %1510 = vmatpush1.msra.mxu0 0.0
    %1511 = vmatprep.subr.mxu0 0.0
    %1512 = vmatpush1.msra.mxu0 0.0
    %1513 = vmatprep.subr.mxu0 0.0
    %1514 = vmatpush1.msra.mxu0 0.0
    %1515 = vmatprep.subr.mxu0 0.0
    %1516 = vmatpush1.msra.mxu0 0.0
    %1517 = vmatprep.subr.mxu0 0.0
    %1518 = vmatpush1.msra.mxu0 0.0
    %1519 = vmatprep.subr.mxu0 0.0
    %1520 = vmatpush1.msra.mxu0 0.0
    %1521 = vmatprep.subr.mxu0 0.0
    %1522 = vmatpush1.msra.mxu0 0.0
    %1523 = vmatprep.subr.mxu0 0.0
    %1524 = vmatpush1.msra.mxu0 0.0
    %1525 = vmatprep.subr.mxu0 0.0
    %1526 = vmatpush1.msra.mxu0 0.0
    %1527 = vmatprep.subr.mxu0 0.0
    %1528 = vmatpush1.msra.mxu0 0.0
    %1529 = vmatprep.subr.mxu0 0.0
    %1530 = vmatpush1.msra.mxu0 0.0
    %1531 = vmatprep.subr.mxu0 0.0
    %1532 = vmatpush1.msra.mxu0 0.0
    %1533 = vmatprep.subr.mxu0 0.0
    %1534 = vmatpush1.msra.mxu0 0.0
    %1535 = vmatprep.subr.mxu0 0.0
    %1536 = vmatpush1.msra.mxu0 0.0
    %1537 = vmatprep.subr.mxu0 0.0
    %1538 = vmatpush1.msra.mxu0 0.0
    %1539 = vmatprep.subr.mxu0 0.0
    %1540 = vmatpush1.msra.mxu0 0.0
    %1541 = vmatprep.mubr.f32.mxu0 0.0
    %1542 = vmatmul.mubr.f32.gmra.mrb[0].mxu0 %v1475
    %v1543 = vpop.f32.mrb[0].mxu0
    %v1544 = vadd.f32 0.0, %v1543
    %v1545 = vpop.f32.mrb[0].mxu0
    %1546 = vdwg.mxu0
    %v1549 = vrot.slane %v724, 7
    %vm1550 = vcmask 1041409
    %v1551 = vsel %vm1550, %v1549, %v651
    %v1555 = vrot.slane %v1136, 7
    %v1556 = vsel %vm1550, %v1555, %v1055
    %1557 = vrot.lane.b32.xlu0 %v1556, 32
    %v1558 = vpop.permute.xlu0 %1557
    %v1562 = vrot.slane %v1544, 7
    %v1563 = vsel %vm1550, %v1562, %v1465
    %1564 = vrot.lane.b32.xlu0 %v1563, 64
    %v1565 = vpop.permute.xlu0 %1564
    %v1567 = vsel %vm336, %v1551, %v1558
    %vm1568 = vcmask 523264
    %v1569 = vsel %vm1568, %v1567, %v1565
    %v1570 = vld [vmem:[%s3] sm:$0xff]
    %v1571 = vld [vmem:[%s3 + $0x8] sm:$0xff]
    %v1572 = vld [vmem:[%s3 + $0x10] sm:$0xff]
    %v1573 = vld [vmem:[%s3 + $0x18] sm:$0xff]
    %v1574 = vld [vmem:[%s4] sm:$0x3f]
    %v1575 = vld [vmem:[%s4 + $0x8] sm:$0x3f]
    %v1576 = vld [vmem:[%s4 + $0x10] sm:$0x3f]
    %v1577 = vld [vmem:[%s5] sm:$0x1]
    %v1578 = vld [vmem:[%s5 + $0x1] sm:$0x1]
    %v1579 = vld [vmem:[%s5 + $0x2] sm:$0x1]
    %v1581 = vlaneseq
    %v1582 = vshrl.u32 %v1581, 7
    %v1583 = vsub.s32 0, %v1582
    %v1584 = vrot.slane %v1577, %v1583
    %vm1586 = vcmask 48128
    %v1588 = vsel %vm1586, %v1570, 0
    %v1591 = vsel %vm1586, %v1571, 0
    %v1594 = vsel %vm1586, %v1572, 0
    %v1597 = vsel %vm1586, %v1573, 0
    %vm1599 = vcmask 1045504
    %v1601 = vsel %vm1599, %v1574, 0
    %1603 = vmatprep.subr.mxu0 0.0
    %1604 = vmatpush1.msra.mxu0 %v1601
    %1605 = vmatprep.subr.mxu0 0.0
    %1606 = vmatpush1.msra.mxu0 0.0
    %1607 = vmatprep.subr.mxu0 0.0
    %1608 = vmatpush1.msra.mxu0 0.0
    %1609 = vmatprep.subr.mxu0 0.0
    %1610 = vmatpush1.msra.mxu0 0.0
    %1611 = vmatprep.subr.mxu0 0.0
    %1612 = vmatpush1.msra.mxu0 0.0
    %1613 = vmatprep.subr.mxu0 0.0
    %1614 = vmatpush1.msra.mxu0 0.0
    %1615 = vmatprep.subr.mxu0 0.0
    %1616 = vmatpush1.msra.mxu0 0.0
    %1617 = vmatprep.subr.mxu0 0.0
    %1618 = vmatpush1.msra.mxu0 0.0
    %1619 = vmatprep.subr.mxu0 0.0
    %1620 = vmatpush1.msra.mxu0 0.0
    %1621 = vmatprep.subr.mxu0 0.0
    %1622 = vmatpush1.msra.mxu0 0.0
    %1623 = vmatprep.subr.mxu0 0.0
    %1624 = vmatpush1.msra.mxu0 0.0
    %1625 = vmatprep.subr.mxu0 0.0
    %1626 = vmatpush1.msra.mxu0 0.0
    %1627 = vmatprep.subr.mxu0 0.0
    %1628 = vmatpush1.msra.mxu0 0.0
    %1629 = vmatprep.subr.mxu0 0.0
    %1630 = vmatpush1.msra.mxu0 0.0
    %1631 = vmatprep.subr.mxu0 0.0
    %1632 = vmatpush1.msra.mxu0 0.0
    %1633 = vmatprep.subr.mxu0 0.0
    %1634 = vmatpush1.msra.mxu0 0.0
    %1635 = vmatprep.subr.mxu0 0.0
    %1636 = vmatpush1.msra.mxu0 0.0
    %1637 = vmatprep.subr.mxu0 0.0
    %1638 = vmatpush1.msra.mxu0 0.0
    %1639 = vmatprep.subr.mxu0 0.0
    %1640 = vmatpush1.msra.mxu0 0.0
    %1641 = vmatprep.subr.mxu0 0.0
    %1642 = vmatpush1.msra.mxu0 0.0
    %1643 = vmatprep.subr.mxu0 0.0
    %1644 = vmatpush1.msra.mxu0 0.0
    %1645 = vmatprep.subr.mxu0 0.0
    %1646 = vmatpush1.msra.mxu0 0.0
    %1647 = vmatprep.subr.mxu0 0.0
    %1648 = vmatpush1.msra.mxu0 0.0
    %1649 = vmatprep.subr.mxu0 0.0
    %1650 = vmatpush1.msra.mxu0 0.0
    %1651 = vmatprep.subr.mxu0 0.0
    %1652 = vmatpush1.msra.mxu0 0.0
    %1653 = vmatprep.subr.mxu0 0.0
    %1654 = vmatpush1.msra.mxu0 0.0
    %1655 = vmatprep.subr.mxu0 0.0
    %1656 = vmatpush1.msra.mxu0 0.0
    %1657 = vmatprep.subr.mxu0 0.0
    %1658 = vmatpush1.msra.mxu0 0.0
    %1659 = vmatprep.subr.mxu0 0.0
    %1660 = vmatpush1.msra.mxu0 0.0
    %1661 = vmatprep.subr.mxu0 0.0
    %1662 = vmatpush1.msra.mxu0 0.0
    %1663 = vmatprep.subr.mxu0 0.0
    %1664 = vmatpush1.msra.mxu0 0.0
    %1665 = vmatprep.subr.mxu0 0.0
    %1666 = vmatpush1.msra.mxu0 0.0
    %1667 = vmatprep.mubr.f32.mxu0 0.0
    %1668 = vmatmul.mubr.f32.gmra.mrb[0].mxu0 %v1588
    %v1669 = vpop.f32.mrb[0].mxu0
    %v1670 = vadd.f32 %v1584, %v1669
    %v1671 = vpop.f32.mrb[0].mxu0
    %1672 = vmatprep.mubr.f32.mxu0 0.0
    %1673 = vmatmul.mubr.f32.gmra.mrb[0].mxu0 %v1591
    %v1674 = vpop.f32.mrb[0].mxu0
    %v1675 = vadd.f32 %v1584, %v1674
    %v1676 = vpop.f32.mrb[0].mxu0
    %1677 = vmatprep.mubr.f32.mxu0 0.0
    %1678 = vmatmul.mubr.f32.gmra.mrb[0].mxu0 %v1594
    %v1679 = vpop.f32.mrb[0].mxu0
    %v1680 = vadd.f32 %v1584, %v1679
    %v1681 = vpop.f32.mrb[0].mxu0
    %1682 = vmatprep.mubr.f32.mxu0 0.0
    %1683 = vmatmul.mubr.f32.gmra.mrb[0].mxu0 %v1597
    %v1684 = vpop.f32.mrb[0].mxu0
    %v1685 = vadd.f32 %v1584, %v1684
    %v1686 = vpop.f32.mrb[0].mxu0
    %1687 = vdwg.mxu0
    %v1689 = vlaneseq
    %v1690 = vshrl.u32 %v1689, 7
    %v1691 = vsub.s32 0, %v1690
    %v1692 = vrot.slane %v1578, %v1691
    %v1695 = vsel %vm1599, %v1575, 0
    %1697 = vmatprep.subr.mxu0 0.0
    %1698 = vmatpush1.msra.mxu0 %v1695
    %1699 = vmatprep.subr.mxu0 0.0
    %1700 = vmatpush1.msra.mxu0 0.0
    %1701 = vmatprep.subr.mxu0 0.0
    %1702 = vmatpush1.msra.mxu0 0.0
    %1703 = vmatprep.subr.mxu0 0.0
    %1704 = vmatpush1.msra.mxu0 0.0
    %1705 = vmatprep.subr.mxu0 0.0
    %1706 = vmatpush1.msra.mxu0 0.0
    %1707 = vmatprep.subr.mxu0 0.0
    %1708 = vmatpush1.msra.mxu0 0.0
    %1709 = vmatprep.subr.mxu0 0.0
    %1710 = vmatpush1.msra.mxu0 0.0
    %1711 = vmatprep.subr.mxu0 0.0
    %1712 = vmatpush1.msra.mxu0 0.0
    %1713 = vmatprep.subr.mxu0 0.0
    %1714 = vmatpush1.msra.mxu0 0.0
    %1715 = vmatprep.subr.mxu0 0.0
    %1716 = vmatpush1.msra.mxu0 0.0
    %1717 = vmatprep.subr.mxu0 0.0
    %1718 = vmatpush1.msra.mxu0 0.0
    %1719 = vmatprep.subr.mxu0 0.0
    %1720 = vmatpush1.msra.mxu0 0.0
    %1721 = vmatprep.subr.mxu0 0.0
    %1722 = vmatpush1.msra.mxu0 0.0
    %1723 = vmatprep.subr.mxu0 0.0
    %1724 = vmatpush1.msra.mxu0 0.0
    %1725 = vmatprep.subr.mxu0 0.0
    %1726 = vmatpush1.msra.mxu0 0.0
    %1727 = vmatprep.subr.mxu0 0.0
    %1728 = vmatpush1.msra.mxu0 0.0
    %1729 = vmatprep.subr.mxu0 0.0
    %1730 = vmatpush1.msra.mxu0 0.0
    %1731 = vmatprep.subr.mxu0 0.0
    %1732 = vmatpush1.msra.mxu0 0.0
    %1733 = vmatprep.subr.mxu0 0.0
    %1734 = vmatpush1.msra.mxu0 0.0
    %1735 = vmatprep.subr.mxu0 0.0
    %1736 = vmatpush1.msra.mxu0 0.0
    %1737 = vmatprep.subr.mxu0 0.0
    %1738 = vmatpush1.msra.mxu0 0.0
    %1739 = vmatprep.subr.mxu0 0.0
    %1740 = vmatpush1.msra.mxu0 0.0
    %1741 = vmatprep.subr.mxu0 0.0
    %1742 = vmatpush1.msra.mxu0 0.0
    %1743 = vmatprep.subr.mxu0 0.0
    %1744 = vmatpush1.msra.mxu0 0.0
    %1745 = vmatprep.subr.mxu0 0.0
    %1746 = vmatpush1.msra.mxu0 0.0
    %1747 = vmatprep.subr.mxu0 0.0
    %1748 = vmatpush1.msra.mxu0 0.0
    %1749 = vmatprep.subr.mxu0 0.0
    %1750 = vmatpush1.msra.mxu0 0.0
    %1751 = vmatprep.subr.mxu0 0.0
    %1752 = vmatpush1.msra.mxu0 0.0
    %1753 = vmatprep.subr.mxu0 0.0
    %1754 = vmatpush1.msra.mxu0 0.0
    %1755 = vmatprep.subr.mxu0 0.0
    %1756 = vmatpush1.msra.mxu0 0.0
    %1757 = vmatprep.subr.mxu0 0.0
    %1758 = vmatpush1.msra.mxu0 0.0
    %1759 = vmatprep.subr.mxu0 0.0
    %1760 = vmatpush1.msra.mxu0 0.0
    %1761 = vmatprep.mubr.f32.mxu0 0.0
    %1762 = vmatmul.mubr.f32.gmra.mrb[0].mxu0 %v1588
    %v1763 = vpop.f32.mrb[0].mxu0
    %v1764 = vadd.f32 %v1692, %v1763
    %v1765 = vpop.f32.mrb[0].mxu0
    %1766 = vmatprep.mubr.f32.mxu0 0.0
    %1767 = vmatmul.mubr.f32.gmra.mrb[0].mxu0 %v1591
    %v1768 = vpop.f32.mrb[0].mxu0
    %v1769 = vadd.f32 %v1692, %v1768
    %v1770 = vpop.f32.mrb[0].mxu0
    %1771 = vmatprep.mubr.f32.mxu0 0.0
    %1772 = vmatmul.mubr.f32.gmra.mrb[0].mxu0 %v1594
    %v1773 = vpop.f32.mrb[0].mxu0
    %v1774 = vadd.f32 %v1692, %v1773
    %v1775 = vpop.f32.mrb[0].mxu0
    %1776 = vmatprep.mubr.f32.mxu0 0.0
    %1777 = vmatmul.mubr.f32.gmra.mrb[0].mxu0 %v1597
    %v1778 = vpop.f32.mrb[0].mxu0
    %v1779 = vadd.f32 %v1692, %v1778
    %v1780 = vpop.f32.mrb[0].mxu0
    %1781 = vdwg.mxu0
    %v1783 = vlaneseq
    %v1784 = vshrl.u32 %v1783, 7
    %v1785 = vsub.s32 0, %v1784
    %v1786 = vrot.slane %v1579, %v1785
    %v1789 = vsel %vm1599, %v1576, 0
    %1791 = vmatprep.subr.mxu0 0.0
    %1792 = vmatpush1.msra.mxu0 %v1789
    %1793 = vmatprep.subr.mxu0 0.0
    %1794 = vmatpush1.msra.mxu0 0.0
    %1795 = vmatprep.subr.mxu0 0.0
    %1796 = vmatpush1.msra.mxu0 0.0
    %1797 = vmatprep.subr.mxu0 0.0
    %1798 = vmatpush1.msra.mxu0 0.0
    %1799 = vmatprep.subr.mxu0 0.0
    %1800 = vmatpush1.msra.mxu0 0.0
    %1801 = vmatprep.subr.mxu0 0.0
    %1802 = vmatpush1.msra.mxu0 0.0
    %1803 = vmatprep.subr.mxu0 0.0
    %1804 = vmatpush1.msra.mxu0 0.0
    %1805 = vmatprep.subr.mxu0 0.0
    %1806 = vmatpush1.msra.mxu0 0.0
    %1807 = vmatprep.subr.mxu0 0.0
    %1808 = vmatpush1.msra.mxu0 0.0
    %1809 = vmatprep.subr.mxu0 0.0
    %1810 = vmatpush1.msra.mxu0 0.0
    %1811 = vmatprep.subr.mxu0 0.0
    %1812 = vmatpush1.msra.mxu0 0.0
    %1813 = vmatprep.subr.mxu0 0.0
    %1814 = vmatpush1.msra.mxu0 0.0
    %1815 = vmatprep.subr.mxu0 0.0
    %1816 = vmatpush1.msra.mxu0 0.0
    %1817 = vmatprep.subr.mxu0 0.0
    %1818 = vmatpush1.msra.mxu0 0.0
    %1819 = vmatprep.subr.mxu0 0.0
    %1820 = vmatpush1.msra.mxu0 0.0
    %1821 = vmatprep.subr.mxu0 0.0
    %1822 = vmatpush1.msra.mxu0 0.0
    %1823 = vmatprep.subr.mxu0 0.0
    %1824 = vmatpush1.msra.mxu0 0.0
    %1825 = vmatprep.subr.mxu0 0.0
    %1826 = vmatpush1.msra.mxu0 0.0
    %1827 = vmatprep.subr.mxu0 0.0
    %1828 = vmatpush1.msra.mxu0 0.0
    %1829 = vmatprep.subr.mxu0 0.0
    %1830 = vmatpush1.msra.mxu0 0.0
    %1831 = vmatprep.subr.mxu0 0.0
    %1832 = vmatpush1.msra.mxu0 0.0
    %1833 = vmatprep.subr.mxu0 0.0
    %1834 = vmatpush1.msra.mxu0 0.0
    %1835 = vmatprep.subr.mxu0 0.0
    %1836 = vmatpush1.msra.mxu0 0.0
    %1837 = vmatprep.subr.mxu0 0.0
    %1838 = vmatpush1.msra.mxu0 0.0
    %1839 = vmatprep.subr.mxu0 0.0
    %1840 = vmatpush1.msra.mxu0 0.0
    %1841 = vmatprep.subr.mxu0 0.0
    %1842 = vmatpush1.msra.mxu0 0.0
    %1843 = vmatprep.subr.mxu0 0.0
    %1844 = vmatpush1.msra.mxu0 0.0
    %1845 = vmatprep.subr.mxu0 0.0
    %1846 = vmatpush1.msra.mxu0 0.0
    %1847 = vmatprep.subr.mxu0 0.0
    %1848 = vmatpush1.msra.mxu0 0.0
    %1849 = vmatprep.subr.mxu0 0.0
    %1850 = vmatpush1.msra.mxu0 0.0
    %1851 = vmatprep.subr.mxu0 0.0
    %1852 = vmatpush1.msra.mxu0 0.0
    %1853 = vmatprep.subr.mxu0 0.0
    %1854 = vmatpush1.msra.mxu0 0.0
    %1855 = vmatprep.mubr.f32.mxu0 0.0
    %1856 = vmatmul.mubr.f32.gmra.mrb[0].mxu0 %v1588
    %v1857 = vpop.f32.mrb[0].mxu0
    %v1858 = vadd.f32 %v1786, %v1857
    %v1859 = vpop.f32.mrb[0].mxu0
    %1860 = vmatprep.mubr.f32.mxu0 0.0
    %1861 = vmatmul.mubr.f32.gmra.mrb[0].mxu0 %v1591
    %v1862 = vpop.f32.mrb[0].mxu0
    %v1863 = vadd.f32 %v1786, %v1862
    %v1864 = vpop.f32.mrb[0].mxu0
    %1865 = vmatprep.mubr.f32.mxu0 0.0
    %1866 = vmatmul.mubr.f32.gmra.mrb[0].mxu0 %v1594
    %v1867 = vpop.f32.mrb[0].mxu0
    %v1868 = vadd.f32 %v1786, %v1867
    %v1869 = vpop.f32.mrb[0].mxu0
    %1870 = vmatprep.mubr.f32.mxu0 0.0
    %1871 = vmatmul.mubr.f32.gmra.mrb[0].mxu0 %v1597
    %v1872 = vpop.f32.mrb[0].mxu0
    %v1873 = vadd.f32 %v1786, %v1872
    %v1874 = vpop.f32.mrb[0].mxu0
    %1875 = vdwg.mxu0
    %v1877 = vsel %vm336, %v1670, 0
    %v1880 = vsel %vm336, %v1675, 0
    %v1883 = vsel %vm336, %v1764, 0
    %v1886 = vsel %vm336, %v1769, 0
    %1888 = vmatprep.subr.mxu0 0.0
    %1889 = vmatpush1.xpose.msra.mxu0 %v1883
    %1890 = vmatprep.subr.mxu0 0.0
    %1891 = vmatpush1.xpose.msra.mxu0 %v1886
    %1892 = vmatprep.subr.mxu0 0.0
    %1893 = vmatpush1.xpose.msra.mxu0 0.0
    %1894 = vmatprep.subr.mxu0 0.0
    %1895 = vmatpush1.xpose.msra.mxu0 0.0
    %1896 = vmatprep.subr.mxu0 0.0
    %1897 = vmatpush1.xpose.msra.mxu0 0.0
    %1898 = vmatprep.subr.mxu0 0.0
    %1899 = vmatpush1.xpose.msra.mxu0 0.0
    %1900 = vmatprep.subr.mxu0 0.0
    %1901 = vmatpush1.xpose.msra.mxu0 0.0
    %1902 = vmatprep.subr.mxu0 0.0
    %1903 = vmatpush1.xpose.msra.mxu0 0.0
    %1904 = vmatprep.subr.mxu0 0.0
    %1905 = vmatpush1.xpose.msra.mxu0 0.0
    %1906 = vmatprep.subr.mxu0 0.0
    %1907 = vmatpush1.xpose.msra.mxu0 0.0
    %1908 = vmatprep.subr.mxu0 0.0
    %1909 = vmatpush1.xpose.msra.mxu0 0.0
    %1910 = vmatprep.subr.mxu0 0.0
    %1911 = vmatpush1.xpose.msra.mxu0 0.0
    %1912 = vmatprep.subr.mxu0 0.0
    %1913 = vmatpush1.xpose.msra.mxu0 0.0
    %1914 = vmatprep.subr.mxu0 0.0
    %1915 = vmatpush1.xpose.msra.mxu0 0.0
    %1916 = vmatprep.subr.mxu0 0.0
    %1917 = vmatpush1.xpose.msra.mxu0 0.0
    %1918 = vmatprep.subr.mxu0 0.0
    %1919 = vmatpush1.xpose.msra.mxu0 0.0
    %1920 = vmatprep.subr.mxu0 0.0
    %1921 = vmatpush1.xpose.msra.mxu0 0.0
    %1922 = vmatprep.subr.mxu0 0.0
    %1923 = vmatpush1.xpose.msra.mxu0 0.0
    %1924 = vmatprep.subr.mxu0 0.0
    %1925 = vmatpush1.xpose.msra.mxu0 0.0
    %1926 = vmatprep.subr.mxu0 0.0
    %1927 = vmatpush1.xpose.msra.mxu0 0.0
    %1928 = vmatprep.subr.mxu0 0.0
    %1929 = vmatpush1.xpose.msra.mxu0 0.0
    %1930 = vmatprep.subr.mxu0 0.0
    %1931 = vmatpush1.xpose.msra.mxu0 0.0
    %1932 = vmatprep.subr.mxu0 0.0
    %1933 = vmatpush1.xpose.msra.mxu0 0.0
    %1934 = vmatprep.subr.mxu0 0.0
    %1935 = vmatpush1.xpose.msra.mxu0 0.0
    %1936 = vmatprep.subr.mxu0 0.0
    %1937 = vmatpush1.xpose.msra.mxu0 0.0
    %1938 = vmatprep.subr.mxu0 0.0
    %1939 = vmatpush1.xpose.msra.mxu0 0.0
    %1940 = vmatprep.subr.mxu0 0.0
    %1941 = vmatpush1.xpose.msra.mxu0 0.0
    %1942 = vmatprep.subr.mxu0 0.0
    %1943 = vmatpush1.xpose.msra.mxu0 0.0
    %1944 = vmatprep.subr.mxu0 0.0
    %1945 = vmatpush1.xpose.msra.mxu0 0.0
    %1946 = vmatprep.subr.mxu0 0.0
    %1947 = vmatpush1.xpose.msra.mxu0 0.0
    %1948 = vmatprep.subr.mxu0 0.0
    %1949 = vmatpush1.xpose.msra.mxu0 0.0
    %1950 = vmatprep.subr.mxu0 0.0
    %1951 = vmatpush1.xpose.msra.mxu0 0.0
    %1952 = vmatprep.mubr.f32.mxu0 0.0
    %1953 = vmatmul.mubr.f32.gmra.mrb[0].mxu0 %v1877
    %v1954 = vpop.f32.mrb[0].mxu0
    %v1955 = vadd.f32 0.0, %v1954
    %v1956 = vpop.f32.mrb[0].mxu0
    %1957 = vmatprep.mubr.f32.mxu0 0.0
    %1958 = vmatmul.mubr.f32.gmra.mrb[0].mxu0 %v1880
    %v1959 = vpop.f32.mrb[0].mxu0
    %v1960 = vadd.f32 0.0, %v1959
    %v1961 = vpop.f32.mrb[0].mxu0
    %1962 = vdwg.mxu0
    %v1964 = vsel %vm336, %v1680, 0
    %v1967 = vsel %vm336, %v1685, 0
    %v1970 = vsel %vm336, %v1774, 0
    %v1973 = vsel %vm336, %v1779, 0
    %1975 = vmatprep.subr.mxu0 0.0
    %1976 = vmatpush1.xpose.msra.mxu0 %v1970
    %1977 = vmatprep.subr.mxu0 0.0
    %1978 = vmatpush1.xpose.msra.mxu0 %v1973
    %1979 = vmatprep.subr.mxu0 0.0
    %1980 = vmatpush1.xpose.msra.mxu0 0.0
    %1981 = vmatprep.subr.mxu0 0.0
    %1982 = vmatpush1.xpose.msra.mxu0 0.0
    %1983 = vmatprep.subr.mxu0 0.0
    %1984 = vmatpush1.xpose.msra.mxu0 0.0
    %1985 = vmatprep.subr.mxu0 0.0
    %1986 = vmatpush1.xpose.msra.mxu0 0.0
    %1987 = vmatprep.subr.mxu0 0.0
    %1988 = vmatpush1.xpose.msra.mxu0 0.0
    %1989 = vmatprep.subr.mxu0 0.0
    %1990 = vmatpush1.xpose.msra.mxu0 0.0
    %1991 = vmatprep.subr.mxu0 0.0
    %1992 = vmatpush1.xpose.msra.mxu0 0.0
    %1993 = vmatprep.subr.mxu0 0.0
    %1994 = vmatpush1.xpose.msra.mxu0 0.0
    %1995 = vmatprep.subr.mxu0 0.0
    %1996 = vmatpush1.xpose.msra.mxu0 0.0
    %1997 = vmatprep.subr.mxu0 0.0
    %1998 = vmatpush1.xpose.msra.mxu0 0.0
    %1999 = vmatprep.subr.mxu0 0.0
    %2000 = vmatpush1.xpose.msra.mxu0 0.0
    %2001 = vmatprep.subr.mxu0 0.0
    %2002 = vmatpush1.xpose.msra.mxu0 0.0
    %2003 = vmatprep.subr.mxu0 0.0
    %2004 = vmatpush1.xpose.msra.mxu0 0.0
    %2005 = vmatprep.subr.mxu0 0.0
    %2006 = vmatpush1.xpose.msra.mxu0 0.0
    %2007 = vmatprep.subr.mxu0 0.0
    %2008 = vmatpush1.xpose.msra.mxu0 0.0
    %2009 = vmatprep.subr.mxu0 0.0
    %2010 = vmatpush1.xpose.msra.mxu0 0.0
    %2011 = vmatprep.subr.mxu0 0.0
    %2012 = vmatpush1.xpose.msra.mxu0 0.0
    %2013 = vmatprep.subr.mxu0 0.0
    %2014 = vmatpush1.xpose.msra.mxu0 0.0
    %2015 = vmatprep.subr.mxu0 0.0
    %2016 = vmatpush1.xpose.msra.mxu0 0.0
    %2017 = vmatprep.subr.mxu0 0.0
    %2018 = vmatpush1.xpose.msra.mxu0 0.0
    %2019 = vmatprep.subr.mxu0 0.0
    %2020 = vmatpush1.xpose.msra.mxu0 0.0
    %2021 = vmatprep.subr.mxu0 0.0
    %2022 = vmatpush1.xpose.msra.mxu0 0.0
    %2023 = vmatprep.subr.mxu0 0.0
    %2024 = vmatpush1.xpose.msra.mxu0 0.0
    %2025 = vmatprep.subr.mxu0 0.0
    %2026 = vmatpush1.xpose.msra.mxu0 0.0
    %2027 = vmatprep.subr.mxu0 0.0
    %2028 = vmatpush1.xpose.msra.mxu0 0.0
    %2029 = vmatprep.subr.mxu0 0.0
    %2030 = vmatpush1.xpose.msra.mxu0 0.0
    %2031 = vmatprep.subr.mxu0 0.0
    %2032 = vmatpush1.xpose.msra.mxu0 0.0
    %2033 = vmatprep.subr.mxu0 0.0
    %2034 = vmatpush1.xpose.msra.mxu0 0.0
    %2035 = vmatprep.subr.mxu0 0.0
    %2036 = vmatpush1.xpose.msra.mxu0 0.0
    %2037 = vmatprep.subr.mxu0 0.0
    %2038 = vmatpush1.xpose.msra.mxu0 0.0
    %2039 = vmatprep.mubr.f32.mxu0 0.0
    %2040 = vmatmul.mubr.f32.gmra.mrb[0].mxu0 %v1964
    %v2041 = vpop.f32.mrb[0].mxu0
    %v2042 = vadd.f32 0.0, %v2041
    %v2043 = vpop.f32.mrb[0].mxu0
    %2044 = vmatprep.mubr.f32.mxu0 0.0
    %2045 = vmatmul.mubr.f32.gmra.mrb[0].mxu0 %v1967
    %v2046 = vpop.f32.mrb[0].mxu0
    %v2047 = vadd.f32 0.0, %v2046
    %v2048 = vpop.f32.mrb[0].mxu0
    %2049 = vdwg.mxu0
    %v2050 = vmul.f32 %v1955, 0.17677669
    %v2051 = vmul.f32 %v1960, 0.17677669
    %v2052 = vmul.f32 %v2042, 0.17677669
    %v2053 = vmul.f32 %v2047, 0.17677669
    %v2054 = vsel %vm515, %v2050, -inf
    %2055 = vmax.xlane.f32.xlu0 %v2054
    %v2056 = vpop.xlane.xlu0 %2055
    %v2057 = vsel %vm515, %v2051, -inf
    %2058 = vmax.xlane.f32.xlu0 %v2057
    %v2059 = vpop.xlane.xlu0 %2058
    %v2060 = vsel %vm515, %v2052, -inf
    %2061 = vmax.xlane.f32.xlu0 %v2060
    %v2062 = vpop.xlane.xlu0 %2061
    %v2063 = vsel %vm515, %v2053, -inf
    %2064 = vmax.xlane.f32.xlu0 %v2063
    %v2065 = vpop.xlane.xlu0 %2064
    %v2066 = vsub.f32 %v2050, %v2056
    %v2067 = vsub.f32 %v2051, %v2059
    %v2068 = vsub.f32 %v2052, %v2062
    %v2069 = vsub.f32 %v2053, %v2065
    %v2070 = vmul.f32 %v2066, 1.442695
    %v2071 = vpow.pop %v2070
    %v2072 = vmul.f32 %v2067, 1.442695
    %v2073 = vpow.pop %v2072
    %v2074 = vmul.f32 %v2068, 1.442695
    %v2075 = vpow.pop %v2074
    %v2076 = vmul.f32 %v2069, 1.442695
    %v2077 = vpow.pop %v2076
    %v2078 = vsel %vm515, %v2071, 0.0
    %2079 = vadd.xlane.f32.xlu0 %v2078
    %v2080 = vpop.xlane.xlu0 %2079
    %v2081 = vsel %vm515, %v2073, 0.0
    %2082 = vadd.xlane.f32.xlu0 %v2081
    %v2083 = vpop.xlane.xlu0 %2082
    %v2084 = vsel %vm515, %v2075, 0.0
    %2085 = vadd.xlane.f32.xlu0 %v2084
    %v2086 = vpop.xlane.xlu0 %2085
    %v2087 = vsel %vm515, %v2077, 0.0
    %2088 = vadd.xlane.f32.xlu0 %v2087
    %v2089 = vpop.xlane.xlu0 %2088
    %v2090 = vrcp.pop %v2080
    %v2091 = vrcp.pop %v2083
    %v2092 = vrcp.pop %v2086
    %v2093 = vrcp.pop %v2089
    %v2094 = vmul.f32 %v2071, %v2090
    %v2095 = vmul.f32 %v2073, %v2091
    %v2096 = vmul.f32 %v2075, %v2092
    %v2097 = vmul.f32 %v2077, %v2093
    %v2098 = vsel %vm515, %v2094, 0.0
    %v2099 = vsel %vm515, %v2095, 0.0
    %v2100 = vadd.f32 %v2098, %v2099
    %v2101 = vrot.slane %v2100, 4
    %v2102 = vadd.f32 %v2100, %v2101
    %v2103 = vrot.slane %v2102, 2
    %v2104 = vadd.f32 %v2102, %v2103
    %v2105 = vrot.slane %v2104, 1
    %v2106 = vadd.f32 %v2104, %v2105
    %v2107 = vsel %vm515, %v2096, 0.0
    %v2108 = vsel %vm515, %v2097, 0.0
    %v2109 = vadd.f32 %v2107, %v2108
    %v2110 = vrot.slane %v2109, 4
    %v2111 = vadd.f32 %v2109, %v2110
    %v2112 = vrot.slane %v2111, 2
    %v2113 = vadd.f32 %v2111, %v2112
    %v2114 = vrot.slane %v2113, 1
    %v2115 = vadd.f32 %v2113, %v2114
    %v2116 = vmul.f32 %v2106, %v578
    %v2117 = vmul.f32 %v2115, %v578
    %v2119 = vsel %vm515, %v2116, 0
    %2121 = vmatprep.subr.mxu0 0.0
    %2122 = vmatpush1.msra.mxu0 %v1858
    %2123 = vmatprep.subr.mxu0 0.0
    %2124 = vmatpush1.msra.mxu0 %v1863
    %2125 = vmatprep.subr.mxu0 0.0
    %2126 = vmatpush1.msra.mxu0 0.0
    %2127 = vmatprep.subr.mxu0 0.0
    %2128 = vmatpush1.msra.mxu0 0.0
    %2129 = vmatprep.subr.mxu0 0.0
    %2130 = vmatpush1.msra.mxu0 0.0
    %2131 = vmatprep.subr.mxu0 0.0
    %2132 = vmatpush1.msra.mxu0 0.0
    %2133 = vmatprep.subr.mxu0 0.0
    %2134 = vmatpush1.msra.mxu0 0.0
    %2135 = vmatprep.subr.mxu0 0.0
    %2136 = vmatpush1.msra.mxu0 0.0
    %2137 = vmatprep.subr.mxu0 0.0
    %2138 = vmatpush1.msra.mxu0 0.0
    %2139 = vmatprep.subr.mxu0 0.0
    %2140 = vmatpush1.msra.mxu0 0.0
    %2141 = vmatprep.subr.mxu0 0.0
    %2142 = vmatpush1.msra.mxu0 0.0
    %2143 = vmatprep.subr.mxu0 0.0
    %2144 = vmatpush1.msra.mxu0 0.0
    %2145 = vmatprep.subr.mxu0 0.0
    %2146 = vmatpush1.msra.mxu0 0.0
    %2147 = vmatprep.subr.mxu0 0.0
    %2148 = vmatpush1.msra.mxu0 0.0
    %2149 = vmatprep.subr.mxu0 0.0
    %2150 = vmatpush1.msra.mxu0 0.0
    %2151 = vmatprep.subr.mxu0 0.0
    %2152 = vmatpush1.msra.mxu0 0.0
    %2153 = vmatprep.subr.mxu0 0.0
    %2154 = vmatpush1.msra.mxu0 0.0
    %2155 = vmatprep.subr.mxu0 0.0
    %2156 = vmatpush1.msra.mxu0 0.0
    %2157 = vmatprep.subr.mxu0 0.0
    %2158 = vmatpush1.msra.mxu0 0.0
    %2159 = vmatprep.subr.mxu0 0.0
    %2160 = vmatpush1.msra.mxu0 0.0
    %2161 = vmatprep.subr.mxu0 0.0
    %2162 = vmatpush1.msra.mxu0 0.0
    %2163 = vmatprep.subr.mxu0 0.0
    %2164 = vmatpush1.msra.mxu0 0.0
    %2165 = vmatprep.subr.mxu0 0.0
    %2166 = vmatpush1.msra.mxu0 0.0
    %2167 = vmatprep.subr.mxu0 0.0
    %2168 = vmatpush1.msra.mxu0 0.0
    %2169 = vmatprep.subr.mxu0 0.0
    %2170 = vmatpush1.msra.mxu0 0.0
    %2171 = vmatprep.subr.mxu0 0.0
    %2172 = vmatpush1.msra.mxu0 0.0
    %2173 = vmatprep.subr.mxu0 0.0
    %2174 = vmatpush1.msra.mxu0 0.0
    %2175 = vmatprep.subr.mxu0 0.0
    %2176 = vmatpush1.msra.mxu0 0.0
    %2177 = vmatprep.subr.mxu0 0.0
    %2178 = vmatpush1.msra.mxu0 0.0
    %2179 = vmatprep.subr.mxu0 0.0
    %2180 = vmatpush1.msra.mxu0 0.0
    %2181 = vmatprep.subr.mxu0 0.0
    %2182 = vmatpush1.msra.mxu0 0.0
    %2183 = vmatprep.subr.mxu0 0.0
    %2184 = vmatpush1.msra.mxu0 0.0
    %2185 = vmatprep.mubr.f32.mxu0 0.0
    %2186 = vmatmul.mubr.f32.gmra.mrb[0].mxu0 %v2119
    %v2187 = vpop.f32.mrb[0].mxu0
    %v2188 = vadd.f32 0.0, %v2187
    %v2189 = vpop.f32.mrb[0].mxu0
    %2190 = vdwg.mxu0
    %v2192 = vsel %vm515, %v2117, 0
    %2194 = vmatprep.subr.mxu0 0.0
    %2195 = vmatpush1.msra.mxu0 %v1868
    %2196 = vmatprep.subr.mxu0 0.0
    %2197 = vmatpush1.msra.mxu0 %v1873
    %2198 = vmatprep.subr.mxu0 0.0
    %2199 = vmatpush1.msra.mxu0 0.0
    %2200 = vmatprep.subr.mxu0 0.0
    %2201 = vmatpush1.msra.mxu0 0.0
    %2202 = vmatprep.subr.mxu0 0.0
    %2203 = vmatpush1.msra.mxu0 0.0
    %2204 = vmatprep.subr.mxu0 0.0
    %2205 = vmatpush1.msra.mxu0 0.0
    %2206 = vmatprep.subr.mxu0 0.0
    %2207 = vmatpush1.msra.mxu0 0.0
    %2208 = vmatprep.subr.mxu0 0.0
    %2209 = vmatpush1.msra.mxu0 0.0
    %2210 = vmatprep.subr.mxu0 0.0
    %2211 = vmatpush1.msra.mxu0 0.0
    %2212 = vmatprep.subr.mxu0 0.0
    %2213 = vmatpush1.msra.mxu0 0.0
    %2214 = vmatprep.subr.mxu0 0.0
    %2215 = vmatpush1.msra.mxu0 0.0
    %2216 = vmatprep.subr.mxu0 0.0
    %2217 = vmatpush1.msra.mxu0 0.0
    %2218 = vmatprep.subr.mxu0 0.0
    %2219 = vmatpush1.msra.mxu0 0.0
    %2220 = vmatprep.subr.mxu0 0.0
    %2221 = vmatpush1.msra.mxu0 0.0
    %2222 = vmatprep.subr.mxu0 0.0
    %2223 = vmatpush1.msra.mxu0 0.0
    %2224 = vmatprep.subr.mxu0 0.0
    %2225 = vmatpush1.msra.mxu0 0.0
    %2226 = vmatprep.subr.mxu0 0.0
    %2227 = vmatpush1.msra.mxu0 0.0
    %2228 = vmatprep.subr.mxu0 0.0
    %2229 = vmatpush1.msra.mxu0 0.0
    %2230 = vmatprep.subr.mxu0 0.0
    %2231 = vmatpush1.msra.mxu0 0.0
    %2232 = vmatprep.subr.mxu0 0.0
    %2233 = vmatpush1.msra.mxu0 0.0
    %2234 = vmatprep.subr.mxu0 0.0
    %2235 = vmatpush1.msra.mxu0 0.0
    %2236 = vmatprep.subr.mxu0 0.0
    %2237 = vmatpush1.msra.mxu0 0.0
    %2238 = vmatprep.subr.mxu0 0.0
    %2239 = vmatpush1.msra.mxu0 0.0
    %2240 = vmatprep.subr.mxu0 0.0
    %2241 = vmatpush1.msra.mxu0 0.0
    %2242 = vmatprep.subr.mxu0 0.0
    %2243 = vmatpush1.msra.mxu0 0.0
    %2244 = vmatprep.subr.mxu0 0.0
    %2245 = vmatpush1.msra.mxu0 0.0
    %2246 = vmatprep.subr.mxu0 0.0
    %2247 = vmatpush1.msra.mxu0 0.0
    %2248 = vmatprep.subr.mxu0 0.0
    %2249 = vmatpush1.msra.mxu0 0.0
    %2250 = vmatprep.subr.mxu0 0.0
    %2251 = vmatpush1.msra.mxu0 0.0
    %2252 = vmatprep.subr.mxu0 0.0
    %2253 = vmatpush1.msra.mxu0 0.0
    %2254 = vmatprep.subr.mxu0 0.0
    %2255 = vmatpush1.msra.mxu0 0.0
    %2256 = vmatprep.subr.mxu0 0.0
    %2257 = vmatpush1.msra.mxu0 0.0
    %2258 = vmatprep.mubr.f32.mxu0 0.0
    %2259 = vmatmul.mubr.f32.gmra.mrb[0].mxu0 %v2192
    %v2260 = vpop.f32.mrb[0].mxu0
    %v2261 = vadd.f32 0.0, %v2260
    %v2262 = vpop.f32.mrb[0].mxu0
    %2263 = vdwg.mxu0
    %2264 = vrot.lane.b32.xlu0 %v1670, 96
    %v2265 = vpop.permute.xlu0 %2264
    %2266 = vrot.lane.b32.xlu0 %v1675, 96
    %v2267 = vpop.permute.xlu0 %2266
    %2268 = vrot.lane.b32.xlu0 %v1764, 96
    %v2269 = vpop.permute.xlu0 %2268
    %2270 = vrot.lane.b32.xlu0 %v1769, 96
    %v2271 = vpop.permute.xlu0 %2270
    %v2272 = vsel %vm336, %v2265, 0
    %v2274 = vsel %vm336, %v2267, 0
    %v2276 = vsel %vm336, %v2269, 0
    %v2278 = vsel %vm336, %v2271, 0
    %2280 = vmatprep.subr.mxu0 0.0
    %2281 = vmatpush1.xpose.msra.mxu0 %v2276
    %2282 = vmatprep.subr.mxu0 0.0
    %2283 = vmatpush1.xpose.msra.mxu0 %v2278
    %2284 = vmatprep.subr.mxu0 0.0
    %2285 = vmatpush1.xpose.msra.mxu0 0.0
    %2286 = vmatprep.subr.mxu0 0.0
    %2287 = vmatpush1.xpose.msra.mxu0 0.0
    %2288 = vmatprep.subr.mxu0 0.0
    %2289 = vmatpush1.xpose.msra.mxu0 0.0
    %2290 = vmatprep.subr.mxu0 0.0
    %2291 = vmatpush1.xpose.msra.mxu0 0.0
    %2292 = vmatprep.subr.mxu0 0.0
    %2293 = vmatpush1.xpose.msra.mxu0 0.0
    %2294 = vmatprep.subr.mxu0 0.0
    %2295 = vmatpush1.xpose.msra.mxu0 0.0
    %2296 = vmatprep.subr.mxu0 0.0
    %2297 = vmatpush1.xpose.msra.mxu0 0.0
    %2298 = vmatprep.subr.mxu0 0.0
    %2299 = vmatpush1.xpose.msra.mxu0 0.0
    %2300 = vmatprep.subr.mxu0 0.0
    %2301 = vmatpush1.xpose.msra.mxu0 0.0
    %2302 = vmatprep.subr.mxu0 0.0
    %2303 = vmatpush1.xpose.msra.mxu0 0.0
    %2304 = vmatprep.subr.mxu0 0.0
    %2305 = vmatpush1.xpose.msra.mxu0 0.0
    %2306 = vmatprep.subr.mxu0 0.0
    %2307 = vmatpush1.xpose.msra.mxu0 0.0
    %2308 = vmatprep.subr.mxu0 0.0
    %2309 = vmatpush1.xpose.msra.mxu0 0.0
    %2310 = vmatprep.subr.mxu0 0.0
    %2311 = vmatpush1.xpose.msra.mxu0 0.0
    %2312 = vmatprep.subr.mxu0 0.0
    %2313 = vmatpush1.xpose.msra.mxu0 0.0
    %2314 = vmatprep.subr.mxu0 0.0
    %2315 = vmatpush1.xpose.msra.mxu0 0.0
    %2316 = vmatprep.subr.mxu0 0.0
    %2317 = vmatpush1.xpose.msra.mxu0 0.0
    %2318 = vmatprep.subr.mxu0 0.0
    %2319 = vmatpush1.xpose.msra.mxu0 0.0
    %2320 = vmatprep.subr.mxu0 0.0
    %2321 = vmatpush1.xpose.msra.mxu0 0.0
    %2322 = vmatprep.subr.mxu0 0.0
    %2323 = vmatpush1.xpose.msra.mxu0 0.0
    %2324 = vmatprep.subr.mxu0 0.0
    %2325 = vmatpush1.xpose.msra.mxu0 0.0
    %2326 = vmatprep.subr.mxu0 0.0
    %2327 = vmatpush1.xpose.msra.mxu0 0.0
    %2328 = vmatprep.subr.mxu0 0.0
    %2329 = vmatpush1.xpose.msra.mxu0 0.0
    %2330 = vmatprep.subr.mxu0 0.0
    %2331 = vmatpush1.xpose.msra.mxu0 0.0
    %2332 = vmatprep.subr.mxu0 0.0
    %2333 = vmatpush1.xpose.msra.mxu0 0.0
    %2334 = vmatprep.subr.mxu0 0.0
    %2335 = vmatpush1.xpose.msra.mxu0 0.0
    %2336 = vmatprep.subr.mxu0 0.0
    %2337 = vmatpush1.xpose.msra.mxu0 0.0
    %2338 = vmatprep.subr.mxu0 0.0
    %2339 = vmatpush1.xpose.msra.mxu0 0.0
    %2340 = vmatprep.subr.mxu0 0.0
    %2341 = vmatpush1.xpose.msra.mxu0 0.0
    %2342 = vmatprep.subr.mxu0 0.0
    %2343 = vmatpush1.xpose.msra.mxu0 0.0
    %2344 = vmatprep.mubr.f32.mxu0 0.0
    %2345 = vmatmul.mubr.f32.gmra.mrb[0].mxu0 %v2272
    %v2346 = vpop.f32.mrb[0].mxu0
    %v2347 = vadd.f32 0.0, %v2346
    %v2348 = vpop.f32.mrb[0].mxu0
    %2349 = vmatprep.mubr.f32.mxu0 0.0
    %2350 = vmatmul.mubr.f32.gmra.mrb[0].mxu0 %v2274
    %v2351 = vpop.f32.mrb[0].mxu0
    %v2352 = vadd.f32 0.0, %v2351
    %v2353 = vpop.f32.mrb[0].mxu0
    %2354 = vdwg.mxu0
    %2355 = vrot.lane.b32.xlu0 %v1680, 96
    %v2356 = vpop.permute.xlu0 %2355
    %2357 = vrot.lane.b32.xlu0 %v1685, 96
    %v2358 = vpop.permute.xlu0 %2357
    %2359 = vrot.lane.b32.xlu0 %v1774, 96
    %v2360 = vpop.permute.xlu0 %2359
    %2361 = vrot.lane.b32.xlu0 %v1779, 96
    %v2362 = vpop.permute.xlu0 %2361
    %v2363 = vsel %vm336, %v2356, 0
    %v2365 = vsel %vm336, %v2358, 0
    %v2367 = vsel %vm336, %v2360, 0
    %v2369 = vsel %vm336, %v2362, 0
    %2371 = vmatprep.subr.mxu0 0.0
    %2372 = vmatpush1.xpose.msra.mxu0 %v2367
    %2373 = vmatprep.subr.mxu0 0.0
    %2374 = vmatpush1.xpose.msra.mxu0 %v2369
    %2375 = vmatprep.subr.mxu0 0.0
    %2376 = vmatpush1.xpose.msra.mxu0 0.0
    %2377 = vmatprep.subr.mxu0 0.0
    %2378 = vmatpush1.xpose.msra.mxu0 0.0
    %2379 = vmatprep.subr.mxu0 0.0
    %2380 = vmatpush1.xpose.msra.mxu0 0.0
    %2381 = vmatprep.subr.mxu0 0.0
    %2382 = vmatpush1.xpose.msra.mxu0 0.0
    %2383 = vmatprep.subr.mxu0 0.0
    %2384 = vmatpush1.xpose.msra.mxu0 0.0
    %2385 = vmatprep.subr.mxu0 0.0
    %2386 = vmatpush1.xpose.msra.mxu0 0.0
    %2387 = vmatprep.subr.mxu0 0.0
    %2388 = vmatpush1.xpose.msra.mxu0 0.0
    %2389 = vmatprep.subr.mxu0 0.0
    %2390 = vmatpush1.xpose.msra.mxu0 0.0
    %2391 = vmatprep.subr.mxu0 0.0
    %2392 = vmatpush1.xpose.msra.mxu0 0.0
    %2393 = vmatprep.subr.mxu0 0.0
    %2394 = vmatpush1.xpose.msra.mxu0 0.0
    %2395 = vmatprep.subr.mxu0 0.0
    %2396 = vmatpush1.xpose.msra.mxu0 0.0
    %2397 = vmatprep.subr.mxu0 0.0
    %2398 = vmatpush1.xpose.msra.mxu0 0.0
    %2399 = vmatprep.subr.mxu0 0.0
    %2400 = vmatpush1.xpose.msra.mxu0 0.0
    %2401 = vmatprep.subr.mxu0 0.0
    %2402 = vmatpush1.xpose.msra.mxu0 0.0
    %2403 = vmatprep.subr.mxu0 0.0
    %2404 = vmatpush1.xpose.msra.mxu0 0.0
    %2405 = vmatprep.subr.mxu0 0.0
    %2406 = vmatpush1.xpose.msra.mxu0 0.0
    %2407 = vmatprep.subr.mxu0 0.0
    %2408 = vmatpush1.xpose.msra.mxu0 0.0
    %2409 = vmatprep.subr.mxu0 0.0
    %2410 = vmatpush1.xpose.msra.mxu0 0.0
    %2411 = vmatprep.subr.mxu0 0.0
    %2412 = vmatpush1.xpose.msra.mxu0 0.0
    %2413 = vmatprep.subr.mxu0 0.0
    %2414 = vmatpush1.xpose.msra.mxu0 0.0
    %2415 = vmatprep.subr.mxu0 0.0
    %2416 = vmatpush1.xpose.msra.mxu0 0.0
    %2417 = vmatprep.subr.mxu0 0.0
    %2418 = vmatpush1.xpose.msra.mxu0 0.0
    %2419 = vmatprep.subr.mxu0 0.0
    %2420 = vmatpush1.xpose.msra.mxu0 0.0
    %2421 = vmatprep.subr.mxu0 0.0
    %2422 = vmatpush1.xpose.msra.mxu0 0.0
    %2423 = vmatprep.subr.mxu0 0.0
    %2424 = vmatpush1.xpose.msra.mxu0 0.0
    %2425 = vmatprep.subr.mxu0 0.0
    %2426 = vmatpush1.xpose.msra.mxu0 0.0
    %2427 = vmatprep.subr.mxu0 0.0
    %2428 = vmatpush1.xpose.msra.mxu0 0.0
    %2429 = vmatprep.subr.mxu0 0.0
    %2430 = vmatpush1.xpose.msra.mxu0 0.0
    %2431 = vmatprep.subr.mxu0 0.0
    %2432 = vmatpush1.xpose.msra.mxu0 0.0
    %2433 = vmatprep.subr.mxu0 0.0
    %2434 = vmatpush1.xpose.msra.mxu0 0.0
    %2435 = vmatprep.mubr.f32.mxu0 0.0
    %2436 = vmatmul.mubr.f32.gmra.mrb[0].mxu0 %v2363
    %v2437 = vpop.f32.mrb[0].mxu0
    %v2438 = vadd.f32 0.0, %v2437
    %v2439 = vpop.f32.mrb[0].mxu0
    %2440 = vmatprep.mubr.f32.mxu0 0.0
    %2441 = vmatmul.mubr.f32.gmra.mrb[0].mxu0 %v2365
    %v2442 = vpop.f32.mrb[0].mxu0
    %v2443 = vadd.f32 0.0, %v2442
    %v2444 = vpop.f32.mrb[0].mxu0
    %2445 = vdwg.mxu0
    %v2446 = vmul.f32 %v2347, 0.17677669
    %v2447 = vmul.f32 %v2352, 0.17677669
    %v2448 = vmul.f32 %v2438, 0.17677669
    %v2449 = vmul.f32 %v2443, 0.17677669
    %v2450 = vsel %vm515, %v2446, -inf
    %2451 = vmax.xlane.f32.xlu0 %v2450
    %v2452 = vpop.xlane.xlu0 %2451
    %v2453 = vsel %vm515, %v2447, -inf
    %2454 = vmax.xlane.f32.xlu0 %v2453
    %v2455 = vpop.xlane.xlu0 %2454
    %v2456 = vsel %vm515, %v2448, -inf
    %2457 = vmax.xlane.f32.xlu0 %v2456
    %v2458 = vpop.xlane.xlu0 %2457
    %v2459 = vsel %vm515, %v2449, -inf
    %2460 = vmax.xlane.f32.xlu0 %v2459
    %v2461 = vpop.xlane.xlu0 %2460
    %v2462 = vsub.f32 %v2446, %v2452
    %v2463 = vsub.f32 %v2447, %v2455
    %v2464 = vsub.f32 %v2448, %v2458
    %v2465 = vsub.f32 %v2449, %v2461
    %v2466 = vmul.f32 %v2462, 1.442695
    %v2467 = vpow.pop %v2466
    %v2468 = vmul.f32 %v2463, 1.442695
    %v2469 = vpow.pop %v2468
    %v2470 = vmul.f32 %v2464, 1.442695
    %v2471 = vpow.pop %v2470
    %v2472 = vmul.f32 %v2465, 1.442695
    %v2473 = vpow.pop %v2472
    %v2474 = vsel %vm515, %v2467, 0.0
    %2475 = vadd.xlane.f32.xlu0 %v2474
    %v2476 = vpop.xlane.xlu0 %2475
    %v2477 = vsel %vm515, %v2469, 0.0
    %2478 = vadd.xlane.f32.xlu0 %v2477
    %v2479 = vpop.xlane.xlu0 %2478
    %v2480 = vsel %vm515, %v2471, 0.0
    %2481 = vadd.xlane.f32.xlu0 %v2480
    %v2482 = vpop.xlane.xlu0 %2481
    %v2483 = vsel %vm515, %v2473, 0.0
    %2484 = vadd.xlane.f32.xlu0 %v2483
    %v2485 = vpop.xlane.xlu0 %2484
    %v2486 = vrcp.pop %v2476
    %v2487 = vrcp.pop %v2479
    %v2488 = vrcp.pop %v2482
    %v2489 = vrcp.pop %v2485
    %v2490 = vmul.f32 %v2467, %v2486
    %v2491 = vmul.f32 %v2469, %v2487
    %v2492 = vmul.f32 %v2471, %v2488
    %v2493 = vmul.f32 %v2473, %v2489
    %v2494 = vsel %vm515, %v2490, 0.0
    %v2495 = vsel %vm515, %v2491, 0.0
    %v2496 = vadd.f32 %v2494, %v2495
    %v2497 = vrot.slane %v2496, 4
    %v2498 = vadd.f32 %v2496, %v2497
    %v2499 = vrot.slane %v2498, 2
    %v2500 = vadd.f32 %v2498, %v2499
    %v2501 = vrot.slane %v2500, 1
    %v2502 = vadd.f32 %v2500, %v2501
    %v2503 = vsel %vm515, %v2492, 0.0
    %v2504 = vsel %vm515, %v2493, 0.0
    %v2505 = vadd.f32 %v2503, %v2504
    %v2506 = vrot.slane %v2505, 4
    %v2507 = vadd.f32 %v2505, %v2506
    %v2508 = vrot.slane %v2507, 2
    %v2509 = vadd.f32 %v2507, %v2508
    %v2510 = vrot.slane %v2509, 1
    %v2511 = vadd.f32 %v2509, %v2510
    %v2512 = vmul.f32 %v2502, %v578
    %v2513 = vmul.f32 %v2511, %v578
    %2516 = vrot.lane.b32.xlu0 %v1858, 96
    %v2517 = vpop.permute.xlu0 %2516
    %2518 = vrot.lane.b32.xlu0 %v1863, 96
    %v2519 = vpop.permute.xlu0 %2518
    %v2523 = vsel %vm515, %v2512, 0
    %2525 = vmatprep.subr.mxu0 0.0
    %2526 = vmatpush1.msra.mxu0 %v2517
    %2527 = vmatprep.subr.mxu0 0.0
    %2528 = vmatpush1.msra.mxu0 %v2519
    %2529 = vmatprep.subr.mxu0 0.0
    %2530 = vmatpush1.msra.mxu0 0.0
    %2531 = vmatprep.subr.mxu0 0.0
    %2532 = vmatpush1.msra.mxu0 0.0
    %2533 = vmatprep.subr.mxu0 0.0
    %2534 = vmatpush1.msra.mxu0 0.0
    %2535 = vmatprep.subr.mxu0 0.0
    %2536 = vmatpush1.msra.mxu0 0.0
    %2537 = vmatprep.subr.mxu0 0.0
    %2538 = vmatpush1.msra.mxu0 0.0
    %2539 = vmatprep.subr.mxu0 0.0
    %2540 = vmatpush1.msra.mxu0 0.0
    %2541 = vmatprep.subr.mxu0 0.0
    %2542 = vmatpush1.msra.mxu0 0.0
    %2543 = vmatprep.subr.mxu0 0.0
    %2544 = vmatpush1.msra.mxu0 0.0
    %2545 = vmatprep.subr.mxu0 0.0
    %2546 = vmatpush1.msra.mxu0 0.0
    %2547 = vmatprep.subr.mxu0 0.0
    %2548 = vmatpush1.msra.mxu0 0.0
    %2549 = vmatprep.subr.mxu0 0.0
    %2550 = vmatpush1.msra.mxu0 0.0
    %2551 = vmatprep.subr.mxu0 0.0
    %2552 = vmatpush1.msra.mxu0 0.0
    %2553 = vmatprep.subr.mxu0 0.0
    %2554 = vmatpush1.msra.mxu0 0.0
    %2555 = vmatprep.subr.mxu0 0.0
    %2556 = vmatpush1.msra.mxu0 0.0
    %2557 = vmatprep.subr.mxu0 0.0
    %2558 = vmatpush1.msra.mxu0 0.0
    %2559 = vmatprep.subr.mxu0 0.0
    %2560 = vmatpush1.msra.mxu0 0.0
    %2561 = vmatprep.subr.mxu0 0.0
    %2562 = vmatpush1.msra.mxu0 0.0
    %2563 = vmatprep.subr.mxu0 0.0
    %2564 = vmatpush1.msra.mxu0 0.0
    %2565 = vmatprep.subr.mxu0 0.0
    %2566 = vmatpush1.msra.mxu0 0.0
    %2567 = vmatprep.subr.mxu0 0.0
    %2568 = vmatpush1.msra.mxu0 0.0
    %2569 = vmatprep.subr.mxu0 0.0
    %2570 = vmatpush1.msra.mxu0 0.0
    %2571 = vmatprep.subr.mxu0 0.0
    %2572 = vmatpush1.msra.mxu0 0.0
    %2573 = vmatprep.subr.mxu0 0.0
    %2574 = vmatpush1.msra.mxu0 0.0
    %2575 = vmatprep.subr.mxu0 0.0
    %2576 = vmatpush1.msra.mxu0 0.0
    %2577 = vmatprep.subr.mxu0 0.0
    %2578 = vmatpush1.msra.mxu0 0.0
    %2579 = vmatprep.subr.mxu0 0.0
    %2580 = vmatpush1.msra.mxu0 0.0
    %2581 = vmatprep.subr.mxu0 0.0
    %2582 = vmatpush1.msra.mxu0 0.0
    %2583 = vmatprep.subr.mxu0 0.0
    %2584 = vmatpush1.msra.mxu0 0.0
    %2585 = vmatprep.subr.mxu0 0.0
    %2586 = vmatpush1.msra.mxu0 0.0
    %2587 = vmatprep.subr.mxu0 0.0
    %2588 = vmatpush1.msra.mxu0 0.0
    %2589 = vmatprep.mubr.f32.mxu0 0.0
    %2590 = vmatmul.mubr.f32.gmra.mrb[0].mxu0 %v2523
    %v2591 = vpop.f32.mrb[0].mxu0
    %v2592 = vadd.f32 0.0, %v2591
    %v2593 = vpop.f32.mrb[0].mxu0
    %2594 = vdwg.mxu0
    %2597 = vrot.lane.b32.xlu0 %v1868, 96
    %v2598 = vpop.permute.xlu0 %2597
    %2599 = vrot.lane.b32.xlu0 %v1873, 96
    %v2600 = vpop.permute.xlu0 %2599
    %v2604 = vsel %vm515, %v2513, 0
    %2606 = vmatprep.subr.mxu0 0.0
    %2607 = vmatpush1.msra.mxu0 %v2598
    %2608 = vmatprep.subr.mxu0 0.0
    %2609 = vmatpush1.msra.mxu0 %v2600
    %2610 = vmatprep.subr.mxu0 0.0
    %2611 = vmatpush1.msra.mxu0 0.0
    %2612 = vmatprep.subr.mxu0 0.0
    %2613 = vmatpush1.msra.mxu0 0.0
    %2614 = vmatprep.subr.mxu0 0.0
    %2615 = vmatpush1.msra.mxu0 0.0
    %2616 = vmatprep.subr.mxu0 0.0
    %2617 = vmatpush1.msra.mxu0 0.0
    %2618 = vmatprep.subr.mxu0 0.0
    %2619 = vmatpush1.msra.mxu0 0.0
    %2620 = vmatprep.subr.mxu0 0.0
    %2621 = vmatpush1.msra.mxu0 0.0
    %2622 = vmatprep.subr.mxu0 0.0
    %2623 = vmatpush1.msra.mxu0 0.0
    %2624 = vmatprep.subr.mxu0 0.0
    %2625 = vmatpush1.msra.mxu0 0.0
    %2626 = vmatprep.subr.mxu0 0.0
    %2627 = vmatpush1.msra.mxu0 0.0
    %2628 = vmatprep.subr.mxu0 0.0
    %2629 = vmatpush1.msra.mxu0 0.0
    %2630 = vmatprep.subr.mxu0 0.0
    %2631 = vmatpush1.msra.mxu0 0.0
    %2632 = vmatprep.subr.mxu0 0.0
    %2633 = vmatpush1.msra.mxu0 0.0
    %2634 = vmatprep.subr.mxu0 0.0
    %2635 = vmatpush1.msra.mxu0 0.0
    %2636 = vmatprep.subr.mxu0 0.0
    %2637 = vmatpush1.msra.mxu0 0.0
    %2638 = vmatprep.subr.mxu0 0.0
    %2639 = vmatpush1.msra.mxu0 0.0
    %2640 = vmatprep.subr.mxu0 0.0
    %2641 = vmatpush1.msra.mxu0 0.0
    %2642 = vmatprep.subr.mxu0 0.0
    %2643 = vmatpush1.msra.mxu0 0.0
    %2644 = vmatprep.subr.mxu0 0.0
    %2645 = vmatpush1.msra.mxu0 0.0
    %2646 = vmatprep.subr.mxu0 0.0
    %2647 = vmatpush1.msra.mxu0 0.0
    %2648 = vmatprep.subr.mxu0 0.0
    %2649 = vmatpush1.msra.mxu0 0.0
    %2650 = vmatprep.subr.mxu0 0.0
    %2651 = vmatpush1.msra.mxu0 0.0
    %2652 = vmatprep.subr.mxu0 0.0
    %2653 = vmatpush1.msra.mxu0 0.0
    %2654 = vmatprep.subr.mxu0 0.0
    %2655 = vmatpush1.msra.mxu0 0.0
    %2656 = vmatprep.subr.mxu0 0.0
    %2657 = vmatpush1.msra.mxu0 0.0
    %2658 = vmatprep.subr.mxu0 0.0
    %2659 = vmatpush1.msra.mxu0 0.0
    %2660 = vmatprep.subr.mxu0 0.0
    %2661 = vmatpush1.msra.mxu0 0.0
    %2662 = vmatprep.subr.mxu0 0.0
    %2663 = vmatpush1.msra.mxu0 0.0
    %2664 = vmatprep.subr.mxu0 0.0
    %2665 = vmatpush1.msra.mxu0 0.0
    %2666 = vmatprep.subr.mxu0 0.0
    %2667 = vmatpush1.msra.mxu0 0.0
    %2668 = vmatprep.subr.mxu0 0.0
    %2669 = vmatpush1.msra.mxu0 0.0
    %2670 = vmatprep.mubr.f32.mxu0 0.0
    %2671 = vmatmul.mubr.f32.gmra.mrb[0].mxu0 %v2604
    %v2672 = vpop.f32.mrb[0].mxu0
    %v2673 = vadd.f32 0.0, %v2672
    %v2674 = vpop.f32.mrb[0].mxu0
    %2675 = vdwg.mxu0
    %2676 = vrot.lane.b32.xlu0 %v1670, 64
    %v2677 = vpop.permute.xlu0 %2676
    %2678 = vrot.lane.b32.xlu0 %v1675, 64
    %v2679 = vpop.permute.xlu0 %2678
    %2680 = vrot.lane.b32.xlu0 %v1764, 64
    %v2681 = vpop.permute.xlu0 %2680
    %2682 = vrot.lane.b32.xlu0 %v1769, 64
    %v2683 = vpop.permute.xlu0 %2682
    %v2684 = vsel %vm336, %v2677, 0
    %v2686 = vsel %vm336, %v2679, 0
    %v2688 = vsel %vm336, %v2681, 0
    %v2690 = vsel %vm336, %v2683, 0
    %2692 = vmatprep.subr.mxu0 0.0
    %2693 = vmatpush1.xpose.msra.mxu0 %v2688
    %2694 = vmatprep.subr.mxu0 0.0
    %2695 = vmatpush1.xpose.msra.mxu0 %v2690
    %2696 = vmatprep.subr.mxu0 0.0
    %2697 = vmatpush1.xpose.msra.mxu0 0.0
    %2698 = vmatprep.subr.mxu0 0.0
    %2699 = vmatpush1.xpose.msra.mxu0 0.0
    %2700 = vmatprep.subr.mxu0 0.0
    %2701 = vmatpush1.xpose.msra.mxu0 0.0
    %2702 = vmatprep.subr.mxu0 0.0
    %2703 = vmatpush1.xpose.msra.mxu0 0.0
    %2704 = vmatprep.subr.mxu0 0.0
    %2705 = vmatpush1.xpose.msra.mxu0 0.0
    %2706 = vmatprep.subr.mxu0 0.0
    %2707 = vmatpush1.xpose.msra.mxu0 0.0
    %2708 = vmatprep.subr.mxu0 0.0
    %2709 = vmatpush1.xpose.msra.mxu0 0.0
    %2710 = vmatprep.subr.mxu0 0.0
    %2711 = vmatpush1.xpose.msra.mxu0 0.0
    %2712 = vmatprep.subr.mxu0 0.0
    %2713 = vmatpush1.xpose.msra.mxu0 0.0
    %2714 = vmatprep.subr.mxu0 0.0
    %2715 = vmatpush1.xpose.msra.mxu0 0.0
    %2716 = vmatprep.subr.mxu0 0.0
    %2717 = vmatpush1.xpose.msra.mxu0 0.0
    %2718 = vmatprep.subr.mxu0 0.0
    %2719 = vmatpush1.xpose.msra.mxu0 0.0
    %2720 = vmatprep.subr.mxu0 0.0
    %2721 = vmatpush1.xpose.msra.mxu0 0.0
    %2722 = vmatprep.subr.mxu0 0.0
    %2723 = vmatpush1.xpose.msra.mxu0 0.0
    %2724 = vmatprep.subr.mxu0 0.0
    %2725 = vmatpush1.xpose.msra.mxu0 0.0
    %2726 = vmatprep.subr.mxu0 0.0
    %2727 = vmatpush1.xpose.msra.mxu0 0.0
    %2728 = vmatprep.subr.mxu0 0.0
    %2729 = vmatpush1.xpose.msra.mxu0 0.0
    %2730 = vmatprep.subr.mxu0 0.0
    %2731 = vmatpush1.xpose.msra.mxu0 0.0
    %2732 = vmatprep.subr.mxu0 0.0
    %2733 = vmatpush1.xpose.msra.mxu0 0.0
    %2734 = vmatprep.subr.mxu0 0.0
    %2735 = vmatpush1.xpose.msra.mxu0 0.0
    %2736 = vmatprep.subr.mxu0 0.0
    %2737 = vmatpush1.xpose.msra.mxu0 0.0
    %2738 = vmatprep.subr.mxu0 0.0
    %2739 = vmatpush1.xpose.msra.mxu0 0.0
    %2740 = vmatprep.subr.mxu0 0.0
    %2741 = vmatpush1.xpose.msra.mxu0 0.0
    %2742 = vmatprep.subr.mxu0 0.0
    %2743 = vmatpush1.xpose.msra.mxu0 0.0
    %2744 = vmatprep.subr.mxu0 0.0
    %2745 = vmatpush1.xpose.msra.mxu0 0.0
    %2746 = vmatprep.subr.mxu0 0.0
    %2747 = vmatpush1.xpose.msra.mxu0 0.0
    %2748 = vmatprep.subr.mxu0 0.0
    %2749 = vmatpush1.xpose.msra.mxu0 0.0
    %2750 = vmatprep.subr.mxu0 0.0
    %2751 = vmatpush1.xpose.msra.mxu0 0.0
    %2752 = vmatprep.subr.mxu0 0.0
    %2753 = vmatpush1.xpose.msra.mxu0 0.0
    %2754 = vmatprep.subr.mxu0 0.0
    %2755 = vmatpush1.xpose.msra.mxu0 0.0
    %2756 = vmatprep.mubr.f32.mxu0 0.0
    %2757 = vmatmul.mubr.f32.gmra.mrb[0].mxu0 %v2684
    %v2758 = vpop.f32.mrb[0].mxu0
    %v2759 = vadd.f32 0.0, %v2758
    %v2760 = vpop.f32.mrb[0].mxu0
    %2761 = vmatprep.mubr.f32.mxu0 0.0
    %2762 = vmatmul.mubr.f32.gmra.mrb[0].mxu0 %v2686
    %v2763 = vpop.f32.mrb[0].mxu0
    %v2764 = vadd.f32 0.0, %v2763
    %v2765 = vpop.f32.mrb[0].mxu0
    %2766 = vdwg.mxu0
    %2767 = vrot.lane.b32.xlu0 %v1680, 64
    %v2768 = vpop.permute.xlu0 %2767
    %2769 = vrot.lane.b32.xlu0 %v1685, 64
    %v2770 = vpop.permute.xlu0 %2769
    %2771 = vrot.lane.b32.xlu0 %v1774, 64
    %v2772 = vpop.permute.xlu0 %2771
    %2773 = vrot.lane.b32.xlu0 %v1779, 64
    %v2774 = vpop.permute.xlu0 %2773
    %v2775 = vsel %vm336, %v2768, 0
    %v2777 = vsel %vm336, %v2770, 0
    %v2779 = vsel %vm336, %v2772, 0
    %v2781 = vsel %vm336, %v2774, 0
    %2783 = vmatprep.subr.mxu0 0.0
    %2784 = vmatpush1.xpose.msra.mxu0 %v2779
    %2785 = vmatprep.subr.mxu0 0.0
    %2786 = vmatpush1.xpose.msra.mxu0 %v2781
    %2787 = vmatprep.subr.mxu0 0.0
    %2788 = vmatpush1.xpose.msra.mxu0 0.0
    %2789 = vmatprep.subr.mxu0 0.0
    %2790 = vmatpush1.xpose.msra.mxu0 0.0
    %2791 = vmatprep.subr.mxu0 0.0
    %2792 = vmatpush1.xpose.msra.mxu0 0.0
    %2793 = vmatprep.subr.mxu0 0.0
    %2794 = vmatpush1.xpose.msra.mxu0 0.0
    %2795 = vmatprep.subr.mxu0 0.0
    %2796 = vmatpush1.xpose.msra.mxu0 0.0
    %2797 = vmatprep.subr.mxu0 0.0
    %2798 = vmatpush1.xpose.msra.mxu0 0.0
    %2799 = vmatprep.subr.mxu0 0.0
    %2800 = vmatpush1.xpose.msra.mxu0 0.0
    %2801 = vmatprep.subr.mxu0 0.0
    %2802 = vmatpush1.xpose.msra.mxu0 0.0
    %2803 = vmatprep.subr.mxu0 0.0
    %2804 = vmatpush1.xpose.msra.mxu0 0.0
    %2805 = vmatprep.subr.mxu0 0.0
    %2806 = vmatpush1.xpose.msra.mxu0 0.0
    %2807 = vmatprep.subr.mxu0 0.0
    %2808 = vmatpush1.xpose.msra.mxu0 0.0
    %2809 = vmatprep.subr.mxu0 0.0
    %2810 = vmatpush1.xpose.msra.mxu0 0.0
    %2811 = vmatprep.subr.mxu0 0.0
    %2812 = vmatpush1.xpose.msra.mxu0 0.0
    %2813 = vmatprep.subr.mxu0 0.0
    %2814 = vmatpush1.xpose.msra.mxu0 0.0
    %2815 = vmatprep.subr.mxu0 0.0
    %2816 = vmatpush1.xpose.msra.mxu0 0.0
    %2817 = vmatprep.subr.mxu0 0.0
    %2818 = vmatpush1.xpose.msra.mxu0 0.0
    %2819 = vmatprep.subr.mxu0 0.0
    %2820 = vmatpush1.xpose.msra.mxu0 0.0
    %2821 = vmatprep.subr.mxu0 0.0
    %2822 = vmatpush1.xpose.msra.mxu0 0.0
    %2823 = vmatprep.subr.mxu0 0.0
    %2824 = vmatpush1.xpose.msra.mxu0 0.0
    %2825 = vmatprep.subr.mxu0 0.0
    %2826 = vmatpush1.xpose.msra.mxu0 0.0
    %2827 = vmatprep.subr.mxu0 0.0
    %2828 = vmatpush1.xpose.msra.mxu0 0.0
    %2829 = vmatprep.subr.mxu0 0.0
    %2830 = vmatpush1.xpose.msra.mxu0 0.0
    %2831 = vmatprep.subr.mxu0 0.0
    %2832 = vmatpush1.xpose.msra.mxu0 0.0
    %2833 = vmatprep.subr.mxu0 0.0
    %2834 = vmatpush1.xpose.msra.mxu0 0.0
    %2835 = vmatprep.subr.mxu0 0.0
    %2836 = vmatpush1.xpose.msra.mxu0 0.0
    %2837 = vmatprep.subr.mxu0 0.0
    %2838 = vmatpush1.xpose.msra.mxu0 0.0
    %2839 = vmatprep.subr.mxu0 0.0
    %2840 = vmatpush1.xpose.msra.mxu0 0.0
    %2841 = vmatprep.subr.mxu0 0.0
    %2842 = vmatpush1.xpose.msra.mxu0 0.0
    %2843 = vmatprep.subr.mxu0 0.0
    %2844 = vmatpush1.xpose.msra.mxu0 0.0
    %2845 = vmatprep.subr.mxu0 0.0
    %2846 = vmatpush1.xpose.msra.mxu0 0.0
    %2847 = vmatprep.mubr.f32.mxu0 0.0
    %2848 = vmatmul.mubr.f32.gmra.mrb[0].mxu0 %v2775
    %v2849 = vpop.f32.mrb[0].mxu0
    %v2850 = vadd.f32 0.0, %v2849
    %v2851 = vpop.f32.mrb[0].mxu0
    %2852 = vmatprep.mubr.f32.mxu0 0.0
    %2853 = vmatmul.mubr.f32.gmra.mrb[0].mxu0 %v2777
    %v2854 = vpop.f32.mrb[0].mxu0
    %v2855 = vadd.f32 0.0, %v2854
    %v2856 = vpop.f32.mrb[0].mxu0
    %2857 = vdwg.mxu0
    %v2858 = vmul.f32 %v2759, 0.17677669
    %v2859 = vmul.f32 %v2764, 0.17677669
    %v2860 = vmul.f32 %v2850, 0.17677669
    %v2861 = vmul.f32 %v2855, 0.17677669
    %v2862 = vsel %vm515, %v2858, -inf
    %2863 = vmax.xlane.f32.xlu0 %v2862
    %v2864 = vpop.xlane.xlu0 %2863
    %v2865 = vsel %vm515, %v2859, -inf
    %2866 = vmax.xlane.f32.xlu0 %v2865
    %v2867 = vpop.xlane.xlu0 %2866
    %v2868 = vsel %vm515, %v2860, -inf
    %2869 = vmax.xlane.f32.xlu0 %v2868
    %v2870 = vpop.xlane.xlu0 %2869
    %v2871 = vsel %vm515, %v2861, -inf
    %2872 = vmax.xlane.f32.xlu0 %v2871
    %v2873 = vpop.xlane.xlu0 %2872
    %v2874 = vsub.f32 %v2858, %v2864
    %v2875 = vsub.f32 %v2859, %v2867
    %v2876 = vsub.f32 %v2860, %v2870
    %v2877 = vsub.f32 %v2861, %v2873
    %v2878 = vmul.f32 %v2874, 1.442695
    %v2879 = vpow.pop %v2878
    %v2880 = vmul.f32 %v2875, 1.442695
    %v2881 = vpow.pop %v2880
    %v2882 = vmul.f32 %v2876, 1.442695
    %v2883 = vpow.pop %v2882
    %v2884 = vmul.f32 %v2877, 1.442695
    %v2885 = vpow.pop %v2884
    %v2886 = vsel %vm515, %v2879, 0.0
    %2887 = vadd.xlane.f32.xlu0 %v2886
    %v2888 = vpop.xlane.xlu0 %2887
    %v2889 = vsel %vm515, %v2881, 0.0
    %2890 = vadd.xlane.f32.xlu0 %v2889
    %v2891 = vpop.xlane.xlu0 %2890
    %v2892 = vsel %vm515, %v2883, 0.0
    %2893 = vadd.xlane.f32.xlu0 %v2892
    %v2894 = vpop.xlane.xlu0 %2893
    %v2895 = vsel %vm515, %v2885, 0.0
    %2896 = vadd.xlane.f32.xlu0 %v2895
    %v2897 = vpop.xlane.xlu0 %2896
    %v2898 = vrcp.pop %v2888
    %v2899 = vrcp.pop %v2891
    %v2900 = vrcp.pop %v2894
    %v2901 = vrcp.pop %v2897
    %v2902 = vmul.f32 %v2879, %v2898
    %v2903 = vmul.f32 %v2881, %v2899
    %v2904 = vmul.f32 %v2883, %v2900
    %v2905 = vmul.f32 %v2885, %v2901
    %v2906 = vsel %vm515, %v2902, 0.0
    %v2907 = vsel %vm515, %v2903, 0.0
    %v2908 = vadd.f32 %v2906, %v2907
    %v2909 = vrot.slane %v2908, 4
    %v2910 = vadd.f32 %v2908, %v2909
    %v2911 = vrot.slane %v2910, 2
    %v2912 = vadd.f32 %v2910, %v2911
    %v2913 = vrot.slane %v2912, 1
    %v2914 = vadd.f32 %v2912, %v2913
    %v2915 = vsel %vm515, %v2904, 0.0
    %v2916 = vsel %vm515, %v2905, 0.0
    %v2917 = vadd.f32 %v2915, %v2916
    %v2918 = vrot.slane %v2917, 4
    %v2919 = vadd.f32 %v2917, %v2918
    %v2920 = vrot.slane %v2919, 2
    %v2921 = vadd.f32 %v2919, %v2920
    %v2922 = vrot.slane %v2921, 1
    %v2923 = vadd.f32 %v2921, %v2922
    %v2924 = vmul.f32 %v2914, %v578
    %v2925 = vmul.f32 %v2923, %v578
    %2926 = vrot.lane.b32.xlu0 %v1858, 64
    %v2927 = vpop.permute.xlu0 %2926
    %2928 = vrot.lane.b32.xlu0 %v1863, 64
    %v2929 = vpop.permute.xlu0 %2928
    %v2933 = vsel %vm515, %v2924, 0
    %2935 = vmatprep.subr.mxu0 0.0
    %2936 = vmatpush1.msra.mxu0 %v2927
    %2937 = vmatprep.subr.mxu0 0.0
    %2938 = vmatpush1.msra.mxu0 %v2929
    %2939 = vmatprep.subr.mxu0 0.0
    %2940 = vmatpush1.msra.mxu0 0.0
    %2941 = vmatprep.subr.mxu0 0.0
    %2942 = vmatpush1.msra.mxu0 0.0
    %2943 = vmatprep.subr.mxu0 0.0
    %2944 = vmatpush1.msra.mxu0 0.0
    %2945 = vmatprep.subr.mxu0 0.0
    %2946 = vmatpush1.msra.mxu0 0.0
    %2947 = vmatprep.subr.mxu0 0.0
    %2948 = vmatpush1.msra.mxu0 0.0
    %2949 = vmatprep.subr.mxu0 0.0
    %2950 = vmatpush1.msra.mxu0 0.0
    %2951 = vmatprep.subr.mxu0 0.0
    %2952 = vmatpush1.msra.mxu0 0.0
    %2953 = vmatprep.subr.mxu0 0.0
    %2954 = vmatpush1.msra.mxu0 0.0
    %2955 = vmatprep.subr.mxu0 0.0
    %2956 = vmatpush1.msra.mxu0 0.0
    %2957 = vmatprep.subr.mxu0 0.0
    %2958 = vmatpush1.msra.mxu0 0.0
    %2959 = vmatprep.subr.mxu0 0.0
    %2960 = vmatpush1.msra.mxu0 0.0
    %2961 = vmatprep.subr.mxu0 0.0
    %2962 = vmatpush1.msra.mxu0 0.0
    %2963 = vmatprep.subr.mxu0 0.0
    %2964 = vmatpush1.msra.mxu0 0.0
    %2965 = vmatprep.subr.mxu0 0.0
    %2966 = vmatpush1.msra.mxu0 0.0
    %2967 = vmatprep.subr.mxu0 0.0
    %2968 = vmatpush1.msra.mxu0 0.0
    %2969 = vmatprep.subr.mxu0 0.0
    %2970 = vmatpush1.msra.mxu0 0.0
    %2971 = vmatprep.subr.mxu0 0.0
    %2972 = vmatpush1.msra.mxu0 0.0
    %2973 = vmatprep.subr.mxu0 0.0
    %2974 = vmatpush1.msra.mxu0 0.0
    %2975 = vmatprep.subr.mxu0 0.0
    %2976 = vmatpush1.msra.mxu0 0.0
    %2977 = vmatprep.subr.mxu0 0.0
    %2978 = vmatpush1.msra.mxu0 0.0
    %2979 = vmatprep.subr.mxu0 0.0
    %2980 = vmatpush1.msra.mxu0 0.0
    %2981 = vmatprep.subr.mxu0 0.0
    %2982 = vmatpush1.msra.mxu0 0.0
    %2983 = vmatprep.subr.mxu0 0.0
    %2984 = vmatpush1.msra.mxu0 0.0
    %2985 = vmatprep.subr.mxu0 0.0
    %2986 = vmatpush1.msra.mxu0 0.0
    %2987 = vmatprep.subr.mxu0 0.0
    %2988 = vmatpush1.msra.mxu0 0.0
    %2989 = vmatprep.subr.mxu0 0.0
    %2990 = vmatpush1.msra.mxu0 0.0
    %2991 = vmatprep.subr.mxu0 0.0
    %2992 = vmatpush1.msra.mxu0 0.0
    %2993 = vmatprep.subr.mxu0 0.0
    %2994 = vmatpush1.msra.mxu0 0.0
    %2995 = vmatprep.subr.mxu0 0.0
    %2996 = vmatpush1.msra.mxu0 0.0
    %2997 = vmatprep.subr.mxu0 0.0
    %2998 = vmatpush1.msra.mxu0 0.0
    %2999 = vmatprep.mubr.f32.mxu0 0.0
    %3000 = vmatmul.mubr.f32.gmra.mrb[0].mxu0 %v2933
    %v3001 = vpop.f32.mrb[0].mxu0
    %v3002 = vadd.f32 0.0, %v3001
    %v3003 = vpop.f32.mrb[0].mxu0
    %3004 = vdwg.mxu0
    %3005 = vrot.lane.b32.xlu0 %v1868, 64
    %v3006 = vpop.permute.xlu0 %3005
    %3007 = vrot.lane.b32.xlu0 %v1873, 64
    %v3008 = vpop.permute.xlu0 %3007
    %v3012 = vsel %vm515, %v2925, 0
    %3014 = vmatprep.subr.mxu0 0.0
    %3015 = vmatpush1.msra.mxu0 %v3006
    %3016 = vmatprep.subr.mxu0 0.0
    %3017 = vmatpush1.msra.mxu0 %v3008
    %3018 = vmatprep.subr.mxu0 0.0
    %3019 = vmatpush1.msra.mxu0 0.0
    %3020 = vmatprep.subr.mxu0 0.0
    %3021 = vmatpush1.msra.mxu0 0.0
    %3022 = vmatprep.subr.mxu0 0.0
    %3023 = vmatpush1.msra.mxu0 0.0
    %3024 = vmatprep.subr.mxu0 0.0
    %3025 = vmatpush1.msra.mxu0 0.0
    %3026 = vmatprep.subr.mxu0 0.0
    %3027 = vmatpush1.msra.mxu0 0.0
    %3028 = vmatprep.subr.mxu0 0.0
    %3029 = vmatpush1.msra.mxu0 0.0
    %3030 = vmatprep.subr.mxu0 0.0
    %3031 = vmatpush1.msra.mxu0 0.0
    %3032 = vmatprep.subr.mxu0 0.0
    %3033 = vmatpush1.msra.mxu0 0.0
    %3034 = vmatprep.subr.mxu0 0.0
    %3035 = vmatpush1.msra.mxu0 0.0
    %3036 = vmatprep.subr.mxu0 0.0
    %3037 = vmatpush1.msra.mxu0 0.0
    %3038 = vmatprep.subr.mxu0 0.0
    %3039 = vmatpush1.msra.mxu0 0.0
    %3040 = vmatprep.subr.mxu0 0.0
    %3041 = vmatpush1.msra.mxu0 0.0
    %3042 = vmatprep.subr.mxu0 0.0
    %3043 = vmatpush1.msra.mxu0 0.0
    %3044 = vmatprep.subr.mxu0 0.0
    %3045 = vmatpush1.msra.mxu0 0.0
    %3046 = vmatprep.subr.mxu0 0.0
    %3047 = vmatpush1.msra.mxu0 0.0
    %3048 = vmatprep.subr.mxu0 0.0
    %3049 = vmatpush1.msra.mxu0 0.0
    %3050 = vmatprep.subr.mxu0 0.0
    %3051 = vmatpush1.msra.mxu0 0.0
    %3052 = vmatprep.subr.mxu0 0.0
    %3053 = vmatpush1.msra.mxu0 0.0
    %3054 = vmatprep.subr.mxu0 0.0
    %3055 = vmatpush1.msra.mxu0 0.0
    %3056 = vmatprep.subr.mxu0 0.0
    %3057 = vmatpush1.msra.mxu0 0.0
    %3058 = vmatprep.subr.mxu0 0.0
    %3059 = vmatpush1.msra.mxu0 0.0
    %3060 = vmatprep.subr.mxu0 0.0
    %3061 = vmatpush1.msra.mxu0 0.0
    %3062 = vmatprep.subr.mxu0 0.0
    %3063 = vmatpush1.msra.mxu0 0.0
    %3064 = vmatprep.subr.mxu0 0.0
    %3065 = vmatpush1.msra.mxu0 0.0
    %3066 = vmatprep.subr.mxu0 0.0
    %3067 = vmatpush1.msra.mxu0 0.0
    %3068 = vmatprep.subr.mxu0 0.0
    %3069 = vmatpush1.msra.mxu0 0.0
    %3070 = vmatprep.subr.mxu0 0.0
    %3071 = vmatpush1.msra.mxu0 0.0
    %3072 = vmatprep.subr.mxu0 0.0
    %3073 = vmatpush1.msra.mxu0 0.0
    %3074 = vmatprep.subr.mxu0 0.0
    %3075 = vmatpush1.msra.mxu0 0.0
    %3076 = vmatprep.subr.mxu0 0.0
    %3077 = vmatpush1.msra.mxu0 0.0
    %3078 = vmatprep.mubr.f32.mxu0 0.0
    %3079 = vmatmul.mubr.f32.gmra.mrb[0].mxu0 %v3012
    %v3080 = vpop.f32.mrb[0].mxu0
    %v3081 = vadd.f32 0.0, %v3080
    %v3082 = vpop.f32.mrb[0].mxu0
    %3083 = vdwg.mxu0
    %v3086 = vrot.slane %v2261, 7
    %v3087 = vsel %vm1550, %v3086, %v2188
    %v3091 = vrot.slane %v2673, 7
    %v3092 = vsel %vm1550, %v3091, %v2592
    %3093 = vrot.lane.b32.xlu0 %v3092, 32
    %v3094 = vpop.permute.xlu0 %3093
    %v3098 = vrot.slane %v3081, 7
    %v3099 = vsel %vm1550, %v3098, %v3002
    %3100 = vrot.lane.b32.xlu0 %v3099, 64
    %v3101 = vpop.permute.xlu0 %3100
    %v3103 = vsel %vm336, %v3087, %v3094
    %v3104 = vsel %vm1568, %v3103, %v3101
    %3106 = vrot.lane.b32.xlu0 %v3104, 96
    %v3107 = vpop.permute.xlu0 %3106
    %vm3109 = vcmask 785408
    %v3110 = vsel %vm3109, %v1569, %v3107
    %v3111 = vld [vmem:[%s6] sm:$0xff]
    %v3112 = vld [vmem:[%s6 + $0x8] sm:$0xff]
    %v3113 = vld [vmem:[%s6 + $0x10] sm:$0xff]
    %v3114 = vld [vmem:[%s6 + $0x18] sm:$0xff]
    %v3115 = vld [vmem:[%s6 + $0x20] sm:$0xff]
    %v3116 = vld [vmem:[%s6 + $0x28] sm:$0xff]
    %v3117 = vld [vmem:[%s6 + $0x30] sm:$0xff]
    %v3118 = vld [vmem:[%s6 + $0x38] sm:$0xff]
    %v3119 = vld [vmem:[%s6 + $0x40] sm:$0xff]
    %v3120 = vld [vmem:[%s6 + $0x48] sm:$0xff]
    %v3121 = vld [vmem:[%s6 + $0x50] sm:$0xff]
    %v3122 = vld [vmem:[%s6 + $0x58] sm:$0xff]
    %v3123 = vld [vmem:[%s6 + $0x60] sm:$0xff]
    %v3124 = vld [vmem:[%s6 + $0x68] sm:$0xff]
    %v3125 = vld [vmem:[%s6 + $0x70] sm:$0xff]
    %v3126 = vld [vmem:[%s6 + $0x78] sm:$0xff]
    %v3127 = vld [vmem:[%s6 + $0x80] sm:$0xff]
    %v3128 = vld [vmem:[%s6 + $0x88] sm:$0xff]
    %v3129 = vld [vmem:[%s6 + $0x90] sm:$0xff]
    %v3130 = vld [vmem:[%s6 + $0x98] sm:$0xff]
    %v3131 = vld [vmem:[%s6 + $0xa0] sm:$0xff]
    %v3132 = vld [vmem:[%s6 + $0xa8] sm:$0xff]
    %v3133 = vld [vmem:[%s6 + $0xb0] sm:$0xff]
    %v3134 = vld [vmem:[%s6 + $0xb8] sm:$0xff]
    %v3135 = vld [vmem:[%s7] sm:$0x1]
    %v3137 = vlaneseq
    %v3138 = vshrl.u32 %v3137, 7
    %v3139 = vsub.s32 0, %v3138
    %v3140 = vrot.slane %v3135, %v3139
    %v3142 = vsel %vm1568, %v3107, 0
    %3144 = vmatprep.subr.mxu0 0.0
    %3145 = vmatpush1.msra.mxu0 %v3111
    %3146 = vmatprep.subr.mxu0 0.0
    %3147 = vmatpush1.msra.mxu0 %v3112
    %3148 = vmatprep.subr.mxu0 0.0
    %3149 = vmatpush1.msra.mxu0 %v3113
    %3150 = vmatprep.subr.mxu0 0.0
    %3151 = vmatpush1.msra.mxu0 %v3114
    %3152 = vmatprep.subr.mxu0 0.0
    %3153 = vmatpush1.msra.mxu0 %v3115
    %3154 = vmatprep.subr.mxu0 0.0
    %3155 = vmatpush1.msra.mxu0 %v3116
    %3156 = vmatprep.subr.mxu0 0.0
    %3157 = vmatpush1.msra.mxu0 %v3117
    %3158 = vmatprep.subr.mxu0 0.0
    %3159 = vmatpush1.msra.mxu0 %v3118
    %3160 = vmatprep.subr.mxu0 0.0
    %3161 = vmatpush1.msra.mxu0 %v3119
    %3162 = vmatprep.subr.mxu0 0.0
    %3163 = vmatpush1.msra.mxu0 %v3120
    %3164 = vmatprep.subr.mxu0 0.0
    %3165 = vmatpush1.msra.mxu0 %v3121
    %3166 = vmatprep.subr.mxu0 0.0
    %3167 = vmatpush1.msra.mxu0 %v3122
    %3168 = vmatprep.subr.mxu0 0.0
    %3169 = vmatpush1.msra.mxu0 %v3123
    %3170 = vmatprep.subr.mxu0 0.0
    %3171 = vmatpush1.msra.mxu0 %v3124
    %3172 = vmatprep.subr.mxu0 0.0
    %3173 = vmatpush1.msra.mxu0 %v3125
    %3174 = vmatprep.subr.mxu0 0.0
    %3175 = vmatpush1.msra.mxu0 %v3126
    %3176 = vmatprep.subr.mxu0 0.0
    %3177 = vmatpush1.msra.mxu0 %v3127
    %3178 = vmatprep.subr.mxu0 0.0
    %3179 = vmatpush1.msra.mxu0 %v3128
    %3180 = vmatprep.subr.mxu0 0.0
    %3181 = vmatpush1.msra.mxu0 %v3129
    %3182 = vmatprep.subr.mxu0 0.0
    %3183 = vmatpush1.msra.mxu0 %v3130
    %3184 = vmatprep.subr.mxu0 0.0
    %3185 = vmatpush1.msra.mxu0 %v3131
    %3186 = vmatprep.subr.mxu0 0.0
    %3187 = vmatpush1.msra.mxu0 %v3132
    %3188 = vmatprep.subr.mxu0 0.0
    %3189 = vmatpush1.msra.mxu0 %v3133
    %3190 = vmatprep.subr.mxu0 0.0
    %3191 = vmatpush1.msra.mxu0 %v3134
    %3192 = vmatprep.subr.mxu0 0.0
    %3193 = vmatpush1.msra.mxu0 0.0
    %3194 = vmatprep.subr.mxu0 0.0
    %3195 = vmatpush1.msra.mxu0 0.0
    %3196 = vmatprep.subr.mxu0 0.0
    %3197 = vmatpush1.msra.mxu0 0.0
    %3198 = vmatprep.subr.mxu0 0.0
    %3199 = vmatpush1.msra.mxu0 0.0
    %3200 = vmatprep.subr.mxu0 0.0
    %3201 = vmatpush1.msra.mxu0 0.0
    %3202 = vmatprep.subr.mxu0 0.0
    %3203 = vmatpush1.msra.mxu0 0.0
    %3204 = vmatprep.subr.mxu0 0.0
    %3205 = vmatpush1.msra.mxu0 0.0
    %3206 = vmatprep.subr.mxu0 0.0
    %3207 = vmatpush1.msra.mxu0 0.0
    %3208 = vmatprep.mubr.f32.mxu0 %v3142
    %3209 = vmatmul.mubr.f32.gmra.mrb[0].mxu0 %v3110
    %v3210 = vpop.f32.mrb[0].mxu0
    %v3211 = vadd.f32 %v3140, %v3210
    %v3212 = vpop.f32.mrb[0].mxu0
    %3213 = vdwg.mxu0
    %v3214 = vxor.u32 %v3211, 2147483648
    %v3215 = vmul.f32 %v3214, 1.442695
    %v3216 = vpow.pop %v3215
    %v3217 = vadd.f32 %v3216, 1.0
    %v3218 = vrcp.pop %v3217
    %v3219 = vmul.f32 1.0, %v3218
    %vm3220 = vcmask 123904
    %3221 = vst.msk [vmem:[#allocation2] sm:$0x3] %vm3220, %v3219
    // Predicated region
    $region34: #{tpu_custom_call.1} parent=1 // pred_check
      _
    $region35: #{tpu_custom_call.1} parent=1 // pred_check_branch
      %3223 = sbr.rel (0) target = $region37
    $region36: #{tpu_custom_call.1} parent=1 // pred_region
      %s3225 = ssub.s32 32, 32
      %3226 = vsyncadd [#allocation3], %s3225
      %s3228 = sshll.u32 [#allocation2], 4
      %s3229 = int_to_ptr.vmem [resolvable:$true] %s3228
      %3231 = dma.vmem_to_hbm [thread:$0]  %s3229, 32, %s8, [#allocation3]
    $region37: #{tpu_custom_call.1} parent=1 // pred_fallthru
      _
    // Predicated region
    $region38: #{tpu_custom_call.1} parent=1 // pred_check
      _
    $region39: #{tpu_custom_call.1} parent=1 // pred_check_branch
      %3233 = sbr.rel (0) target = $region41
    $region40: #{tpu_custom_call.1} parent=1 // pred_region
      %3234 = dma.done [#allocation3], 32
    $region41: #{tpu_custom_call.1} parent=1 // pred_fallthru
      _
    %3235 = vsyncpa [#allocation3], 1

</llo_original>
